<compile_context>
chip_gen: v7x
topology: tpu7x:2x2x1
jax: 0.10.0
libtpu: 0.0.40
codegen_flags: <defaults>
</compile_context>

<pallas_src>
import functools

import jax
import jax.numpy as jnp
import numpy as np
from jax.experimental import pallas as pl
from jax.experimental.pallas import tpu as pltpu

# -------- synthetic config (stands in for cfg.*) --------
DIM_IN = 4                # input channels of ROI-pooled features
CONV_HEAD_DIM = 32        # cfg.FAST_RCNN.CONV_HEAD_DIM
NUM_STACKED_CONVS = 2     # cfg.FAST_RCNN.NUM_STACKED_CONVS
MLP_HEAD_DIM = 32         # cfg.FAST_RCNN.MLP_HEAD_DIM
ROI_RES = 8               # cfg.FAST_RCNN.ROI_XFORM_RESOLUTION
NUM_ROIS = 2              # ROIs in the demo batch

_VMEM_LIMIT = 32 * 1024 * 1024  # explicit scoped-VMEM budget (safe on v5e..v7x)


# ---------------- kernels ----------------
def conv_stack_kernel(*args, n_tile, r, chans):
    """Fused conv stack over one ROI tile.

    For each layer l: 9 accumulating MXU matmuls (one per 3x3 tap, K=Cin) on
    shifted slices of a zero-padded bf16 VMEM buffer, f32 accumulation,
    bias+ReLU in f32, then the activation is written once (bf16) into the next
    layer's pad buffer interior.  Intermediates never leave VMEM.

    args = (x_ref, w_0, b_0, ..., w_{L-1}, b_{L-1}, out_ref, pad_0, ..., pad_{L-1})
      x_ref : [n_tile, R, R, chans[0]]     bf16 NHWC ROI block
      w_l   : [9*chans[l], chans[l+1]]     bf16 im2col-ordered conv weights
      b_l   : [1, chans[l+1]]              f32 conv bias
      out   : [n_tile, R*R, chans[-1]]     bf16, rows ordered (y, x)
      pad_l : [n_tile, R+2, R+2, chans[l]] bf16 VMEM scratch (zero-padded act.)
    """
    L = len(chans) - 1
    rows = n_tile * r * r
    x_ref = args[0]
    wb = args[1:1 + 2 * L]
    out_ref = args[1 + 2 * L]
    pads = args[2 + 2 * L:]

    # ---- zero only the 1-px borders, every grid step.
    # (Per-step rather than pl.when(program_id==0): with a "parallel" ROI axis
    #  the grid may be sharded across TensorCores, each with its own scratch,
    #  so a step-0-only init is not safe.  Interiors are fully overwritten
    #  below before being read, so borders are all that needs zeroing.)
    for l in range(L):
        p = pads[l]
        c = chans[l]
        zrow = jnp.zeros((n_tile, 1, r + 2, c), jnp.bfloat16)
        zcol = jnp.zeros((n_tile, r, 1, c), jnp.bfloat16)
        p[:, 0:1, :, :] = zrow
        p[:, r + 1:r + 2, :, :] = zrow
        p[:, 1:r + 1, 0:1, :] = zcol
        p[:, 1:r + 1, r + 1:r + 2, :] = zcol

    # ---- layer-0 input (already bf16) into pad_0 interior
    pads[0][:, 1:r + 1, 1:r + 1, :] = x_ref[...]

    for l in range(L):
        cin, cout = chans[l], chans[l + 1]
        w_ref, b_ref = wb[2 * l], wb[2 * l + 1]
        src = pads[l]

        # 9 accumulating matmuls, one per tap; f32 accumulator.
        acc = None
        for t in range(9):
            dy, dx = divmod(t, 3)
            tap = src[:, dy:dy + r, dx:dx + r, :].reshape(rows, cin)
            part = jnp.dot(tap, w_ref[t * cin:(t + 1) * cin, :],
                           preferred_element_type=jnp.float32)
            acc = part if acc is None else acc + part

        acc = jnp.maximum(acc + b_ref[...], 0.0)          # [rows, cout] f32

        if l + 1 < L:
            # single bf16 cast + single store straight into next pad interior
            pads[l + 1][:, 1:r + 1, 1:r + 1, :] = (
                acc.reshape(n_tile, r, r, cout).astype(jnp.bfloat16))
        else:
            out_ref[...] = acc.reshape(n_tile, r * r, cout).astype(out_ref.dtype)


def fc_relu_kernel(x_ref, w_ref, b_ref, out_ref, acc_ref):
    """K-tiled out = relu(x @ w + b).  Grid axis = K blocks ("arbitrary")."""
    k = pl.program_id(0)

    @pl.when(k == 0)
    def _():
        acc_ref[...] = jnp.zeros_like(acc_ref)

    acc_ref[...] += jnp.dot(x_ref[...], w_ref[...],
                            preferred_element_type=jnp.float32)

    @pl.when(k == pl.num_programs(0) - 1)
    def _():
        out_ref[...] = jnp.maximum(acc_ref[...] + b_ref[...], 0.0)


# ---------------- wrappers ----------------
def conv_stack(x_nhwc_bf16, conv_params, *, n_tile=1):
    """x_nhwc_bf16: [N, R, R, Cin] bf16.  conv_params: list of (w_im2col, bias).
    Returns [N, R*R, C_last] bf16; the later reshape to [N, R*R*C] is a free,
    layout-preserving NHWC flatten per ROI."""
    n, r, _, cin0 = x_nhwc_bf16.shape
    chans = (cin0,) + tuple(int(w.shape[-1]) for w, _ in conv_params)
    assert n % n_tile == 0
    n_blocks = n // n_tile

    operands = [x_nhwc_bf16]
    in_specs = [pl.BlockSpec((n_tile, r, r, cin0), lambda b: (b, 0, 0, 0))]
    scratch = []
    for l, (w, b) in enumerate(conv_params):
        b2 = b.reshape(1, -1).astype(jnp.float32)
        operands += [w.astype(jnp.bfloat16), b2]
        # constant block index -> weights/bias stay VMEM-resident over the grid
        in_specs += [pl.BlockSpec(tuple(w.shape), lambda b_: (0, 0)),
                     pl.BlockSpec(tuple(b2.shape), lambda b_: (0, 0))]
        scratch.append(pltpu.VMEM((n_tile, r + 2, r + 2, chans[l]),
                                  jnp.bfloat16))

    kern = functools.partial(conv_stack_kernel, n_tile=n_tile, r=r, chans=chans)
    return pl.pallas_call(
        kern,
        out_shape=jax.ShapeDtypeStruct((n, r * r, chans[-1]), jnp.bfloat16),
        grid=(n_blocks,),
        in_specs=in_specs,
        out_specs=pl.BlockSpec((n_tile, r * r, chans[-1]), lambda b: (b, 0, 0)),
        scratch_shapes=scratch,
        compiler_params=pltpu.CompilerParams(
            dimension_semantics=("parallel",),        # 2x on v7x's 2 TCs
            vmem_limit_bytes=_VMEM_LIMIT),
    )(*operands)


def fc_relu(x_flat_bf16, fc_w, fc_b):
    """relu(x @ w + b) with a K-tiled grid and an f32 VMEM accumulator."""
    n, d = x_flat_bf16.shape
    f = int(fc_w.shape[-1])
    b2 = fc_b.reshape(1, f).astype(jnp.float32)

    # Largest K tile (multiple of 128) dividing D; fall back to whole D.
    tk = d
    for cand in (512, 256, 128):
        if d % cand == 0:
            tk = cand
            break

    return pl.pallas_call(
        fc_relu_kernel,
        out_shape=jax.ShapeDtypeStruct((n, f), jnp.float32),
        grid=(d // tk,),
        in_specs=[pl.BlockSpec((n, tk), lambda k: (0, k)),
                  pl.BlockSpec((tk, f), lambda k: (k, 0)),
                  pl.BlockSpec((1, f), lambda k: (0, 0))],
        out_specs=pl.BlockSpec((n, f), lambda k: (0, 0)),
        scratch_shapes=[pltpu.VMEM((n, f), jnp.float32)],
        compiler_params=pltpu.CompilerParams(
            dimension_semantics=("arbitrary",),       # reduction axis
            vmem_limit_bytes=_VMEM_LIMIT),
    )(x_flat_bf16, fc_w.astype(jnp.bfloat16), b2)


@jax.jit
def roi_xconv1fc_head_forward(x_nchw, conv_params, fc_params):
    """x_nchw: [N, DIM_IN, R, R] ROI-pooled features (post roi_xform)."""
    n, _, r, _ = x_nchw.shape
    x_nhwc = jnp.transpose(x_nchw, (0, 2, 3, 1)).astype(jnp.bfloat16)
    conv_out = conv_stack(x_nhwc, conv_params)            # [N, R*R, C] bf16
    c_last = conv_out.shape[-1]
    # Free, layout-preserving reshape = NHWC flatten per ROI.  The FC weight
    # rows were permuted offline to NHWC order, so no runtime NHWC->NCHW
    # transpose is needed to match PyTorch's x.view(B, -1).
    flat = conv_out.reshape(n, r * r * c_last)
    fc_w, fc_b = fc_params
    return fc_relu(flat, fc_w, fc_b)


# ---------------- offline parameter preparation ----------------
def prepare_params(conv_params_oihw, fc_w_of, fc_b, roi_res):
    """Convert PyTorch-layout params to kernel layout (done once, offline).
       conv weight [Cout, Cin, 3, 3]      -> im2col-ordered [9*Cin, Cout] bf16
       fc weight   [F, C*R*R] (NCHW cols) -> [R*R*C, F] bf16, rows permuted to
                                              NHWC-flatten order."""
    conv_params = []
    for w, b in conv_params_oihw:
        cout, cin = int(w.shape[0]), int(w.shape[1])
        w9 = jnp.transpose(w, (2, 3, 1, 0)).reshape(9 * cin, cout)
        conv_params.append((w9.astype(jnp.bfloat16), b.astype(jnp.float32)))
    f = int(fc_w_of.shape[0])
    c_last = int(conv_params_oihw[-1][0].shape[0])
    w4 = fc_w_of.reshape(f, c_last, roi_res, roi_res)
    fc_w_nhwc = jnp.transpose(w4, (2, 3, 1, 0)).reshape(
        roi_res * roi_res * c_last, f)
    return conv_params, (fc_w_nhwc.astype(jnp.bfloat16),
                         fc_b.astype(jnp.float32))


# ---------------- pure-JAX reference (matches the PyTorch module) -----------
def reference_forward(x_nchw, conv_params_oihw, fc_w_of, fc_b):
    y = x_nchw.astype(jnp.float32)
    for w, b in conv_params_oihw:
        y = jax.lax.conv_general_dilated(
            y, w, window_strides=(1, 1), padding=((1, 1), (1, 1)),
            dimension_numbers=("NCHW", "OIHW", "NCHW"))
        y = jax.nn.relu(y + b.reshape(1, -1, 1, 1))
    flat = y.reshape(y.shape[0], -1)                     # NCHW flatten (x.view)
    return jax.nn.relu(flat @ fc_w_of.T + fc_b)


# ---------------- deterministic demo ----------------
if __name__ == "__main__":
    key = jax.random.PRNGKey(0)
    keys = jax.random.split(key, 2 + NUM_STACKED_CONVS)

    # ROI-pooled input (what roi_xform would produce): [N, C, R, R]
    x = jax.random.normal(keys[0], (NUM_ROIS, DIM_IN, ROI_RES, ROI_RES),
                          jnp.float32)

    # conv stack params in PyTorch layout: MSRAFill weights, zero bias
    conv_params_oihw = []
    cin = DIM_IN
    for i in range(NUM_STACKED_CONVS):
        std = (2.0 / (CONV_HEAD_DIM * 3 * 3)) ** 0.5     # MSRAFill (fan_out)
        w = std * jax.random.normal(keys[1 + i],
                                    (CONV_HEAD_DIM, cin, 3, 3), jnp.float32)
        b = jnp.zeros((CONV_HEAD_DIM,), jnp.float32)
        conv_params_oihw.append((w, b))
        cin = CONV_HEAD_DIM

    # fc params in PyTorch layout: XavierFill weight, zero bias
    fan_in = cin * ROI_RES * ROI_RES
    limit = (3.0 / fan_in) ** 0.5
    fc_w = jax.random.uniform(keys[-1], (MLP_HEAD_DIM, fan_in), jnp.float32,
                              -limit, limit)
    fc_b = jnp.zeros((MLP_HEAD_DIM,), jnp.float32)

    conv_params, fc_params = prepare_params(conv_params_oihw, fc_w, fc_b,
                                            ROI_RES)

    out = roi_xconv1fc_head_forward(x, conv_params, fc_params)
    out = jax.block_until_ready(out)
    assert out.shape == (NUM_ROIS, MLP_HEAD_DIM) and out.dtype == jnp.float32

    ref = jax.block_until_ready(
        reference_forward(x, conv_params_oihw, fc_w, fc_b))
    np.testing.assert_allclose(np.asarray(out), np.asarray(ref),
                               rtol=5e-2, atol=5e-2)

    print("KERNEL_OK")
</pallas_src>

<mosaic_0001>
module attributes {stable_mosaic.version = 11 : i64} {
  func.func @fc_relu_kernel(%arg0: i32, %arg1: memref<2x512xbf16, #tpu.memory_space<vmem>>, %arg2: memref<512x32xbf16, #tpu.memory_space<vmem>>, %arg3: memref<1x32xf32, #tpu.memory_space<vmem>>, %arg4: memref<2x32xf32, #tpu.memory_space<vmem>>, %arg5: memref<2x32xf32, #tpu.memory_space<vmem>>) attributes {dimension_semantics = [#tpu.dimension_semantics<arbitrary>], iteration_bounds = array<i64: 4>, scalar_prefetch = 0 : i64, scratch_operands = 1 : i64, tpu.core_type = #tpu.core_type<tc>, window_params = [{transform_indices = @transform_0, window_bounds = array<i64: 2, 512>}, {transform_indices = @transform_1, window_bounds = array<i64: 512, 32>}, {pipeline_mode = #tpu.pipeline_mode<synchronous>, transform_indices = @transform_2, window_bounds = array<i64: 1, 32>}, {pipeline_mode = #tpu.pipeline_mode<synchronous>, transform_indices = @transform_3, window_bounds = array<i64: 2, 32>}]} {
    %c0_i32 = arith.constant 0 : i32
    %0 = arith.cmpi eq, %arg0, %c0_i32 : i32
    %1 = arith.extui %0 : i1 to i32
    %c0_i32_0 = arith.constant 0 : i32
    %2 = arith.cmpi ne, %1, %c0_i32_0 : i32
    scf.if %2 {
      %cst_9 = arith.constant 0.000000e+00 : f32
      %12 = vector.broadcast %cst_9 : f32 to vector<2x32xf32>
      %c0_10 = arith.constant 0 : index
      %c0_11 = arith.constant 0 : index
      %13 = vector.load %arg5[%c0_10, %c0_11] : memref<2x32xf32, #tpu.memory_space<vmem>>, vector<2x32xf32>
      tpu.vector_store %arg5[%c0_10, %c0_11], %12 {strides = array<i32>} : memref<2x32xf32, #tpu.memory_space<vmem>>, vector<2x32xf32>,
    } else {
    }
    %c0 = arith.constant 0 : index
    %c0_1 = arith.constant 0 : index
    %3 = vector.load %arg5[%c0, %c0_1] : memref<2x32xf32, #tpu.memory_space<vmem>>, vector<2x32xf32>
    %c0_2 = arith.constant 0 : index
    %c0_3 = arith.constant 0 : index
    %4 = vector.load %arg1[%c0_2, %c0_3] : memref<2x512xbf16, #tpu.memory_space<vmem>>, vector<2x512xbf16>
    %c0_4 = arith.constant 0 : index
    %c0_5 = arith.constant 0 : index
    %5 = vector.load %arg2[%c0_4, %c0_5] : memref<512x32xbf16, #tpu.memory_space<vmem>>, vector<512x32xbf16>
    %cst = arith.constant dense<0.000000e+00> : vector<2x32xf32>
    %6 = tpu.matmul %4, %5, %cst {dimension_numbers = #tpu.dot_dimension_numbers<[1], [0], [0], [1], [0, 0, 1, 1], [], []>} : vector<2x512xbf16>, vector<512x32xbf16>, vector<2x32xf32> -> vector<2x32xf32>
    %7 = arith.addf %3, %6 : vector<2x32xf32>
    %c0_6 = arith.constant 0 : index
    %c0_7 = arith.constant 0 : index
    %8 = vector.load %arg5[%c0_6, %c0_7] : memref<2x32xf32, #tpu.memory_space<vmem>>, vector<2x32xf32>
    tpu.vector_store %arg5[%c0_6, %c0_7], %7 {strides = array<i32>} : memref<2x32xf32, #tpu.memory_space<vmem>>, vector<2x32xf32>,
    %c3_i32 = arith.constant 3 : i32
    %9 = arith.cmpi eq, %arg0, %c3_i32 : i32
    %10 = arith.extui %9 : i1 to i32
    %c0_i32_8 = arith.constant 0 : i32
    %11 = arith.cmpi ne, %10, %c0_i32_8 : i32
    scf.if %11 {
      %c0_9 = arith.constant 0 : index
      %c0_10 = arith.constant 0 : index
      %12 = vector.load %arg5[%c0_9, %c0_10] : memref<2x32xf32, #tpu.memory_space<vmem>>, vector<2x32xf32>
      %c0_11 = arith.constant 0 : index
      %c0_12 = arith.constant 0 : index
      %13 = vector.load %arg3[%c0_11, %c0_12] : memref<1x32xf32, #tpu.memory_space<vmem>>, vector<1x32xf32>
      %14 = vector.broadcast %13 : vector<1x32xf32> to vector<2x32xf32>
      %15 = arith.addf %12, %14 : vector<2x32xf32>
      %cst_13 = arith.constant 0.000000e+00 : f32
      %16 = vector.broadcast %cst_13 : f32 to vector<2x32xf32>
      %17 = arith.maximumf %15, %16 : vector<2x32xf32>
      %c0_14 = arith.constant 0 : index
      %c0_15 = arith.constant 0 : index
      %18 = vector.load %arg4[%c0_14, %c0_15] : memref<2x32xf32, #tpu.memory_space<vmem>>, vector<2x32xf32>
      tpu.vector_store %arg4[%c0_14, %c0_15], %17 {strides = array<i32>} : memref<2x32xf32, #tpu.memory_space<vmem>>, vector<2x32xf32>,
    } else {
    }
    return
  }
  func.func @transform_0(%arg0: i32) -> (i32, i32) {
    %c0_i32 = arith.constant 0 : i32
    %c0_i32_0 = arith.constant 0 : i32
    return %c0_i32, %arg0 : i32, i32
  }
  func.func @transform_1(%arg0: i32) -> (i32, i32) {
    %c0_i32 = arith.constant 0 : i32
    %c0_i32_0 = arith.constant 0 : i32
    return %arg0, %c0_i32 : i32, i32
  }
  func.func @transform_2(%arg0: i32) -> (i32, i32) {
    %c0_i32 = arith.constant 0 : i32
    %c0_i32_0 = arith.constant 0 : i32
    %c0_i32_1 = arith.constant 0 : i32
    return %c0_i32, %c0_i32_0 : i32, i32
  }
  func.func @transform_3(%arg0: i32) -> (i32, i32) {
    %c0_i32 = arith.constant 0 : i32
    %c0_i32_0 = arith.constant 0 : i32
    %c0_i32_1 = arith.constant 0 : i32
    return %c0_i32, %c0_i32_0 : i32, i32
  }
}

module attributes {stable_mosaic.version = 11 : i64} {
  func.func @conv_stack_kernel(%arg0: i32, %arg1: memref<1x8x8x4xbf16, #tpu.memory_space<vmem>>, %arg2: memref<36x32xbf16, #tpu.memory_space<vmem>>, %arg3: memref<1x32xf32, #tpu.memory_space<vmem>>, %arg4: memref<288x32xbf16, #tpu.memory_space<vmem>>, %arg5: memref<1x32xf32, #tpu.memory_space<vmem>>, %arg6: memref<1x64x32xbf16, #tpu.memory_space<vmem>>, %arg7: memref<1x10x10x4xbf16, #tpu.memory_space<vmem>>, %arg8: memref<1x10x10x32xbf16, #tpu.memory_space<vmem>>) attributes {dimension_semantics = [#tpu.dimension_semantics<parallel>], iteration_bounds = array<i64: 2>, scalar_prefetch = 0 : i64, scratch_operands = 2 : i64, tpu.core_type = #tpu.core_type<tc>, window_params = [{transform_indices = @transform_0, window_bounds = array<i64: 1, 8, 8, 4>}, {pipeline_mode = #tpu.pipeline_mode<synchronous>, transform_indices = @transform_1, window_bounds = array<i64: 36, 32>}, {pipeline_mode = #tpu.pipeline_mode<synchronous>, transform_indices = @transform_2, window_bounds = array<i64: 1, 32>}, {pipeline_mode = #tpu.pipeline_mode<synchronous>, transform_indices = @transform_3, window_bounds = array<i64: 288, 32>}, {pipeline_mode = #tpu.pipeline_mode<synchronous>, transform_indices = @transform_4, window_bounds = array<i64: 1, 32>}, {transform_indices = @transform_5, window_bounds = array<i64: 1, 64, 32>}]} {
    %cst = arith.constant 0.000000e+00 : bf16
    %0 = vector.broadcast %cst : bf16 to vector<1x1x10x4xbf16>
    %cst_0 = arith.constant 0.000000e+00 : bf16
    %1 = vector.broadcast %cst_0 : bf16 to vector<1x8x1x4xbf16>
    %c0 = arith.constant 0 : index
    %c0_1 = arith.constant 0 : index
    %c0_2 = arith.constant 0 : index
    %c0_3 = arith.constant 0 : index
    %2 = vector.load %arg7[%c0, %c0_1, %c0_2, %c0_3] : memref<1x10x10x4xbf16, #tpu.memory_space<vmem>>, vector<1x1x10x4xbf16>
    tpu.vector_store %arg7[%c0, %c0_1, %c0_2, %c0_3], %0 {strides = array<i32>} : memref<1x10x10x4xbf16, #tpu.memory_space<vmem>>, vector<1x1x10x4xbf16>,
    %c0_4 = arith.constant 0 : index
    %c9 = arith.constant 9 : index
    %c0_5 = arith.constant 0 : index
    %c0_6 = arith.constant 0 : index
    %3 = vector.load %arg7[%c0_4, %c9, %c0_5, %c0_6] : memref<1x10x10x4xbf16, #tpu.memory_space<vmem>>, vector<1x1x10x4xbf16>
    tpu.vector_store %arg7[%c0_4, %c9, %c0_5, %c0_6], %0 {strides = array<i32>} : memref<1x10x10x4xbf16, #tpu.memory_space<vmem>>, vector<1x1x10x4xbf16>,
    %c0_7 = arith.constant 0 : index
    %c1 = arith.constant 1 : index
    %c0_8 = arith.constant 0 : index
    %c0_9 = arith.constant 0 : index
    %4 = vector.load %arg7[%c0_7, %c1, %c0_8, %c0_9] : memref<1x10x10x4xbf16, #tpu.memory_space<vmem>>, vector<1x8x1x4xbf16>
    tpu.vector_store %arg7[%c0_7, %c1, %c0_8, %c0_9], %1 {strides = array<i32>} : memref<1x10x10x4xbf16, #tpu.memory_space<vmem>>, vector<1x8x1x4xbf16>,
    %c0_10 = arith.constant 0 : index
    %c1_11 = arith.constant 1 : index
    %c9_12 = arith.constant 9 : index
    %c0_13 = arith.constant 0 : index
    %5 = vector.load %arg7[%c0_10, %c1_11, %c9_12, %c0_13] : memref<1x10x10x4xbf16, #tpu.memory_space<vmem>>, vector<1x8x1x4xbf16>
    tpu.vector_store %arg7[%c0_10, %c1_11, %c9_12, %c0_13], %1 {strides = array<i32>} : memref<1x10x10x4xbf16, #tpu.memory_space<vmem>>, vector<1x8x1x4xbf16>,
    %cst_14 = arith.constant 0.000000e+00 : bf16
    %6 = vector.broadcast %cst_14 : bf16 to vector<1x1x10x32xbf16>
    %cst_15 = arith.constant 0.000000e+00 : bf16
    %7 = vector.broadcast %cst_15 : bf16 to vector<1x8x1x32xbf16>
    %c0_16 = arith.constant 0 : index
    %c0_17 = arith.constant 0 : index
    %c0_18 = arith.constant 0 : index
    %c0_19 = arith.constant 0 : index
    %8 = vector.load %arg8[%c0_16, %c0_17, %c0_18, %c0_19] : memref<1x10x10x32xbf16, #tpu.memory_space<vmem>>, vector<1x1x10x32xbf16>
    tpu.vector_store %arg8[%c0_16, %c0_17, %c0_18, %c0_19], %6 {strides = array<i32>} : memref<1x10x10x32xbf16, #tpu.memory_space<vmem>>, vector<1x1x10x32xbf16>,
    %c0_20 = arith.constant 0 : index
    %c9_21 = arith.constant 9 : index
    %c0_22 = arith.constant 0 : index
    %c0_23 = arith.constant 0 : index
    %9 = vector.load %arg8[%c0_20, %c9_21, %c0_22, %c0_23] : memref<1x10x10x32xbf16, #tpu.memory_space<vmem>>, vector<1x1x10x32xbf16>
    tpu.vector_store %arg8[%c0_20, %c9_21, %c0_22, %c0_23], %6 {strides = array<i32>} : memref<1x10x10x32xbf16, #tpu.memory_space<vmem>>, vector<1x1x10x32xbf16>,
    %c0_24 = arith.constant 0 : index
    %c1_25 = arith.constant 1 : index
    %c0_26 = arith.constant 0 : index
    %c0_27 = arith.constant 0 : index
    %10 = vector.load %arg8[%c0_24, %c1_25, %c0_26, %c0_27] : memref<1x10x10x32xbf16, #tpu.memory_space<vmem>>, vector<1x8x1x32xbf16>
    tpu.vector_store %arg8[%c0_24, %c1_25, %c0_26, %c0_27], %7 {strides = array<i32>} : memref<1x10x10x32xbf16, #tpu.memory_space<vmem>>, vector<1x8x1x32xbf16>,
    %c0_28 = arith.constant 0 : index
    %c1_29 = arith.constant 1 : index
    %c9_30 = arith.constant 9 : index
    %c0_31 = arith.constant 0 : index
    %11 = vector.load %arg8[%c0_28, %c1_29, %c9_30, %c0_31] : memref<1x10x10x32xbf16, #tpu.memory_space<vmem>>, vector<1x8x1x32xbf16>
    tpu.vector_store %arg8[%c0_28, %c1_29, %c9_30, %c0_31], %7 {strides = array<i32>} : memref<1x10x10x32xbf16, #tpu.memory_space<vmem>>, vector<1x8x1x32xbf16>,
    %c0_32 = arith.constant 0 : index
    %c0_33 = arith.constant 0 : index
    %c0_34 = arith.constant 0 : index
    %c0_35 = arith.constant 0 : index
    %12 = vector.load %arg1[%c0_32, %c0_33, %c0_34, %c0_35] : memref<1x8x8x4xbf16, #tpu.memory_space<vmem>>, vector<1x8x8x4xbf16>
    %c0_36 = arith.constant 0 : index
    %c1_37 = arith.constant 1 : index
    %c1_38 = arith.constant 1 : index
    %c0_39 = arith.constant 0 : index
    %13 = vector.load %arg7[%c0_36, %c1_37, %c1_38, %c0_39] : memref<1x10x10x4xbf16, #tpu.memory_space<vmem>>, vector<1x8x8x4xbf16>
    tpu.vector_store %arg7[%c0_36, %c1_37, %c1_38, %c0_39], %12 {strides = array<i32>} : memref<1x10x10x4xbf16, #tpu.memory_space<vmem>>, vector<1x8x8x4xbf16>,
    %c0_40 = arith.constant 0 : index
    %c0_41 = arith.constant 0 : index
    %c0_42 = arith.constant 0 : index
    %c0_43 = arith.constant 0 : index
    %14 = vector.load %arg7[%c0_40, %c0_41, %c0_42, %c0_43] : memref<1x10x10x4xbf16, #tpu.memory_space<vmem>>, vector<1x8x8x4xbf16>
    %15 = vector.shape_cast %14 : vector<1x8x8x4xbf16> to vector<64x4xbf16>
    %c0_44 = arith.constant 0 : index
    %c0_45 = arith.constant 0 : index
    %16 = vector.load %arg2[%c0_44, %c0_45] : memref<36x32xbf16, #tpu.memory_space<vmem>>, vector<4x32xbf16>
    %cst_46 = arith.constant dense<0.000000e+00> : vector<64x32xf32>
    %17 = tpu.matmul %15, %16, %cst_46 {dimension_numbers = #tpu.dot_dimension_numbers<[1], [0], [0], [1], [0, 0, 1, 1], [], []>} : vector<64x4xbf16>, vector<4x32xbf16>, vector<64x32xf32> -> vector<64x32xf32>
    %c0_47 = arith.constant 0 : index
    %c0_48 = arith.constant 0 : index
    %c1_49 = arith.constant 1 : index
    %c0_50 = arith.constant 0 : index
    %18 = vector.load %arg7[%c0_47, %c0_48, %c1_49, %c0_50] : memref<1x10x10x4xbf16, #tpu.memory_space<vmem>>, vector<1x8x8x4xbf16>
    %19 = vector.shape_cast %18 : vector<1x8x8x4xbf16> to vector<64x4xbf16>
    %c4 = arith.constant 4 : index
    %c0_51 = arith.constant 0 : index
    %20 = vector.load %arg2[%c4, %c0_51] : memref<36x32xbf16, #tpu.memory_space<vmem>>, vector<4x32xbf16>
    %cst_52 = arith.constant dense<0.000000e+00> : vector<64x32xf32>
    %21 = tpu.matmul %19, %20, %cst_52 {dimension_numbers = #tpu.dot_dimension_numbers<[1], [0], [0], [1], [0, 0, 1, 1], [], []>} : vector<64x4xbf16>, vector<4x32xbf16>, vector<64x32xf32> -> vector<64x32xf32>
    %22 = arith.addf %17, %21 : vector<64x32xf32>
    %c0_53 = arith.constant 0 : index
    %c0_54 = arith.constant 0 : index
    %c2 = arith.constant 2 : index
    %c0_55 = arith.constant 0 : index
    %23 = vector.load %arg7[%c0_53, %c0_54, %c2, %c0_55] : memref<1x10x10x4xbf16, #tpu.memory_space<vmem>>, vector<1x8x8x4xbf16>
    %24 = vector.shape_cast %23 : vector<1x8x8x4xbf16> to vector<64x4xbf16>
    %c8 = arith.constant 8 : index
    %c0_56 = arith.constant 0 : index
    %25 = vector.load %arg2[%c8, %c0_56] : memref<36x32xbf16, #tpu.memory_space<vmem>>, vector<4x32xbf16>
    %cst_57 = arith.constant dense<0.000000e+00> : vector<64x32xf32>
    %26 = tpu.matmul %24, %25, %cst_57 {dimension_numbers = #tpu.dot_dimension_numbers<[1], [0], [0], [1], [0, 0, 1, 1], [], []>} : vector<64x4xbf16>, vector<4x32xbf16>, vector<64x32xf32> -> vector<64x32xf32>
    %27 = arith.addf %22, %26 : vector<64x32xf32>
    %c0_58 = arith.constant 0 : index
    %c1_59 = arith.constant 1 : index
    %c0_60 = arith.constant 0 : index
    %c0_61 = arith.constant 0 : index
    %28 = vector.load %arg7[%c0_58, %c1_59, %c0_60, %c0_61] : memref<1x10x10x4xbf16, #tpu.memory_space<vmem>>, vector<1x8x8x4xbf16>
    %29 = vector.shape_cast %28 : vector<1x8x8x4xbf16> to vector<64x4xbf16>
    %c12 = arith.constant 12 : index
    %c0_62 = arith.constant 0 : index
    %30 = vector.load %arg2[%c12, %c0_62] : memref<36x32xbf16, #tpu.memory_space<vmem>>, vector<4x32xbf16>
    %cst_63 = arith.constant dense<0.000000e+00> : vector<64x32xf32>
    %31 = tpu.matmul %29, %30, %cst_63 {dimension_numbers = #tpu.dot_dimension_numbers<[1], [0], [0], [1], [0, 0, 1, 1], [], []>} : vector<64x4xbf16>, vector<4x32xbf16>, vector<64x32xf32> -> vector<64x32xf32>
    %32 = arith.addf %27, %31 : vector<64x32xf32>
    %c0_64 = arith.constant 0 : index
    %c1_65 = arith.constant 1 : index
    %c1_66 = arith.constant 1 : index
    %c0_67 = arith.constant 0 : index
    %33 = vector.load %arg7[%c0_64, %c1_65, %c1_66, %c0_67] : memref<1x10x10x4xbf16, #tpu.memory_space<vmem>>, vector<1x8x8x4xbf16>
    %34 = vector.shape_cast %33 : vector<1x8x8x4xbf16> to vector<64x4xbf16>
    %c16 = arith.constant 16 : index
    %c0_68 = arith.constant 0 : index
    %35 = vector.load %arg2[%c16, %c0_68] : memref<36x32xbf16, #tpu.memory_space<vmem>>, vector<4x32xbf16>
    %cst_69 = arith.constant dense<0.000000e+00> : vector<64x32xf32>
    %36 = tpu.matmul %34, %35, %cst_69 {dimension_numbers = #tpu.dot_dimension_numbers<[1], [0], [0], [1], [0, 0, 1, 1], [], []>} : vector<64x4xbf16>, vector<4x32xbf16>, vector<64x32xf32> -> vector<64x32xf32>
    %37 = arith.addf %32, %36 : vector<64x32xf32>
    %c0_70 = arith.constant 0 : index
    %c1_71 = arith.constant 1 : index
    %c2_72 = arith.constant 2 : index
    %c0_73 = arith.constant 0 : index
    %38 = vector.load %arg7[%c0_70, %c1_71, %c2_72, %c0_73] : memref<1x10x10x4xbf16, #tpu.memory_space<vmem>>, vector<1x8x8x4xbf16>
    %39 = vector.shape_cast %38 : vector<1x8x8x4xbf16> to vector<64x4xbf16>
    %c20 = arith.constant 20 : index
    %c0_74 = arith.constant 0 : index
    %40 = vector.load %arg2[%c20, %c0_74] : memref<36x32xbf16, #tpu.memory_space<vmem>>, vector<4x32xbf16>
    %cst_75 = arith.constant dense<0.000000e+00> : vector<64x32xf32>
    %41 = tpu.matmul %39, %40, %cst_75 {dimension_numbers = #tpu.dot_dimension_numbers<[1], [0], [0], [1], [0, 0, 1, 1], [], []>} : vector<64x4xbf16>, vector<4x32xbf16>, vector<64x32xf32> -> vector<64x32xf32>
    %42 = arith.addf %37, %41 : vector<64x32xf32>
    %c0_76 = arith.constant 0 : index
    %c2_77 = arith.constant 2 : index
    %c0_78 = arith.constant 0 : index
    %c0_79 = arith.constant 0 : index
    %43 = vector.load %arg7[%c0_76, %c2_77, %c0_78, %c0_79] : memref<1x10x10x4xbf16, #tpu.memory_space<vmem>>, vector<1x8x8x4xbf16>
    %44 = vector.shape_cast %43 : vector<1x8x8x4xbf16> to vector<64x4xbf16>
    %c24 = arith.constant 24 : index
    %c0_80 = arith.constant 0 : index
    %45 = vector.load %arg2[%c24, %c0_80] : memref<36x32xbf16, #tpu.memory_space<vmem>>, vector<4x32xbf16>
    %cst_81 = arith.constant dense<0.000000e+00> : vector<64x32xf32>
    %46 = tpu.matmul %44, %45, %cst_81 {dimension_numbers = #tpu.dot_dimension_numbers<[1], [0], [0], [1], [0, 0, 1, 1], [], []>} : vector<64x4xbf16>, vector<4x32xbf16>, vector<64x32xf32> -> vector<64x32xf32>
    %47 = arith.addf %42, %46 : vector<64x32xf32>
    %c0_82 = arith.constant 0 : index
    %c2_83 = arith.constant 2 : index
    %c1_84 = arith.constant 1 : index
    %c0_85 = arith.constant 0 : index
    %48 = vector.load %arg7[%c0_82, %c2_83, %c1_84, %c0_85] : memref<1x10x10x4xbf16, #tpu.memory_space<vmem>>, vector<1x8x8x4xbf16>
    %49 = vector.shape_cast %48 : vector<1x8x8x4xbf16> to vector<64x4xbf16>
    %c28 = arith.constant 28 : index
    %c0_86 = arith.constant 0 : index
    %50 = vector.load %arg2[%c28, %c0_86] : memref<36x32xbf16, #tpu.memory_space<vmem>>, vector<4x32xbf16>
    %cst_87 = arith.constant dense<0.000000e+00> : vector<64x32xf32>
    %51 = tpu.matmul %49, %50, %cst_87 {dimension_numbers = #tpu.dot_dimension_numbers<[1], [0], [0], [1], [0, 0, 1, 1], [], []>} : vector<64x4xbf16>, vector<4x32xbf16>, vector<64x32xf32> -> vector<64x32xf32>
    %52 = arith.addf %47, %51 : vector<64x32xf32>
    %c0_88 = arith.constant 0 : index
    %c2_89 = arith.constant 2 : index
    %c2_90 = arith.constant 2 : index
    %c0_91 = arith.constant 0 : index
    %53 = vector.load %arg7[%c0_88, %c2_89, %c2_90, %c0_91] : memref<1x10x10x4xbf16, #tpu.memory_space<vmem>>, vector<1x8x8x4xbf16>
    %54 = vector.shape_cast %53 : vector<1x8x8x4xbf16> to vector<64x4xbf16>
    %c32 = arith.constant 32 : index
    %c0_92 = arith.constant 0 : index
    %55 = vector.load %arg2[%c32, %c0_92] : memref<36x32xbf16, #tpu.memory_space<vmem>>, vector<4x32xbf16>
    %cst_93 = arith.constant dense<0.000000e+00> : vector<64x32xf32>
    %56 = tpu.matmul %54, %55, %cst_93 {dimension_numbers = #tpu.dot_dimension_numbers<[1], [0], [0], [1], [0, 0, 1, 1], [], []>} : vector<64x4xbf16>, vector<4x32xbf16>, vector<64x32xf32> -> vector<64x32xf32>
    %57 = arith.addf %52, %56 : vector<64x32xf32>
    %c0_94 = arith.constant 0 : index
    %c0_95 = arith.constant 0 : index
    %58 = vector.load %arg3[%c0_94, %c0_95] : memref<1x32xf32, #tpu.memory_space<vmem>>, vector<1x32xf32>
    %59 = vector.broadcast %58 : vector<1x32xf32> to vector<64x32xf32>
    %60 = arith.addf %57, %59 : vector<64x32xf32>
    %cst_96 = arith.constant 0.000000e+00 : f32
    %61 = vector.broadcast %cst_96 : f32 to vector<64x32xf32>
    %62 = arith.maximumf %60, %61 : vector<64x32xf32>
    %63 = vector.shape_cast %62 : vector<64x32xf32> to vector<1x8x8x32xf32>
    %64 = arith.truncf %63 : vector<1x8x8x32xf32> to vector<1x8x8x32xbf16>
    %c0_97 = arith.constant 0 : index
    %c1_98 = arith.constant 1 : index
    %c1_99 = arith.constant 1 : index
    %c0_100 = arith.constant 0 : index
    %65 = vector.load %arg8[%c0_97, %c1_98, %c1_99, %c0_100] : memref<1x10x10x32xbf16, #tpu.memory_space<vmem>>, vector<1x8x8x32xbf16>
    tpu.vector_store %arg8[%c0_97, %c1_98, %c1_99, %c0_100], %64 {strides = array<i32>} : memref<1x10x10x32xbf16, #tpu.memory_space<vmem>>, vector<1x8x8x32xbf16>,
    %c0_101 = arith.constant 0 : index
    %c0_102 = arith.constant 0 : index
    %c0_103 = arith.constant 0 : index
    %c0_104 = arith.constant 0 : index
    %66 = vector.load %arg8[%c0_101, %c0_102, %c0_103, %c0_104] : memref<1x10x10x32xbf16, #tpu.memory_space<vmem>>, vector<1x8x8x32xbf16>
    %67 = vector.shape_cast %66 : vector<1x8x8x32xbf16> to vector<64x32xbf16>
    %c0_105 = arith.constant 0 : index
    %c0_106 = arith.constant 0 : index
    %68 = vector.load %arg4[%c0_105, %c0_106] : memref<288x32xbf16, #tpu.memory_space<vmem>>, vector<32x32xbf16>
    %cst_107 = arith.constant dense<0.000000e+00> : vector<64x32xf32>
    %69 = tpu.matmul %67, %68, %cst_107 {dimension_numbers = #tpu.dot_dimension_numbers<[1], [0], [0], [1], [0, 0, 1, 1], [], []>} : vector<64x32xbf16>, vector<32x32xbf16>, vector<64x32xf32> -> vector<64x32xf32>
    %c0_108 = arith.constant 0 : index
    %c0_109 = arith.constant 0 : index
    %c1_110 = arith.constant 1 : index
    %c0_111 = arith.constant 0 : index
    %70 = vector.load %arg8[%c0_108, %c0_109, %c1_110, %c0_111] : memref<1x10x10x32xbf16, #tpu.memory_space<vmem>>, vector<1x8x8x32xbf16>
    %71 = vector.shape_cast %70 : vector<1x8x8x32xbf16> to vector<64x32xbf16>
    %c32_112 = arith.constant 32 : index
    %c0_113 = arith.constant 0 : index
    %72 = vector.load %arg4[%c32_112, %c0_113] : memref<288x32xbf16, #tpu.memory_space<vmem>>, vector<32x32xbf16>
    %cst_114 = arith.constant dense<0.000000e+00> : vector<64x32xf32>
    %73 = tpu.matmul %71, %72, %cst_114 {dimension_numbers = #tpu.dot_dimension_numbers<[1], [0], [0], [1], [0, 0, 1, 1], [], []>} : vector<64x32xbf16>, vector<32x32xbf16>, vector<64x32xf32> -> vector<64x32xf32>
    %74 = arith.addf %69, %73 : vector<64x32xf32>
    %c0_115 = arith.constant 0 : index
    %c0_116 = arith.constant 0 : index
    %c2_117 = arith.constant 2 : index
    %c0_118 = arith.constant 0 : index
    %75 = vector.load %arg8[%c0_115, %c0_116, %c2_117, %c0_118] : memref<1x10x10x32xbf16, #tpu.memory_space<vmem>>, vector<1x8x8x32xbf16>
    %76 = vector.shape_cast %75 : vector<1x8x8x32xbf16> to vector<64x32xbf16>
    %c64 = arith.constant 64 : index
    %c0_119 = arith.constant 0 : index
    %77 = vector.load %arg4[%c64, %c0_119] : memref<288x32xbf16, #tpu.memory_space<vmem>>, vector<32x32xbf16>
    %cst_120 = arith.constant dense<0.000000e+00> : vector<64x32xf32>
    %78 = tpu.matmul %76, %77, %cst_120 {dimension_numbers = #tpu.dot_dimension_numbers<[1], [0], [0], [1], [0, 0, 1, 1], [], []>} : vector<64x32xbf16>, vector<32x32xbf16>, vector<64x32xf32> -> vector<64x32xf32>
    %79 = arith.addf %74, %78 : vector<64x32xf32>
    %c0_121 = arith.constant 0 : index
    %c1_122 = arith.constant 1 : index
    %c0_123 = arith.constant 0 : index
    %c0_124 = arith.constant 0 : index
    %80 = vector.load %arg8[%c0_121, %c1_122, %c0_123, %c0_124] : memref<1x10x10x32xbf16, #tpu.memory_space<vmem>>, vector<1x8x8x32xbf16>
    %81 = vector.shape_cast %80 : vector<1x8x8x32xbf16> to vector<64x32xbf16>
    %c96 = arith.constant 96 : index
    %c0_125 = arith.constant 0 : index
    %82 = vector.load %arg4[%c96, %c0_125] : memref<288x32xbf16, #tpu.memory_space<vmem>>, vector<32x32xbf16>
    %cst_126 = arith.constant dense<0.000000e+00> : vector<64x32xf32>
    %83 = tpu.matmul %81, %82, %cst_126 {dimension_numbers = #tpu.dot_dimension_numbers<[1], [0], [0], [1], [0, 0, 1, 1], [], []>} : vector<64x32xbf16>, vector<32x32xbf16>, vector<64x32xf32> -> vector<64x32xf32>
    %84 = arith.addf %79, %83 : vector<64x32xf32>
    %c0_127 = arith.constant 0 : index
    %c1_128 = arith.constant 1 : index
    %c1_129 = arith.constant 1 : index
    %c0_130 = arith.constant 0 : index
    %85 = vector.load %arg8[%c0_127, %c1_128, %c1_129, %c0_130] : memref<1x10x10x32xbf16, #tpu.memory_space<vmem>>, vector<1x8x8x32xbf16>
    %86 = vector.shape_cast %85 : vector<1x8x8x32xbf16> to vector<64x32xbf16>
    %c128 = arith.constant 128 : index
    %c0_131 = arith.constant 0 : index
    %87 = vector.load %arg4[%c128, %c0_131] : memref<288x32xbf16, #tpu.memory_space<vmem>>, vector<32x32xbf16>
    %cst_132 = arith.constant dense<0.000000e+00> : vector<64x32xf32>
    %88 = tpu.matmul %86, %87, %cst_132 {dimension_numbers = #tpu.dot_dimension_numbers<[1], [0], [0], [1], [0, 0, 1, 1], [], []>} : vector<64x32xbf16>, vector<32x32xbf16>, vector<64x32xf32> -> vector<64x32xf32>
    %89 = arith.addf %84, %88 : vector<64x32xf32>
    %c0_133 = arith.constant 0 : index
    %c1_134 = arith.constant 1 : index
    %c2_135 = arith.constant 2 : index
    %c0_136 = arith.constant 0 : index
    %90 = vector.load %arg8[%c0_133, %c1_134, %c2_135, %c0_136] : memref<1x10x10x32xbf16, #tpu.memory_space<vmem>>, vector<1x8x8x32xbf16>
    %91 = vector.shape_cast %90 : vector<1x8x8x32xbf16> to vector<64x32xbf16>
    %c160 = arith.constant 160 : index
    %c0_137 = arith.constant 0 : index
    %92 = vector.load %arg4[%c160, %c0_137] : memref<288x32xbf16, #tpu.memory_space<vmem>>, vector<32x32xbf16>
    %cst_138 = arith.constant dense<0.000000e+00> : vector<64x32xf32>
    %93 = tpu.matmul %91, %92, %cst_138 {dimension_numbers = #tpu.dot_dimension_numbers<[1], [0], [0], [1], [0, 0, 1, 1], [], []>} : vector<64x32xbf16>, vector<32x32xbf16>, vector<64x32xf32> -> vector<64x32xf32>
    %94 = arith.addf %89, %93 : vector<64x32xf32>
    %c0_139 = arith.constant 0 : index
    %c2_140 = arith.constant 2 : index
    %c0_141 = arith.constant 0 : index
    %c0_142 = arith.constant 0 : index
    %95 = vector.load %arg8[%c0_139, %c2_140, %c0_141, %c0_142] : memref<1x10x10x32xbf16, #tpu.memory_space<vmem>>, vector<1x8x8x32xbf16>
    %96 = vector.shape_cast %95 : vector<1x8x8x32xbf16> to vector<64x32xbf16>
    %c192 = arith.constant 192 : index
    %c0_143 = arith.constant 0 : index
    %97 = vector.load %arg4[%c192, %c0_143] : memref<288x32xbf16, #tpu.memory_space<vmem>>, vector<32x32xbf16>
    %cst_144 = arith.constant dense<0.000000e+00> : vector<64x32xf32>
    %98 = tpu.matmul %96, %97, %cst_144 {dimension_numbers = #tpu.dot_dimension_numbers<[1], [0], [0], [1], [0, 0, 1, 1], [], []>} : vector<64x32xbf16>, vector<32x32xbf16>, vector<64x32xf32> -> vector<64x32xf32>
    %99 = arith.addf %94, %98 : vector<64x32xf32>
    %c0_145 = arith.constant 0 : index
    %c2_146 = arith.constant 2 : index
    %c1_147 = arith.constant 1 : index
    %c0_148 = arith.constant 0 : index
    %100 = vector.load %arg8[%c0_145, %c2_146, %c1_147, %c0_148] : memref<1x10x10x32xbf16, #tpu.memory_space<vmem>>, vector<1x8x8x32xbf16>
    %101 = vector.shape_cast %100 : vector<1x8x8x32xbf16> to vector<64x32xbf16>
    %c224 = arith.constant 224 : index
    %c0_149 = arith.constant 0 : index
    %102 = vector.load %arg4[%c224, %c0_149] : memref<288x32xbf16, #tpu.memory_space<vmem>>, vector<32x32xbf16>
    %cst_150 = arith.constant dense<0.000000e+00> : vector<64x32xf32>
    %103 = tpu.matmul %101, %102, %cst_150 {dimension_numbers = #tpu.dot_dimension_numbers<[1], [0], [0], [1], [0, 0, 1, 1], [], []>} : vector<64x32xbf16>, vector<32x32xbf16>, vector<64x32xf32> -> vector<64x32xf32>
    %104 = arith.addf %99, %103 : vector<64x32xf32>
    %c0_151 = arith.constant 0 : index
    %c2_152 = arith.constant 2 : index
    %c2_153 = arith.constant 2 : index
    %c0_154 = arith.constant 0 : index
    %105 = vector.load %arg8[%c0_151, %c2_152, %c2_153, %c0_154] : memref<1x10x10x32xbf16, #tpu.memory_space<vmem>>, vector<1x8x8x32xbf16>
    %106 = vector.shape_cast %105 : vector<1x8x8x32xbf16> to vector<64x32xbf16>
    %c256 = arith.constant 256 : index
    %c0_155 = arith.constant 0 : index
    %107 = vector.load %arg4[%c256, %c0_155] : memref<288x32xbf16, #tpu.memory_space<vmem>>, vector<32x32xbf16>
    %cst_156 = arith.constant dense<0.000000e+00> : vector<64x32xf32>
    %108 = tpu.matmul %106, %107, %cst_156 {dimension_numbers = #tpu.dot_dimension_numbers<[1], [0], [0], [1], [0, 0, 1, 1], [], []>} : vector<64x32xbf16>, vector<32x32xbf16>, vector<64x32xf32> -> vector<64x32xf32>
    %109 = arith.addf %104, %108 : vector<64x32xf32>
    %c0_157 = arith.constant 0 : index
    %c0_158 = arith.constant 0 : index
    %110 = vector.load %arg5[%c0_157, %c0_158] : memref<1x32xf32, #tpu.memory_space<vmem>>, vector<1x32xf32>
    %111 = vector.broadcast %110 : vector<1x32xf32> to vector<64x32xf32>
    %112 = arith.addf %109, %111 : vector<64x32xf32>
    %cst_159 = arith.constant 0.000000e+00 : f32
    %113 = vector.broadcast %cst_159 : f32 to vector<64x32xf32>
    %114 = arith.maximumf %112, %113 : vector<64x32xf32>
    %115 = vector.shape_cast %114 : vector<64x32xf32> to vector<1x64x32xf32>
    %116 = arith.truncf %115 : vector<1x64x32xf32> to vector<1x64x32xbf16>
    %c0_160 = arith.constant 0 : index
    %c0_161 = arith.constant 0 : index
    %c0_162 = arith.constant 0 : index
    %117 = vector.load %arg6[%c0_160, %c0_161, %c0_162] : memref<1x64x32xbf16, #tpu.memory_space<vmem>>, vector<1x64x32xbf16>
    tpu.vector_store %arg6[%c0_160, %c0_161, %c0_162], %116 {strides = array<i32>} : memref<1x64x32xbf16, #tpu.memory_space<vmem>>, vector<1x64x32xbf16>,
    return
  }
  func.func @transform_0(%arg0: i32) -> (i32, i32, i32, i32) {
    %c0_i32 = arith.constant 0 : i32
    %c0_i32_0 = arith.constant 0 : i32
    %c0_i32_1 = arith.constant 0 : i32
    %c0_i32_2 = arith.constant 0 : i32
    return %arg0, %c0_i32, %c0_i32_0, %c0_i32_1 : i32, i32, i32, i32
  }
  func.func @transform_1(%arg0: i32) -> (i32, i32) {
    %c0_i32 = arith.constant 0 : i32
    %c0_i32_0 = arith.constant 0 : i32
    %c0_i32_1 = arith.constant 0 : i32
    return %c0_i32, %c0_i32_0 : i32, i32
  }
  func.func @transform_2(%arg0: i32) -> (i32, i32) {
    %c0_i32 = arith.constant 0 : i32
    %c0_i32_0 = arith.constant 0 : i32
    %c0_i32_1 = arith.constant 0 : i32
    return %c0_i32, %c0_i32_0 : i32, i32
  }
  func.func @transform_3(%arg0: i32) -> (i32, i32) {
    %c0_i32 = arith.constant 0 : i32
    %c0_i32_0 = arith.constant 0 : i32
    %c0_i32_1 = arith.constant 0 : i32
    return %c0_i32, %c0_i32_0 : i32, i32
  }
  func.func @transform_4(%arg0: i32) -> (i32, i32) {
    %c0_i32 = arith.constant 0 : i32
    %c0_i32_0 = arith.constant 0 : i32
    %c0_i32_1 = arith.constant 0 : i32
    return %c0_i32, %c0_i32_0 : i32, i32
  }
  func.func @transform_5(%arg0: i32) -> (i32, i32, i32) {
    %c0_i32 = arith.constant 0 : i32
    %c0_i32_0 = arith.constant 0 : i32
    %c0_i32_1 = arith.constant 0 : i32
    return %arg0, %c0_i32, %c0_i32_0 : i32, i32, i32
  }
}

</mosaic_0001>

<llo_original>
// kernel: roi_xconv1fc_head_forward.3
$region0: #{roi_xconv1fc_head_forward.3}
  #allocation0 [shape = 'u32[]', space=smem, size = 0x4, offset = 0x4, fixed_abs, tag = 'smem constant byte address 0x4 - core index']
  #allocation1 [shape = 'u32[144,128]{1,0:T(1,128)}', space=vmem, size = 0x12000, scoped, tag = 'internal scratch']
  #allocation2 [shape = 'f32[2,32]{1,0:T(2,128)}', space=vmem, size = 0x400, scoped, tag = 'scratch operand']
  %s0 = inlined_call_operand.vmem [shape: bf16[2,2048], index: 0, kind: input, shape index: {}]
  %s1 = inlined_call_operand.vmem [shape: bf16[2048,32], index: 1, kind: input, shape index: {}]
  %s2 = inlined_call_operand.vmem [shape: f32[1,32], index: 2, kind: input, shape index: {}]
  %s3 = inlined_call_operand.hbm [shape: f32[2,32], index: 3, kind: output, shape index: {}]
  %s4 = sld [smem:[#allocation0]]
  $region53: #{roi_xconv1fc_head_forward.3} parent=0
    _
  %s6 = ssub.s32 1, %s4
  %s7 = scalar_select 0, %s6, %s4
  $region1: #{roi_xconv1fc_head_forward.3} parent=0
    #allocation3 [shape = 'u8[1024]{0}', space=vmem, size = 0x400, scoped, tag = 'output window, operand 0, single buffered']
    #allocation4 [shape = 's32[2]{0}', space=sflag, size = 0x8, scoped, tag = 'scoped memory for roi_xconv1fc_head_forward.3']
    %8 = vsyncpa [#allocation4], 0
    loop: start=0, step=1, limit=6
    $region2: #{roi_xconv1fc_head_forward.3} parent=1 // loop_pre_header
      _
    $region3: #{roi_xconv1fc_head_forward.3} parent=1 // loop_header
      %s10 = sphi 0, %s14
      %p11 = scmp.ge.s32.totalorder %s10, 6
      %s20 = sphi 0, %s22
      %s23 = sphi 0, %s20
      %s24 = sphi 0, %s23
      %s40 = sphi 0, %s24
      %s46 = sphi 0, %s48
      %s49 = sphi 0, %s46
      %s50 = sphi 0, %s49
      %s66 = sphi 0, %s50
      %s70 = sphi 0, %s70
      %s72 = sphi 0, %s70
      %s73 = sphi 0, %s72
      %s87 = sphi 0, %s73
      %s91 = sphi 0, %s91
      %s93 = sphi 0, %s91
      %s94 = sphi 0, %s93
      %s108 = sphi 0, %s94
    $region4: #{roi_xconv1fc_head_forward.3} parent=1 // loop_header_branch
      %13 = sbr.rel (%p11) target = $region8
    $region5: #{roi_xconv1fc_head_forward.3} parent=1 // loop_body
      %s15 = ssub.s32 %s10, 1
      %s16 = ssub.s32 %s10, 2
      %s17 = sadd.s32 %s10, 1
      %s18 = ssub.s32 %s10, %s17
      %p19 = scmp.eq.s32.totalorder %s18, 0
      %s21 = sadd.s32 %s20, 1
      %s22 = scalar_select %p19, %s20, %s21
      %p25 = pneg %p19
      %p26 = scmp.eq.s32.totalorder %s10, 3
      %p27 = por %p25, %p26
      %p28 = scmp.ne.s32.totalorder %s20, %s23
      %p29 = scmp.eq.s32.totalorder %s10, 0
      %p30 = por %p28, %p29
      %p31 = scmp.ne.s32.totalorder %s20, %s23
      %p32 = scmp.eq.s32.totalorder %s15, 3
      %p33 = por %p31, %p32
      %p34 = scmp.ne.s32.totalorder %s23, %s24
      %p35 = scmp.eq.s32.totalorder %s15, 0
      %p36 = por %p34, %p35
      %p37 = scmp.ne.s32.totalorder %s23, %s24
      %p38 = scmp.eq.s32.totalorder %s16, 3
      %p39 = por %p37, %p38
      %p41 = scmp.ne.s32.totalorder %s24, %s40
      %p42 = scmp.eq.s32.totalorder %s16, 0
      %p43 = por %p41, %p42
      %s44 = ssub.s32 %s10, %s17
      %p45 = scmp.eq.s32.totalorder %s44, 0
      %s47 = sadd.s32 %s46, 1
      %s48 = scalar_select %p45, %s46, %s47
      %p51 = pneg %p45
      %p52 = scmp.eq.s32.totalorder %s10, 3
      %p53 = por %p51, %p52
      %p54 = scmp.ne.s32.totalorder %s46, %s49
      %p55 = scmp.eq.s32.totalorder %s10, 0
      %p56 = por %p54, %p55
      %p57 = scmp.ne.s32.totalorder %s46, %s49
      %p58 = scmp.eq.s32.totalorder %s15, 3
      %p59 = por %p57, %p58
      %p60 = scmp.ne.s32.totalorder %s49, %s50
      %p61 = scmp.eq.s32.totalorder %s15, 0
      %p62 = por %p60, %p61
      %p63 = scmp.ne.s32.totalorder %s49, %s50
      %p64 = scmp.eq.s32.totalorder %s16, 3
      %p65 = por %p63, %p64
      %p67 = scmp.ne.s32.totalorder %s50, %s66
      %p68 = scmp.eq.s32.totalorder %s16, 0
      %p69 = por %p67, %p68
      %s71 = sadd.s32 %s70, 1
      %p74 = scmp.eq.s32.totalorder %s10, 3
      %p75 = scmp.ne.s32.totalorder %s70, %s72
      %p76 = scmp.eq.s32.totalorder %s10, 0
      %p77 = por %p75, %p76
      %p78 = scmp.ne.s32.totalorder %s70, %s72
      %p79 = scmp.eq.s32.totalorder %s15, 3
      %p80 = por %p78, %p79
      %p81 = scmp.ne.s32.totalorder %s72, %s73
      %p82 = scmp.eq.s32.totalorder %s15, 0
      %p83 = por %p81, %p82
      %p84 = scmp.ne.s32.totalorder %s72, %s73
      %p85 = scmp.eq.s32.totalorder %s16, 3
      %p86 = por %p84, %p85
      %p88 = scmp.ne.s32.totalorder %s73, %s87
      %p89 = scmp.eq.s32.totalorder %s16, 0
      %p90 = por %p88, %p89
      %s92 = sadd.s32 %s91, 1
      %p95 = scmp.eq.s32.totalorder %s10, 3
      %p96 = scmp.ne.s32.totalorder %s91, %s93
      %p97 = scmp.eq.s32.totalorder %s10, 0
      %p98 = por %p96, %p97
      %p99 = scmp.ne.s32.totalorder %s91, %s93
      %p100 = scmp.eq.s32.totalorder %s15, 3
      %p101 = por %p99, %p100
      %p102 = scmp.ne.s32.totalorder %s93, %s94
      %p103 = scmp.eq.s32.totalorder %s15, 0
      %p104 = por %p102, %p103
      %p105 = scmp.ne.s32.totalorder %s93, %s94
      %p106 = scmp.eq.s32.totalorder %s16, 3
      %p107 = por %p105, %p106
      %p109 = scmp.ne.s32.totalorder %s94, %s108
      %p110 = scmp.eq.s32.totalorder %s16, 0
      %p111 = por %p109, %p110
      %p112 = scmp.le.s32.totalorder 1, %s10
      %p113 = scmp.lt.s32.totalorder %s10, 5
      %p114 = pnand %p112, %p113
      %p115 = pneg %p114
      // Predicated region
      $region9: #{roi_xconv1fc_head_forward.3} parent=5 // pred_check
        _
      $region10: #{roi_xconv1fc_head_forward.3} parent=5 // pred_check_branch
        %117 = sbr.rel (%p114) target = $region12
      $region11: #{roi_xconv1fc_head_forward.3} parent=5 // pred_region
        %s118 = ssub.s32 %s10, 1
        // Predicated region
        $region13: #{roi_xconv1fc_head_forward.3} parent=11 // pred_check
          %p119 = pneg %p83
        $region14: #{roi_xconv1fc_head_forward.3} parent=11 // pred_check_branch
          %121 = sbr.rel (%p119) target = $region16
        $region15: #{roi_xconv1fc_head_forward.3} parent=11 // pred_region
          _
        $region16: #{roi_xconv1fc_head_forward.3} parent=11 // pred_fallthru
          _
      $region12: #{roi_xconv1fc_head_forward.3} parent=5 // pred_fallthru
        _
      %p122 = scmp.lt.s32.totalorder %s10, 4
      // Predicated region
      $region17: #{roi_xconv1fc_head_forward.3} parent=5 // pred_check
        %p123 = pneg %p122
      $region18: #{roi_xconv1fc_head_forward.3} parent=5 // pred_check_branch
        %125 = sbr.rel (%p123) target = $region20
      $region19: #{roi_xconv1fc_head_forward.3} parent=5 // pred_region
        // Predicated region
        $region21: #{roi_xconv1fc_head_forward.3} parent=19 // pred_check
          %p126 = pneg %p30
        $region22: #{roi_xconv1fc_head_forward.3} parent=19 // pred_check_branch
          %128 = sbr.rel (%p126) target = $region24
        $region23: #{roi_xconv1fc_head_forward.3} parent=19 // pred_region
          %s129 = smul.u32 4, %s10
          %p130 = scmp.lt.s32.totalorder %s129, 15
          %s131 = scalar_select %p130, %s129, 15
          %s132 = scalar_lea.vmem %s0, %s131
          %s133 = smul.u32 4, %s10
        $region24: #{roi_xconv1fc_head_forward.3} parent=19 // pred_fallthru
          _
        // Predicated region
        $region25: #{roi_xconv1fc_head_forward.3} parent=19 // pred_check
          %p134 = pneg %p56
        $region26: #{roi_xconv1fc_head_forward.3} parent=19 // pred_check_branch
          %136 = sbr.rel (%p134) target = $region28
        $region27: #{roi_xconv1fc_head_forward.3} parent=19 // pred_region
          %s137 = smul.u32 64, %s10
          %p138 = scmp.lt.s32.totalorder %s137, 255
          %s139 = scalar_select %p138, %s137, 255
          %s140 = smul.addr %s139, 4
          %s141 = scalar_lea.vmem %s1, %s140
          %s142 = smul.u32 64, %s10
        $region28: #{roi_xconv1fc_head_forward.3} parent=19 // pred_fallthru
          _
      $region20: #{roi_xconv1fc_head_forward.3} parent=5 // pred_fallthru
        _
      %p143 = scmp.le.s32.totalorder 1, %s10
      %p144 = scmp.lt.s32.totalorder %s10, 5
      %p145 = pnand %p143, %p144
      %p146 = pneg %p145
      // Predicated region
      $region29: #{roi_xconv1fc_head_forward.3} parent=5 // pred_check
        _
      $region30: #{roi_xconv1fc_head_forward.3} parent=5 // pred_check_branch
        %148 = sbr.rel (%p145) target = $region32
      $region31: #{roi_xconv1fc_head_forward.3} parent=5 // pred_region
        %s149 = ssub.s32 %s10, 1
        %s150 = smul.u32 4, %s15
        %p151 = scmp.lt.s32.totalorder %s150, 15
        %s152 = scalar_select %p151, %s150, 15
        %s153 = scalar_lea.vmem %s0, %s152
        %p154 = pneg %p36
        %p155 = pneg %p33
        %s156 = smul.u32 64, %s15
        %p157 = scmp.lt.s32.totalorder %s156, 255
        %s158 = scalar_select %p157, %s156, 255
        %s159 = smul.addr %s158, 4
        %s160 = scalar_lea.vmem %s1, %s159
        %p161 = pneg %p62
        %p162 = pneg %p59
        %p163 = pneg %p83
        %p164 = pneg %p80
        %p165 = pneg %p104
        %p166 = pneg %p101
        %s167 = smul.u32 4, %s15
        %p168 = scmp.lt.s32.totalorder %s167, 15
        %s169 = scalar_select %p168, %s167, 15
        %s170 = scalar_lea.vmem %s0, %s169
        %s171 = smul.u32 4, %s15
        %s172 = smul.u32 64, %s15
        %p173 = scmp.lt.s32.totalorder %s172, 255
        %s174 = scalar_select %p173, %s172, 255
        %s175 = smul.addr %s174, 4
        %s176 = scalar_lea.vmem %s1, %s175
        %s177 = smul.u32 64, %s15
        %p179 = scmp.eq.s32.totalorder %s15, 0
        // Predicated region
        $region33: #{roi_xconv1fc_head_forward.3} parent=31 // pred_check
          %p180 = pneg %p179
        $region34: #{roi_xconv1fc_head_forward.3} parent=31 // pred_check_branch
          %182 = sbr.rel (%p180) target = $region36
        $region35: #{roi_xconv1fc_head_forward.3} parent=31 // pred_region
          %vm183 = vcmask 254976
          %184 = vst.msk [vmem:[#allocation2] sm:$0x3] %vm183, 0.0
        $region36: #{roi_xconv1fc_head_forward.3} parent=31 // pred_fallthru
          _
        %v185 = vld [vmem:[#allocation2] sm:$0x3]
        %v186 = vld [vmem:[%s170] sm:$0xf]
        %v187 = vld [vmem:[%s176] sm:$0xf]
        %v188 = vld [vmem:[%s176 + $0x4] sm:$0xf]
        %v189 = vld [vmem:[%s176 + $0x8] sm:$0xf]
        %v190 = vld [vmem:[%s176 + $0xc] sm:$0xf]
        %v191 = vld [vmem:[%s176 + $0x10] sm:$0xf]
        %v192 = vld [vmem:[%s176 + $0x14] sm:$0xf]
        %v193 = vld [vmem:[%s176 + $0x18] sm:$0xf]
        %v194 = vld [vmem:[%s176 + $0x1c] sm:$0xf]
        %v195 = vld [vmem:[%s176 + $0x20] sm:$0xf]
        %v196 = vld [vmem:[%s176 + $0x24] sm:$0xf]
        %v197 = vld [vmem:[%s176 + $0x28] sm:$0xf]
        %v198 = vld [vmem:[%s176 + $0x2c] sm:$0xf]
        %v199 = vld [vmem:[%s176 + $0x30] sm:$0xf]
        %v200 = vld [vmem:[%s176 + $0x34] sm:$0xf]
        %v201 = vld [vmem:[%s176 + $0x38] sm:$0xf]
        %v202 = vld [vmem:[%s176 + $0x3c] sm:$0xf]
        %v203 = vld [vmem:[%s176 + $0x40] sm:$0xf]
        %v204 = vld [vmem:[%s176 + $0x44] sm:$0xf]
        %v205 = vld [vmem:[%s176 + $0x48] sm:$0xf]
        %v206 = vld [vmem:[%s176 + $0x4c] sm:$0xf]
        %v207 = vld [vmem:[%s176 + $0x50] sm:$0xf]
        %v208 = vld [vmem:[%s176 + $0x54] sm:$0xf]
        %v209 = vld [vmem:[%s176 + $0x58] sm:$0xf]
        %v210 = vld [vmem:[%s176 + $0x5c] sm:$0xf]
        %v211 = vld [vmem:[%s176 + $0x60] sm:$0xf]
        %v212 = vld [vmem:[%s176 + $0x64] sm:$0xf]
        %v213 = vld [vmem:[%s176 + $0x68] sm:$0xf]
        %v214 = vld [vmem:[%s176 + $0x6c] sm:$0xf]
        %v215 = vld [vmem:[%s176 + $0x70] sm:$0xf]
        %v216 = vld [vmem:[%s176 + $0x74] sm:$0xf]
        %v217 = vld [vmem:[%s176 + $0x78] sm:$0xf]
        %v218 = vld [vmem:[%s176 + $0x7c] sm:$0xf]
        %v219 = vld [vmem:[%s176 + $0x80] sm:$0xf]
        %v220 = vld [vmem:[%s176 + $0x84] sm:$0xf]
        %v221 = vld [vmem:[%s176 + $0x88] sm:$0xf]
        %v222 = vld [vmem:[%s176 + $0x8c] sm:$0xf]
        %v223 = vld [vmem:[%s176 + $0x90] sm:$0xf]
        %v224 = vld [vmem:[%s176 + $0x94] sm:$0xf]
        %v225 = vld [vmem:[%s176 + $0x98] sm:$0xf]
        %v226 = vld [vmem:[%s176 + $0x9c] sm:$0xf]
        %v227 = vld [vmem:[%s176 + $0xa0] sm:$0xf]
        %v228 = vld [vmem:[%s176 + $0xa4] sm:$0xf]
        %v229 = vld [vmem:[%s176 + $0xa8] sm:$0xf]
        %v230 = vld [vmem:[%s176 + $0xac] sm:$0xf]
        %v231 = vld [vmem:[%s176 + $0xb0] sm:$0xf]
        %v232 = vld [vmem:[%s176 + $0xb4] sm:$0xf]
        %v233 = vld [vmem:[%s176 + $0xb8] sm:$0xf]
        %v234 = vld [vmem:[%s176 + $0xbc] sm:$0xf]
        %v235 = vld [vmem:[%s176 + $0xc0] sm:$0xf]
        %v236 = vld [vmem:[%s176 + $0xc4] sm:$0xf]
        %v237 = vld [vmem:[%s176 + $0xc8] sm:$0xf]
        %v238 = vld [vmem:[%s176 + $0xcc] sm:$0xf]
        %v239 = vld [vmem:[%s176 + $0xd0] sm:$0xf]
        %v240 = vld [vmem:[%s176 + $0xd4] sm:$0xf]
        %v241 = vld [vmem:[%s176 + $0xd8] sm:$0xf]
        %v242 = vld [vmem:[%s176 + $0xdc] sm:$0xf]
        %v243 = vld [vmem:[%s176 + $0xe0] sm:$0xf]
        %v244 = vld [vmem:[%s176 + $0xe4] sm:$0xf]
        %v245 = vld [vmem:[%s176 + $0xe8] sm:$0xf]
        %v246 = vld [vmem:[%s176 + $0xec] sm:$0xf]
        %v247 = vld [vmem:[%s176 + $0xf0] sm:$0xf]
        %v248 = vld [vmem:[%s176 + $0xf4] sm:$0xf]
        %v249 = vld [vmem:[%s176 + $0xf8] sm:$0xf]
        %v250 = vld [vmem:[%s176 + $0xfc] sm:$0xf]
        %v253 = vunpack.c.l.s4 1966171168
        %v254 = vunpack.c.0.s8 %v253
        %v255 = vlaneseq
        %v256 = vshrl.u32 %v255, 7
        %v257 = vsub.s32 %v254, %v256
        %v258 = vrot.slane %v186, %v257
        %v259 = vcombine.high %v258, %v258
        %v261 = vunpack.c.l.s4 1966171168
        %v262 = vunpack.c.0.s8 %v261
        %v263 = vlaneseq
        %v264 = vshrl.u32 %v263, 7
        %v265 = vsub.s32 %v262, %v264
        %v266 = vrot.slane %v258, %v265
        %v268 = vunpack.c.l.s4 1966171168
        %v269 = vunpack.c.0.s8 %v268
        %v270 = vlaneseq
        %v271 = vshrl.u32 %v270, 7
        %v272 = vsub.s32 %v269, %v271
        %v273 = vrot.slane %v259, %v272
        %v274 = vcombine.high %v266, %v266
        %v275 = vcombine.high %v273, %v273
        %v344 = vunpack.c.l.b16 %v187
        %v345 = vunpack.c.l.b16 %v188
        %v346 = vunpack.c.l.b16 %v189
        %v347 = vunpack.c.l.b16 %v190
        %v348 = vunpack.c.l.b16 %v191
        %v349 = vunpack.c.l.b16 %v192
        %v350 = vunpack.c.l.b16 %v193
        %v351 = vunpack.c.l.b16 %v194
        %v352 = vunpack.c.l.b16 %v195
        %v353 = vunpack.c.l.b16 %v196
        %v354 = vunpack.c.l.b16 %v197
        %v355 = vunpack.c.l.b16 %v198
        %v356 = vunpack.c.l.b16 %v199
        %v357 = vunpack.c.l.b16 %v200
        %v358 = vunpack.c.l.b16 %v201
        %v359 = vunpack.c.l.b16 %v202
        %v360 = vunpack.c.l.b16 %v203
        %v361 = vunpack.c.l.b16 %v204
        %v362 = vunpack.c.l.b16 %v205
        %v363 = vunpack.c.l.b16 %v206
        %v364 = vunpack.c.l.b16 %v207
        %v365 = vunpack.c.l.b16 %v208
        %v366 = vunpack.c.l.b16 %v209
        %v367 = vunpack.c.l.b16 %v210
        %v368 = vunpack.c.l.b16 %v211
        %v369 = vunpack.c.l.b16 %v212
        %v370 = vunpack.c.l.b16 %v213
        %v371 = vunpack.c.l.b16 %v214
        %v372 = vunpack.c.l.b16 %v215
        %v373 = vunpack.c.l.b16 %v216
        %v374 = vunpack.c.l.b16 %v217
        %v375 = vunpack.c.l.b16 %v218
        %v376 = vunpack.c.l.b16 %v219
        %v377 = vunpack.c.l.b16 %v220
        %v378 = vunpack.c.l.b16 %v221
        %v379 = vunpack.c.l.b16 %v222
        %v380 = vunpack.c.l.b16 %v223
        %v381 = vunpack.c.l.b16 %v224
        %v382 = vunpack.c.l.b16 %v225
        %v383 = vunpack.c.l.b16 %v226
        %v384 = vunpack.c.l.b16 %v227
        %v385 = vunpack.c.l.b16 %v228
        %v386 = vunpack.c.l.b16 %v229
        %v387 = vunpack.c.l.b16 %v230
        %v388 = vunpack.c.l.b16 %v231
        %v389 = vunpack.c.l.b16 %v232
        %v390 = vunpack.c.l.b16 %v233
        %v391 = vunpack.c.l.b16 %v234
        %v392 = vunpack.c.l.b16 %v235
        %v393 = vunpack.c.l.b16 %v236
        %v394 = vunpack.c.l.b16 %v237
        %v395 = vunpack.c.l.b16 %v238
        %v396 = vunpack.c.l.b16 %v239
        %v397 = vunpack.c.l.b16 %v240
        %v398 = vunpack.c.l.b16 %v241
        %v399 = vunpack.c.l.b16 %v242
        %v400 = vunpack.c.l.b16 %v243
        %v401 = vunpack.c.l.b16 %v244
        %v402 = vunpack.c.l.b16 %v245
        %v403 = vunpack.c.l.b16 %v246
        %v404 = vunpack.c.l.b16 %v247
        %v405 = vunpack.c.l.b16 %v248
        %v406 = vunpack.c.l.b16 %v249
        %v407 = vunpack.c.l.b16 %v250
        %v408 = vpack.c.b16 %v345, %v344
        %v409 = vpack.c.b16 %v347, %v346
        %v410 = vpack.c.b16 %v349, %v348
        %v411 = vpack.c.b16 %v351, %v350
        %v412 = vpack.c.b16 %v353, %v352
        %v413 = vpack.c.b16 %v355, %v354
        %v414 = vpack.c.b16 %v357, %v356
        %v415 = vpack.c.b16 %v359, %v358
        %v416 = vpack.c.b16 %v361, %v360
        %v417 = vpack.c.b16 %v363, %v362
        %v418 = vpack.c.b16 %v365, %v364
        %v419 = vpack.c.b16 %v367, %v366
        %v420 = vpack.c.b16 %v369, %v368
        %v421 = vpack.c.b16 %v371, %v370
        %v422 = vpack.c.b16 %v373, %v372
        %v423 = vpack.c.b16 %v375, %v374
        %v424 = vpack.c.b16 %v377, %v376
        %v425 = vpack.c.b16 %v379, %v378
        %v426 = vpack.c.b16 %v381, %v380
        %v427 = vpack.c.b16 %v383, %v382
        %v428 = vpack.c.b16 %v385, %v384
        %v429 = vpack.c.b16 %v387, %v386
        %v430 = vpack.c.b16 %v389, %v388
        %v431 = vpack.c.b16 %v391, %v390
        %v432 = vpack.c.b16 %v393, %v392
        %v433 = vpack.c.b16 %v395, %v394
        %v434 = vpack.c.b16 %v397, %v396
        %v435 = vpack.c.b16 %v399, %v398
        %v436 = vpack.c.b16 %v401, %v400
        %v437 = vpack.c.b16 %v403, %v402
        %v438 = vpack.c.b16 %v405, %v404
        %v439 = vpack.c.b16 %v407, %v406
        %472 = vmatprep.subr.bf16.mxu0 0
        %473 = vmatpush1.bf16.msra.mxu0 %v408
        %474 = vmatprep.subr.bf16.mxu0 0
        %475 = vmatpush1.bf16.msra.mxu0 %v409
        %476 = vmatprep.subr.bf16.mxu0 0
        %477 = vmatpush1.bf16.msra.mxu0 %v410
        %478 = vmatprep.subr.bf16.mxu0 0
        %479 = vmatpush1.bf16.msra.mxu0 %v411
        %480 = vmatprep.subr.bf16.mxu0 0
        %481 = vmatpush1.bf16.msra.mxu0 %v412
        %482 = vmatprep.subr.bf16.mxu0 0
        %483 = vmatpush1.bf16.msra.mxu0 %v413
        %484 = vmatprep.subr.bf16.mxu0 0
        %485 = vmatpush1.bf16.msra.mxu0 %v414
        %486 = vmatprep.subr.bf16.mxu0 0
        %487 = vmatpush1.bf16.msra.mxu0 %v415
        %488 = vmatprep.subr.bf16.mxu0 0
        %489 = vmatpush1.bf16.msra.mxu0 %v416
        %490 = vmatprep.subr.bf16.mxu0 0
        %491 = vmatpush1.bf16.msra.mxu0 %v417
        %492 = vmatprep.subr.bf16.mxu0 0
        %493 = vmatpush1.bf16.msra.mxu0 %v418
        %494 = vmatprep.subr.bf16.mxu0 0
        %495 = vmatpush1.bf16.msra.mxu0 %v419
        %496 = vmatprep.subr.bf16.mxu0 0
        %497 = vmatpush1.bf16.msra.mxu0 %v420
        %498 = vmatprep.subr.bf16.mxu0 0
        %499 = vmatpush1.bf16.msra.mxu0 %v421
        %500 = vmatprep.subr.bf16.mxu0 0
        %501 = vmatpush1.bf16.msra.mxu0 %v422
        %502 = vmatprep.subr.bf16.mxu0 0
        %503 = vmatpush1.bf16.msra.mxu0 %v423
        %504 = vmatprep.mubr.bf16.mxu0 %v273
        %505 = vmatmul.mubr.bf16.gmra.mrb[0].mxu0 %v266
        %v506 = vpop.f32.mrb[0].mxu0
        %v507 = vadd.f32 0.0, %v506
        %v508 = vpop.f32.mrb[0].mxu0
        %v509 = vpop.f32.mrb[0].mxu0
        %v510 = vpop.f32.mrb[0].mxu0
        %511 = vdwg.mxu0
        %512 = vmatprep.subr.bf16.mxu0 0
        %513 = vmatpush1.bf16.msra.mxu0 %v424
        %514 = vmatprep.subr.bf16.mxu0 0
        %515 = vmatpush1.bf16.msra.mxu0 %v425
        %516 = vmatprep.subr.bf16.mxu0 0
        %517 = vmatpush1.bf16.msra.mxu0 %v426
        %518 = vmatprep.subr.bf16.mxu0 0
        %519 = vmatpush1.bf16.msra.mxu0 %v427
        %520 = vmatprep.subr.bf16.mxu0 0
        %521 = vmatpush1.bf16.msra.mxu0 %v428
        %522 = vmatprep.subr.bf16.mxu0 0
        %523 = vmatpush1.bf16.msra.mxu0 %v429
        %524 = vmatprep.subr.bf16.mxu0 0
        %525 = vmatpush1.bf16.msra.mxu0 %v430
        %526 = vmatprep.subr.bf16.mxu0 0
        %527 = vmatpush1.bf16.msra.mxu0 %v431
        %528 = vmatprep.subr.bf16.mxu0 0
        %529 = vmatpush1.bf16.msra.mxu0 %v432
        %530 = vmatprep.subr.bf16.mxu0 0
        %531 = vmatpush1.bf16.msra.mxu0 %v433
        %532 = vmatprep.subr.bf16.mxu0 0
        %533 = vmatpush1.bf16.msra.mxu0 %v434
        %534 = vmatprep.subr.bf16.mxu0 0
        %535 = vmatpush1.bf16.msra.mxu0 %v435
        %536 = vmatprep.subr.bf16.mxu0 0
        %537 = vmatpush1.bf16.msra.mxu0 %v436
        %538 = vmatprep.subr.bf16.mxu0 0
        %539 = vmatpush1.bf16.msra.mxu0 %v437
        %540 = vmatprep.subr.bf16.mxu0 0
        %541 = vmatpush1.bf16.msra.mxu0 %v438
        %542 = vmatprep.subr.bf16.mxu0 0
        %543 = vmatpush1.bf16.msra.mxu0 %v439
        %544 = vmatprep.mubr.bf16.mxu0 %v275
        %545 = vmatmul.mubr.bf16.gmra.mrb[0].mxu0 %v274
        %v546 = vpop.f32.mrb[0].mxu0
        %v547 = vadd.f32 %v507, %v546
        %v548 = vpop.f32.mrb[0].mxu0
        %v549 = vpop.f32.mrb[0].mxu0
        %v550 = vpop.f32.mrb[0].mxu0
        %551 = vdwg.mxu0
        %v552 = vadd.f32 %v185, %v547
        %vm553 = vcmask 254976
        %554 = vst.msk [vmem:[#allocation2] sm:$0x3] %vm553, %v552
        %p555 = scmp.eq.s32.totalorder %s15, 3
        // Predicated region
        $region37: #{roi_xconv1fc_head_forward.3} parent=31 // pred_check
          %p556 = pneg %p555
        $region38: #{roi_xconv1fc_head_forward.3} parent=31 // pred_check_branch
          %558 = sbr.rel (%p556) target = $region40
        $region39: #{roi_xconv1fc_head_forward.3} parent=31 // pred_region
          %v559 = vld [vmem:[#allocation2] sm:$0x3]
          %v560 = vld [vmem:[%s2] sm:$0x1]
          %v562 = vlaneseq
          %v563 = vshrl.u32 %v562, 7
          %v564 = vsub.s32 0, %v563
          %v565 = vrot.slane %v560, %v564
          %v567 = vadd.f32 %v559, %v565
          %v568 = vmax.f32 %v567, 0.0
          %569 = vst.msk [vmem:[#allocation3] sm:$0x3] %vm553, %v568
        $region40: #{roi_xconv1fc_head_forward.3} parent=31 // pred_fallthru
          _
        // Predicated region
        $region41: #{roi_xconv1fc_head_forward.3} parent=31 // pred_check
          %p570 = pneg %p101
        $region42: #{roi_xconv1fc_head_forward.3} parent=31 // pred_check_branch
          %572 = sbr.rel (%p570) target = $region44
        $region43: #{roi_xconv1fc_head_forward.3} parent=31 // pred_region
          %s574 = ssub.s32 32, 32
          %575 = vsyncadd [#allocation4], %s574
          %s577 = sshll.u32 [#allocation3], 4
          %s578 = int_to_ptr.vmem [resolvable:$true] %s577
          %580 = dma.vmem_to_hbm [thread:$0]  %s578, 32, %s3, [#allocation4]
        $region44: #{roi_xconv1fc_head_forward.3} parent=31 // pred_fallthru
          _
        // Predicated region
        $region45: #{roi_xconv1fc_head_forward.3} parent=31 // pred_check
          %p581 = pneg %p101
        $region46: #{roi_xconv1fc_head_forward.3} parent=31 // pred_check_branch
          %583 = sbr.rel (%p581) target = $region48
        $region47: #{roi_xconv1fc_head_forward.3} parent=31 // pred_region
          %584 = dma.done [#allocation4], 32
        $region48: #{roi_xconv1fc_head_forward.3} parent=31 // pred_fallthru
          _
      $region32: #{roi_xconv1fc_head_forward.3} parent=5 // pred_fallthru
        _
      %p585 = scmp.le.s32.totalorder 2, %s10
      // Predicated region
      $region49: #{roi_xconv1fc_head_forward.3} parent=5 // pred_check
        %p586 = pneg %p585
      $region50: #{roi_xconv1fc_head_forward.3} parent=5 // pred_check_branch
        %588 = sbr.rel (%p586) target = $region52
      $region51: #{roi_xconv1fc_head_forward.3} parent=5 // pred_region
        %s589 = ssub.s32 %s10, 2
      $region52: #{roi_xconv1fc_head_forward.3} parent=5 // pred_fallthru
        _
    $region6: #{roi_xconv1fc_head_forward.3} parent=1 // loop_footer
      %s14 = sadd.s32 1, %s10
    $region7: #{roi_xconv1fc_head_forward.3} parent=1 // loop_footer_branch
      %9 = sbr.rel target = $region3
    $region8: #{roi_xconv1fc_head_forward.3} parent=1 // loop_exit
      _
    %590 = vsyncpa [#allocation4], 1
    %s591 = scalar_lea.sflag [#allocation4], 1
    %592 = vsyncpa %s591, 1

// kernel: roi_xconv1fc_head_forward.2
$region0: #{roi_xconv1fc_head_forward.2}
  #allocation0 [shape = 'u32[]', space=smem, size = 0x4, offset = 0x4, fixed_abs, tag = 'smem constant byte address 0x4 - core index']
  #allocation1 [shape = 'u32[144,128]{1,0:T(1,128)}', space=vmem, size = 0x12000, scoped, tag = 'internal scratch']
  #allocation2 [shape = 'bf16[1,10,10,4]{3,2,1,0:T(8,128)(2,1)}', space=vmem, size = 0xa000, scoped, tag = 'scratch operand']
  #allocation3 [shape = 'bf16[1,10,10,32]{3,2,1,0:T(8,128)(2,1)}', space=vmem, size = 0xa000, scoped, tag = 'scratch operand']
  %s0 = inlined_call_operand.vmem [shape: bf16[2,8,8,4], index: 0, kind: input, shape index: {}]
  %s1 = inlined_call_operand.vmem [shape: bf16[36,32], index: 1, kind: input, shape index: {}]
  %s2 = inlined_call_operand.vmem [shape: f32[1,32], index: 2, kind: input, shape index: {}]
  %s3 = inlined_call_operand.vmem [shape: bf16[288,32], index: 3, kind: input, shape index: {}]
  %s4 = inlined_call_operand.vmem [shape: f32[1,32], index: 4, kind: input, shape index: {}]
  %s5 = inlined_call_operand.vmem [shape: bf16[2,64,32], index: 5, kind: output, shape index: {}]
  %s6 = sld [smem:[#allocation0]]
  $region53: #{roi_xconv1fc_head_forward.2} parent=0
    _
  %s8 = ssub.s32 1, %s6
  %s9 = scalar_select 0, %s8, %s6
  loop: start=0, step=1, limit=4
  $region2: #{roi_xconv1fc_head_forward.2} parent=0 // loop_pre_header
    _
  $region3: #{roi_xconv1fc_head_forward.2} parent=0 // loop_header
    %s11 = sphi 0, %s15
    %p12 = scmp.ge.s32.totalorder %s11, 4
    %s21 = sphi 0, %s23
    %s24 = sphi 0, %s21
    %s25 = sphi 0, %s24
    %s41 = sphi 0, %s25
    %s45 = sphi 0, %s45
    %s47 = sphi 0, %s45
    %s48 = sphi 0, %s47
    %s62 = sphi 0, %s48
    %s66 = sphi 0, %s66
    %s68 = sphi 0, %s66
    %s69 = sphi 0, %s68
    %s83 = sphi 0, %s69
    %s87 = sphi 0, %s87
    %s89 = sphi 0, %s87
    %s90 = sphi 0, %s89
    %s104 = sphi 0, %s90
    %s108 = sphi 0, %s108
    %s110 = sphi 0, %s108
    %s111 = sphi 0, %s110
    %s125 = sphi 0, %s111
    %s131 = sphi 0, %s133
    %s134 = sphi 0, %s131
    %s135 = sphi 0, %s134
    %s151 = sphi 0, %s135
  $region4: #{roi_xconv1fc_head_forward.2} parent=0 // loop_header_branch
    %14 = sbr.rel (%p12) target = $region8
  $region5: #{roi_xconv1fc_head_forward.2} parent=0 // loop_body
    %s16 = ssub.s32 %s11, 1
    %s17 = ssub.s32 %s11, 2
    %s18 = sadd.s32 %s11, 1
    %s19 = ssub.s32 %s11, %s18
    %p20 = scmp.eq.s32.totalorder %s19, 0
    %s22 = sadd.s32 %s21, 1
    %s23 = scalar_select %p20, %s21, %s22
    %p26 = pneg %p20
    %p27 = scmp.eq.s32.totalorder %s11, 1
    %p28 = por %p26, %p27
    %p29 = scmp.ne.s32.totalorder %s21, %s24
    %p30 = scmp.eq.s32.totalorder %s11, 0
    %p31 = por %p29, %p30
    %p32 = scmp.ne.s32.totalorder %s21, %s24
    %p33 = scmp.eq.s32.totalorder %s16, 1
    %p34 = por %p32, %p33
    %p35 = scmp.ne.s32.totalorder %s24, %s25
    %p36 = scmp.eq.s32.totalorder %s16, 0
    %p37 = por %p35, %p36
    %p38 = scmp.ne.s32.totalorder %s24, %s25
    %p39 = scmp.eq.s32.totalorder %s17, 1
    %p40 = por %p38, %p39
    %p42 = scmp.ne.s32.totalorder %s25, %s41
    %p43 = scmp.eq.s32.totalorder %s17, 0
    %p44 = por %p42, %p43
    %s46 = sadd.s32 %s45, 1
    %p49 = scmp.eq.s32.totalorder %s11, 1
    %p50 = scmp.ne.s32.totalorder %s45, %s47
    %p51 = scmp.eq.s32.totalorder %s11, 0
    %p52 = por %p50, %p51
    %p53 = scmp.ne.s32.totalorder %s45, %s47
    %p54 = scmp.eq.s32.totalorder %s16, 1
    %p55 = por %p53, %p54
    %p56 = scmp.ne.s32.totalorder %s47, %s48
    %p57 = scmp.eq.s32.totalorder %s16, 0
    %p58 = por %p56, %p57
    %p59 = scmp.ne.s32.totalorder %s47, %s48
    %p60 = scmp.eq.s32.totalorder %s17, 1
    %p61 = por %p59, %p60
    %p63 = scmp.ne.s32.totalorder %s48, %s62
    %p64 = scmp.eq.s32.totalorder %s17, 0
    %p65 = por %p63, %p64
    %s67 = sadd.s32 %s66, 1
    %p70 = scmp.eq.s32.totalorder %s11, 1
    %p71 = scmp.ne.s32.totalorder %s66, %s68
    %p72 = scmp.eq.s32.totalorder %s11, 0
    %p73 = por %p71, %p72
    %p74 = scmp.ne.s32.totalorder %s66, %s68
    %p75 = scmp.eq.s32.totalorder %s16, 1
    %p76 = por %p74, %p75
    %p77 = scmp.ne.s32.totalorder %s68, %s69
    %p78 = scmp.eq.s32.totalorder %s16, 0
    %p79 = por %p77, %p78
    %p80 = scmp.ne.s32.totalorder %s68, %s69
    %p81 = scmp.eq.s32.totalorder %s17, 1
    %p82 = por %p80, %p81
    %p84 = scmp.ne.s32.totalorder %s69, %s83
    %p85 = scmp.eq.s32.totalorder %s17, 0
    %p86 = por %p84, %p85
    %s88 = sadd.s32 %s87, 1
    %p91 = scmp.eq.s32.totalorder %s11, 1
    %p92 = scmp.ne.s32.totalorder %s87, %s89
    %p93 = scmp.eq.s32.totalorder %s11, 0
    %p94 = por %p92, %p93
    %p95 = scmp.ne.s32.totalorder %s87, %s89
    %p96 = scmp.eq.s32.totalorder %s16, 1
    %p97 = por %p95, %p96
    %p98 = scmp.ne.s32.totalorder %s89, %s90
    %p99 = scmp.eq.s32.totalorder %s16, 0
    %p100 = por %p98, %p99
    %p101 = scmp.ne.s32.totalorder %s89, %s90
    %p102 = scmp.eq.s32.totalorder %s17, 1
    %p103 = por %p101, %p102
    %p105 = scmp.ne.s32.totalorder %s90, %s104
    %p106 = scmp.eq.s32.totalorder %s17, 0
    %p107 = por %p105, %p106
    %s109 = sadd.s32 %s108, 1
    %p112 = scmp.eq.s32.totalorder %s11, 1
    %p113 = scmp.ne.s32.totalorder %s108, %s110
    %p114 = scmp.eq.s32.totalorder %s11, 0
    %p115 = por %p113, %p114
    %p116 = scmp.ne.s32.totalorder %s108, %s110
    %p117 = scmp.eq.s32.totalorder %s16, 1
    %p118 = por %p116, %p117
    %p119 = scmp.ne.s32.totalorder %s110, %s111
    %p120 = scmp.eq.s32.totalorder %s16, 0
    %p121 = por %p119, %p120
    %p122 = scmp.ne.s32.totalorder %s110, %s111
    %p123 = scmp.eq.s32.totalorder %s17, 1
    %p124 = por %p122, %p123
    %p126 = scmp.ne.s32.totalorder %s111, %s125
    %p127 = scmp.eq.s32.totalorder %s17, 0
    %p128 = por %p126, %p127
    %s129 = ssub.s32 %s11, %s18
    %p130 = scmp.eq.s32.totalorder %s129, 0
    %s132 = sadd.s32 %s131, 1
    %s133 = scalar_select %p130, %s131, %s132
    %p136 = pneg %p130
    %p137 = scmp.eq.s32.totalorder %s11, 1
    %p138 = por %p136, %p137
    %p139 = scmp.ne.s32.totalorder %s131, %s134
    %p140 = scmp.eq.s32.totalorder %s11, 0
    %p141 = por %p139, %p140
    %p142 = scmp.ne.s32.totalorder %s131, %s134
    %p143 = scmp.eq.s32.totalorder %s16, 1
    %p144 = por %p142, %p143
    %p145 = scmp.ne.s32.totalorder %s134, %s135
    %p146 = scmp.eq.s32.totalorder %s16, 0
    %p147 = por %p145, %p146
    %p148 = scmp.ne.s32.totalorder %s134, %s135
    %p149 = scmp.eq.s32.totalorder %s17, 1
    %p150 = por %p148, %p149
    %p152 = scmp.ne.s32.totalorder %s135, %s151
    %p153 = scmp.eq.s32.totalorder %s17, 0
    %p154 = por %p152, %p153
    %p155 = scmp.le.s32.totalorder 1, %s11
    %p156 = scmp.lt.s32.totalorder %s11, 3
    %p157 = pnand %p155, %p156
    %p158 = pneg %p157
    // Predicated region
    $region9: #{roi_xconv1fc_head_forward.2} parent=5 // pred_check
      _
    $region10: #{roi_xconv1fc_head_forward.2} parent=5 // pred_check_branch
      %160 = sbr.rel (%p157) target = $region12
    $region11: #{roi_xconv1fc_head_forward.2} parent=5 // pred_region
      %s161 = ssub.s32 %s11, 1
      // Predicated region
      $region13: #{roi_xconv1fc_head_forward.2} parent=11 // pred_check
        %p162 = pneg %p58
      $region14: #{roi_xconv1fc_head_forward.2} parent=11 // pred_check_branch
        %164 = sbr.rel (%p162) target = $region16
      $region15: #{roi_xconv1fc_head_forward.2} parent=11 // pred_region
        _
      $region16: #{roi_xconv1fc_head_forward.2} parent=11 // pred_fallthru
        _
      // Predicated region
      $region17: #{roi_xconv1fc_head_forward.2} parent=11 // pred_check
        %p165 = pneg %p79
      $region18: #{roi_xconv1fc_head_forward.2} parent=11 // pred_check_branch
        %167 = sbr.rel (%p165) target = $region20
      $region19: #{roi_xconv1fc_head_forward.2} parent=11 // pred_region
        _
      $region20: #{roi_xconv1fc_head_forward.2} parent=11 // pred_fallthru
        _
      // Predicated region
      $region21: #{roi_xconv1fc_head_forward.2} parent=11 // pred_check
        %p168 = pneg %p100
      $region22: #{roi_xconv1fc_head_forward.2} parent=11 // pred_check_branch
        %170 = sbr.rel (%p168) target = $region24
      $region23: #{roi_xconv1fc_head_forward.2} parent=11 // pred_region
        _
      $region24: #{roi_xconv1fc_head_forward.2} parent=11 // pred_fallthru
        _
      // Predicated region
      $region25: #{roi_xconv1fc_head_forward.2} parent=11 // pred_check
        %p171 = pneg %p121
      $region26: #{roi_xconv1fc_head_forward.2} parent=11 // pred_check_branch
        %173 = sbr.rel (%p171) target = $region28
      $region27: #{roi_xconv1fc_head_forward.2} parent=11 // pred_region
        _
      $region28: #{roi_xconv1fc_head_forward.2} parent=11 // pred_fallthru
        _
    $region12: #{roi_xconv1fc_head_forward.2} parent=5 // pred_fallthru
      _
    %p174 = scmp.lt.s32.totalorder %s11, 2
    // Predicated region
    $region29: #{roi_xconv1fc_head_forward.2} parent=5 // pred_check
      %p175 = pneg %p174
    $region30: #{roi_xconv1fc_head_forward.2} parent=5 // pred_check_branch
      %177 = sbr.rel (%p175) target = $region32
    $region31: #{roi_xconv1fc_head_forward.2} parent=5 // pred_region
      // Predicated region
      $region33: #{roi_xconv1fc_head_forward.2} parent=31 // pred_check
        %p178 = pneg %p31
      $region34: #{roi_xconv1fc_head_forward.2} parent=31 // pred_check_branch
        %180 = sbr.rel (%p178) target = $region36
      $region35: #{roi_xconv1fc_head_forward.2} parent=31 // pred_region
        %p181 = scmp.lt.s32.totalorder %s11, 1
        %s182 = scalar_select %p181, %s11, 1
        %s183 = smul.addr %s182, 8
        %s184 = smul.addr %s183, 4
        %s185 = scalar_lea.vmem %s0, %s184
      $region36: #{roi_xconv1fc_head_forward.2} parent=31 // pred_fallthru
        _
    $region32: #{roi_xconv1fc_head_forward.2} parent=5 // pred_fallthru
      _
    %p186 = scmp.le.s32.totalorder 1, %s11
    %p187 = scmp.lt.s32.totalorder %s11, 3
    %p188 = pnand %p186, %p187
    %p189 = pneg %p188
    // Predicated region
    $region37: #{roi_xconv1fc_head_forward.2} parent=5 // pred_check
      _
    $region38: #{roi_xconv1fc_head_forward.2} parent=5 // pred_check_branch
      %191 = sbr.rel (%p188) target = $region40
    $region39: #{roi_xconv1fc_head_forward.2} parent=5 // pred_region
      %s192 = ssub.s32 %s11, 1
      %p193 = scmp.lt.s32.totalorder %s16, 1
      %s194 = scalar_select %p193, %s16, 1
      %s195 = smul.addr %s194, 8
      %s196 = smul.addr %s195, 4
      %s197 = scalar_lea.vmem %s0, %s196
      %p198 = pneg %p37
      %p199 = pneg %p34
      %p200 = pneg %p58
      %p201 = pneg %p55
      %p202 = pneg %p79
      %p203 = pneg %p76
      %p204 = pneg %p100
      %p205 = pneg %p97
      %p206 = pneg %p121
      %p207 = pneg %p118
      %p208 = pneg %p147
      %p209 = pneg %p144
      %p210 = scmp.lt.s32.totalorder %s16, 1
      %s211 = scalar_select %p210, %s16, 1
      %s212 = smul.addr %s211, 8
      %s213 = smul.addr %s212, 4
      %s214 = scalar_lea.vmem %s5, %s213
      %p215 = scmp.lt.s32.totalorder %s16, 1
      %s216 = scalar_select %p215, %s16, 1
      %s217 = smul.addr %s216, 8
      %s218 = smul.addr %s217, 4
      %s219 = scalar_lea.vmem %s0, %s218
      %p220 = scmp.lt.s32.totalorder %s16, 1
      %s221 = scalar_select %p220, %s16, 1
      %s222 = smul.addr %s221, 8
      %s223 = smul.addr %s222, 4
      %s224 = scalar_lea.vmem %s5, %s223
      %vm226 = vcmask 27648
      %227 = vst.msk [vmem:[#allocation2] sm:$0xf] %vm226, 0
      %vm228 = vcmask 24576
      %229 = vst.msk [vmem:[#allocation2 + $0x4] sm:$0x1] %vm228, 0
      %s230 = scalar_lea.vmem [#allocation2], 72
      %231 = vst.msk [vmem:[%s230] sm:$0xf] %vm226, 0
      %232 = vst.msk [vmem:[%s230 + $0x4] sm:$0x1] %vm228, 0
      %s233 = scalar_lea.vmem [#allocation2], 8
      %vm234 = vcmask 24576
      %vm235 = vsmask.f32 256
      %vm236 = vmand %vm234, %vm235
      %v237 = vld [vmem:[%s233] sm:$0x1]
      %v238 = vsel %vm236, 0, %v237
      %239 = vst [vmem:[%s233] sm:$0x1] %v238
      %v240 = vld [vmem:[%s233 + $0x8] sm:$0x1]
      %v241 = vsel %vm236, 0, %v240
      %242 = vst [vmem:[%s233 + $0x8] sm:$0x1] %v241
      %v243 = vld [vmem:[%s233 + $0x10] sm:$0x1]
      %v244 = vsel %vm236, 0, %v243
      %245 = vst [vmem:[%s233 + $0x10] sm:$0x1] %v244
      %v246 = vld [vmem:[%s233 + $0x18] sm:$0x1]
      %v247 = vsel %vm236, 0, %v246
      %248 = vst [vmem:[%s233 + $0x18] sm:$0x1] %v247
      %v249 = vld [vmem:[%s233 + $0x20] sm:$0x1]
      %v250 = vsel %vm236, 0, %v249
      %251 = vst [vmem:[%s233 + $0x20] sm:$0x1] %v250
      %v252 = vld [vmem:[%s233 + $0x28] sm:$0x1]
      %v253 = vsel %vm236, 0, %v252
      %254 = vst [vmem:[%s233 + $0x28] sm:$0x1] %v253
      %v255 = vld [vmem:[%s233 + $0x30] sm:$0x1]
      %v256 = vsel %vm236, 0, %v255
      %257 = vst [vmem:[%s233 + $0x30] sm:$0x1] %v256
      %v258 = vld [vmem:[%s233 + $0x38] sm:$0x1]
      %v259 = vsel %vm236, 0, %v258
      %260 = vst [vmem:[%s233 + $0x38] sm:$0x1] %v259
      %vm261 = vsmask.f32 7938
      %vm262 = vmand %vm234, %vm261
      %v263 = vld [vmem:[%s233 + $0x4] sm:$0x1]
      %v264 = vsel %vm262, 0, %v263
      %265 = vst [vmem:[%s233 + $0x4] sm:$0x1] %v264
      %v266 = vld [vmem:[%s233 + $0xc] sm:$0x1]
      %v267 = vsel %vm262, 0, %v266
      %268 = vst [vmem:[%s233 + $0xc] sm:$0x1] %v267
      %v269 = vld [vmem:[%s233 + $0x14] sm:$0x1]
      %v270 = vsel %vm262, 0, %v269
      %271 = vst [vmem:[%s233 + $0x14] sm:$0x1] %v270
      %v272 = vld [vmem:[%s233 + $0x1c] sm:$0x1]
      %v273 = vsel %vm262, 0, %v272
      %274 = vst [vmem:[%s233 + $0x1c] sm:$0x1] %v273
      %v275 = vld [vmem:[%s233 + $0x24] sm:$0x1]
      %v276 = vsel %vm262, 0, %v275
      %277 = vst [vmem:[%s233 + $0x24] sm:$0x1] %v276
      %v278 = vld [vmem:[%s233 + $0x2c] sm:$0x1]
      %v279 = vsel %vm262, 0, %v278
      %280 = vst [vmem:[%s233 + $0x2c] sm:$0x1] %v279
      %v281 = vld [vmem:[%s233 + $0x34] sm:$0x1]
      %v282 = vsel %vm262, 0, %v281
      %283 = vst [vmem:[%s233 + $0x34] sm:$0x1] %v282
      %v284 = vld [vmem:[%s233 + $0x3c] sm:$0x1]
      %v285 = vsel %vm262, 0, %v284
      %286 = vst [vmem:[%s233 + $0x3c] sm:$0x1] %v285
      %vm287 = vcmask 257024
      %288 = vst.msk [vmem:[#allocation3] sm:$0xf] %vm287, 0
      %vm289 = vcmask 253952
      %290 = vst.msk [vmem:[#allocation3 + $0x4] sm:$0x1] %vm289, 0
      %s291 = scalar_lea.vmem [#allocation3], 72
      %292 = vst.msk [vmem:[%s291] sm:$0xf] %vm287, 0
      %293 = vst.msk [vmem:[%s291 + $0x4] sm:$0x1] %vm289, 0
      %s294 = scalar_lea.vmem [#allocation3], 8
      %vm295 = vcmask 253952
      %vm296 = vmand %vm295, %vm235
      %v297 = vld [vmem:[%s294] sm:$0x1]
      %v298 = vsel %vm296, 0, %v297
      %299 = vst [vmem:[%s294] sm:$0x1] %v298
      %v300 = vld [vmem:[%s294 + $0x8] sm:$0x1]
      %v301 = vsel %vm296, 0, %v300
      %302 = vst [vmem:[%s294 + $0x8] sm:$0x1] %v301
      %v303 = vld [vmem:[%s294 + $0x10] sm:$0x1]
      %v304 = vsel %vm296, 0, %v303
      %305 = vst [vmem:[%s294 + $0x10] sm:$0x1] %v304
      %v306 = vld [vmem:[%s294 + $0x18] sm:$0x1]
      %v307 = vsel %vm296, 0, %v306
      %308 = vst [vmem:[%s294 + $0x18] sm:$0x1] %v307
      %v309 = vld [vmem:[%s294 + $0x20] sm:$0x1]
      %v310 = vsel %vm296, 0, %v309
      %311 = vst [vmem:[%s294 + $0x20] sm:$0x1] %v310
      %v312 = vld [vmem:[%s294 + $0x28] sm:$0x1]
      %v313 = vsel %vm296, 0, %v312
      %314 = vst [vmem:[%s294 + $0x28] sm:$0x1] %v313
      %v315 = vld [vmem:[%s294 + $0x30] sm:$0x1]
      %v316 = vsel %vm296, 0, %v315
      %317 = vst [vmem:[%s294 + $0x30] sm:$0x1] %v316
      %v318 = vld [vmem:[%s294 + $0x38] sm:$0x1]
      %v319 = vsel %vm296, 0, %v318
      %320 = vst [vmem:[%s294 + $0x38] sm:$0x1] %v319
      %vm321 = vmand %vm295, %vm261
      %v322 = vld [vmem:[%s294 + $0x4] sm:$0x1]
      %v323 = vsel %vm321, 0, %v322
      %324 = vst [vmem:[%s294 + $0x4] sm:$0x1] %v323
      %v325 = vld [vmem:[%s294 + $0xc] sm:$0x1]
      %v326 = vsel %vm321, 0, %v325
      %327 = vst [vmem:[%s294 + $0xc] sm:$0x1] %v326
      %v328 = vld [vmem:[%s294 + $0x14] sm:$0x1]
      %v329 = vsel %vm321, 0, %v328
      %330 = vst [vmem:[%s294 + $0x14] sm:$0x1] %v329
      %v331 = vld [vmem:[%s294 + $0x1c] sm:$0x1]
      %v332 = vsel %vm321, 0, %v331
      %333 = vst [vmem:[%s294 + $0x1c] sm:$0x1] %v332
      %v334 = vld [vmem:[%s294 + $0x24] sm:$0x1]
      %v335 = vsel %vm321, 0, %v334
      %336 = vst [vmem:[%s294 + $0x24] sm:$0x1] %v335
      %v337 = vld [vmem:[%s294 + $0x2c] sm:$0x1]
      %v338 = vsel %vm321, 0, %v337
      %339 = vst [vmem:[%s294 + $0x2c] sm:$0x1] %v338
      %v340 = vld [vmem:[%s294 + $0x34] sm:$0x1]
      %v341 = vsel %vm321, 0, %v340
      %342 = vst [vmem:[%s294 + $0x34] sm:$0x1] %v341
      %v343 = vld [vmem:[%s294 + $0x3c] sm:$0x1]
      %v344 = vsel %vm321, 0, %v343
      %345 = vst [vmem:[%s294 + $0x3c] sm:$0x1] %v344
      %v346 = vld [vmem:[%s219] sm:$0xf]
      %v347 = vld [vmem:[%s219 + $0x4] sm:$0xf]
      %v348 = vld [vmem:[%s219 + $0x8] sm:$0xf]
      %v349 = vld [vmem:[%s219 + $0xc] sm:$0xf]
      %v350 = vld [vmem:[%s219 + $0x10] sm:$0xf]
      %v351 = vld [vmem:[%s219 + $0x14] sm:$0xf]
      %v352 = vld [vmem:[%s219 + $0x18] sm:$0xf]
      %v353 = vld [vmem:[%s219 + $0x1c] sm:$0xf]
      %v355 = vshrl.u32 %v346, 16
      %v357 = vrot.slane %v355, 7
      %v358 = vshll.u32 %v346, 16
      %v360 = vor.u32 %v357, %v358
      %v361 = vrot.slane %v357, 4
      %v363 = vshrl.u32 %v347, 16
      %v365 = vrot.slane %v363, 7
      %v366 = vshll.u32 %v347, 16
      %v368 = vor.u32 %v365, %v366
      %v369 = vrot.slane %v365, 4
      %v371 = vshrl.u32 %v348, 16
      %v373 = vrot.slane %v371, 7
      %v374 = vshll.u32 %v348, 16
      %v376 = vor.u32 %v373, %v374
      %v377 = vrot.slane %v373, 4
      %v379 = vshrl.u32 %v349, 16
      %v381 = vrot.slane %v379, 7
      %v382 = vshll.u32 %v349, 16
      %v384 = vor.u32 %v381, %v382
      %v385 = vrot.slane %v381, 4
      %v387 = vshrl.u32 %v350, 16
      %v389 = vrot.slane %v387, 7
      %v390 = vshll.u32 %v350, 16
      %v392 = vor.u32 %v389, %v390
      %v393 = vrot.slane %v389, 4
      %v395 = vshrl.u32 %v351, 16
      %v397 = vrot.slane %v395, 7
      %v398 = vshll.u32 %v351, 16
      %v400 = vor.u32 %v397, %v398
      %v401 = vrot.slane %v397, 4
      %v403 = vshrl.u32 %v352, 16
      %v405 = vrot.slane %v403, 7
      %v406 = vshll.u32 %v352, 16
      %v408 = vor.u32 %v405, %v406
      %v409 = vrot.slane %v405, 4
      %v411 = vshrl.u32 %v353, 16
      %v413 = vrot.slane %v411, 7
      %v414 = vshll.u32 %v353, 16
      %v416 = vor.u32 %v413, %v414
      %v417 = vrot.slane %v413, 4
      %vm434 = vcmask 27648
      %vm435 = vmand %vm434, %vm261
      %v436 = vld [vmem:[%s233] sm:$0xf]
      %v437 = vsel %vm435, %v360, %v436
      %438 = vst [vmem:[%s233] sm:$0xf] %v437
      %v439 = vld [vmem:[%s233 + $0x4] sm:$0x1]
      %v440 = vsel %vm236, %v361, %v439
      %441 = vst [vmem:[%s233 + $0x4] sm:$0x1] %v440
      %v442 = vld [vmem:[%s233 + $0x8] sm:$0xf]
      %v443 = vsel %vm435, %v368, %v442
      %444 = vst [vmem:[%s233 + $0x8] sm:$0xf] %v443
      %v445 = vld [vmem:[%s233 + $0xc] sm:$0x1]
      %v446 = vsel %vm236, %v369, %v445
      %447 = vst [vmem:[%s233 + $0xc] sm:$0x1] %v446
      %v448 = vld [vmem:[%s233 + $0x10] sm:$0xf]
      %v449 = vsel %vm435, %v376, %v448
      %450 = vst [vmem:[%s233 + $0x10] sm:$0xf] %v449
      %v451 = vld [vmem:[%s233 + $0x14] sm:$0x1]
      %v452 = vsel %vm236, %v377, %v451
      %453 = vst [vmem:[%s233 + $0x14] sm:$0x1] %v452
      %v454 = vld [vmem:[%s233 + $0x18] sm:$0xf]
      %v455 = vsel %vm435, %v384, %v454
      %456 = vst [vmem:[%s233 + $0x18] sm:$0xf] %v455
      %v457 = vld [vmem:[%s233 + $0x1c] sm:$0x1]
      %v458 = vsel %vm236, %v385, %v457
      %459 = vst [vmem:[%s233 + $0x1c] sm:$0x1] %v458
      %v460 = vld [vmem:[%s233 + $0x20] sm:$0xf]
      %v461 = vsel %vm435, %v392, %v460
      %462 = vst [vmem:[%s233 + $0x20] sm:$0xf] %v461
      %v463 = vld [vmem:[%s233 + $0x24] sm:$0x1]
      %v464 = vsel %vm236, %v393, %v463
      %465 = vst [vmem:[%s233 + $0x24] sm:$0x1] %v464
      %v466 = vld [vmem:[%s233 + $0x28] sm:$0xf]
      %v467 = vsel %vm435, %v400, %v466
      %468 = vst [vmem:[%s233 + $0x28] sm:$0xf] %v467
      %v469 = vld [vmem:[%s233 + $0x2c] sm:$0x1]
      %v470 = vsel %vm236, %v401, %v469
      %471 = vst [vmem:[%s233 + $0x2c] sm:$0x1] %v470
      %v472 = vld [vmem:[%s233 + $0x30] sm:$0xf]
      %v473 = vsel %vm435, %v408, %v472
      %474 = vst [vmem:[%s233 + $0x30] sm:$0xf] %v473
      %v475 = vld [vmem:[%s233 + $0x34] sm:$0x1]
      %v476 = vsel %vm236, %v409, %v475
      %477 = vst [vmem:[%s233 + $0x34] sm:$0x1] %v476
      %v478 = vld [vmem:[%s233 + $0x38] sm:$0xf]
      %v479 = vsel %vm435, %v416, %v478
      %480 = vst [vmem:[%s233 + $0x38] sm:$0xf] %v479
      %v481 = vld [vmem:[%s233 + $0x3c] sm:$0x1]
      %v482 = vsel %vm236, %v417, %v481
      %483 = vst [vmem:[%s233 + $0x3c] sm:$0x1] %v482
      %v484 = vld [vmem:[#allocation2] sm:$0xf]
      %v485 = vld [vmem:[#allocation2 + $0x8] sm:$0xf]
      %v486 = vld [vmem:[#allocation2 + $0x10] sm:$0xf]
      %v487 = vld [vmem:[#allocation2 + $0x18] sm:$0xf]
      %v488 = vld [vmem:[#allocation2 + $0x20] sm:$0xf]
      %v489 = vld [vmem:[#allocation2 + $0x28] sm:$0xf]
      %v490 = vld [vmem:[#allocation2 + $0x30] sm:$0xf]
      %v491 = vld [vmem:[#allocation2 + $0x38] sm:$0xf]
      %v492 = vld [vmem:[%s1] sm:$0x3]
      %v493 = vld [vmem:[#allocation2 + $0x4] sm:$0x1]
      %v494 = vld [vmem:[#allocation2 + $0xc] sm:$0x1]
      %v495 = vld [vmem:[#allocation2 + $0x14] sm:$0x1]
      %v496 = vld [vmem:[#allocation2 + $0x1c] sm:$0x1]
      %v497 = vld [vmem:[#allocation2 + $0x24] sm:$0x1]
      %v498 = vld [vmem:[#allocation2 + $0x2c] sm:$0x1]
      %v499 = vld [vmem:[#allocation2 + $0x34] sm:$0x1]
      %v500 = vld [vmem:[#allocation2 + $0x3c] sm:$0x1]
      %vm501 = vsmask.f32 3328
      %vm502 = vsmask.f32 7440
      %vm503 = vmor %vm501, %vm502
      %v505 = vshrl.u32 %v484, 16
      %v507 = vrot.slane %v505, 4
      %v508 = vshll.u32 %v484, 16
      %v510 = vrot.slane %v508, 5
      %v511 = vor.u32 %v507, %v510
      %v512 = vrot.slane %v511, 4
      %v514 = vshll.u32 %v493, 16
      %v516 = vrot.slane %v514, 5
      %v517 = vsel %vm503, %v512, %v516
      %v519 = vshrl.u32 %v485, 16
      %v521 = vrot.slane %v519, 4
      %v522 = vshll.u32 %v485, 16
      %v524 = vrot.slane %v522, 5
      %v525 = vor.u32 %v521, %v524
      %v526 = vrot.slane %v525, 4
      %v528 = vshll.u32 %v494, 16
      %v530 = vrot.slane %v528, 5
      %v531 = vsel %vm503, %v526, %v530
      %v533 = vshrl.u32 %v486, 16
      %v535 = vrot.slane %v533, 4
      %v536 = vshll.u32 %v486, 16
      %v538 = vrot.slane %v536, 5
      %v539 = vor.u32 %v535, %v538
      %v540 = vrot.slane %v539, 4
      %v542 = vshll.u32 %v495, 16
      %v544 = vrot.slane %v542, 5
      %v545 = vsel %vm503, %v540, %v544
      %v547 = vshrl.u32 %v487, 16
      %v549 = vrot.slane %v547, 4
      %v550 = vshll.u32 %v487, 16
      %v552 = vrot.slane %v550, 5
      %v553 = vor.u32 %v549, %v552
      %v554 = vrot.slane %v553, 4
      %v556 = vshll.u32 %v496, 16
      %v558 = vrot.slane %v556, 5
      %v559 = vsel %vm503, %v554, %v558
      %v561 = vshrl.u32 %v488, 16
      %v563 = vrot.slane %v561, 4
      %v564 = vshll.u32 %v488, 16
      %v566 = vrot.slane %v564, 5
      %v567 = vor.u32 %v563, %v566
      %v568 = vrot.slane %v567, 4
      %v570 = vshll.u32 %v497, 16
      %v572 = vrot.slane %v570, 5
      %v573 = vsel %vm503, %v568, %v572
      %v575 = vshrl.u32 %v489, 16
      %v577 = vrot.slane %v575, 4
      %v578 = vshll.u32 %v489, 16
      %v580 = vrot.slane %v578, 5
      %v581 = vor.u32 %v577, %v580
      %v582 = vrot.slane %v581, 4
      %v584 = vshll.u32 %v498, 16
      %v586 = vrot.slane %v584, 5
      %v587 = vsel %vm503, %v582, %v586
      %v589 = vshrl.u32 %v490, 16
      %v591 = vrot.slane %v589, 4
      %v592 = vshll.u32 %v490, 16
      %v594 = vrot.slane %v592, 5
      %v595 = vor.u32 %v591, %v594
      %v596 = vrot.slane %v595, 4
      %v598 = vshll.u32 %v499, 16
      %v600 = vrot.slane %v598, 5
      %v601 = vsel %vm503, %v596, %v600
      %v603 = vshrl.u32 %v491, 16
      %v605 = vrot.slane %v603, 4
      %v606 = vshll.u32 %v491, 16
      %v608 = vrot.slane %v606, 5
      %v609 = vor.u32 %v605, %v608
      %v610 = vrot.slane %v609, 4
      %v612 = vshll.u32 %v500, 16
      %v614 = vrot.slane %v612, 5
      %v615 = vsel %vm503, %v610, %v614
      %v616 = vld [vmem:[%s1] sm:$0xc]
      %v617 = vunpack.c.l.b16 %v517
      %v618 = vunpack.c.l.b16 %v531
      %v619 = vunpack.c.l.b16 %v545
      %v620 = vunpack.c.l.b16 %v559
      %v621 = vunpack.c.l.b16 %v573
      %v622 = vunpack.c.l.b16 %v587
      %v623 = vunpack.c.l.b16 %v601
      %v624 = vunpack.c.l.b16 %v615
      %v625 = vpack.c.b16 %v618, %v617
      %v626 = vpack.c.b16 %v620, %v619
      %v627 = vpack.c.b16 %v622, %v621
      %v628 = vpack.c.b16 %v624, %v623
      %v630 = vunpack.c.l.b16 %v616
      %v631 = vpack.c.b16 %v630, %v630
      %v632 = vrot.slane %v631, 2
      %vm633 = vcmask 31744
      %v635 = vsel %vm633, %v625, 0
      %v638 = vsel %vm633, %v626, 0
      %v641 = vsel %vm633, %v627, 0
      %v644 = vsel %vm633, %v628, 0
      %vm646 = vcmask 1041408
      %v648 = vsel %vm646, %v632, 0
      %650 = vmatprep.subr.bf16.mxu0 0
      %651 = vmatpush1.bf16.msra.mxu0 %v648
      %652 = vmatprep.subr.bf16.mxu0 0
      %653 = vmatpush1.bf16.msra.mxu0 0
      %654 = vmatprep.subr.bf16.mxu0 0
      %655 = vmatpush1.bf16.msra.mxu0 0
      %656 = vmatprep.subr.bf16.mxu0 0
      %657 = vmatpush1.bf16.msra.mxu0 0
      %658 = vmatprep.subr.bf16.mxu0 0
      %659 = vmatpush1.bf16.msra.mxu0 0
      %660 = vmatprep.subr.bf16.mxu0 0
      %661 = vmatpush1.bf16.msra.mxu0 0
      %662 = vmatprep.subr.bf16.mxu0 0
      %663 = vmatpush1.bf16.msra.mxu0 0
      %664 = vmatprep.subr.bf16.mxu0 0
      %665 = vmatpush1.bf16.msra.mxu0 0
      %666 = vmatprep.subr.bf16.mxu0 0
      %667 = vmatpush1.bf16.msra.mxu0 0
      %668 = vmatprep.subr.bf16.mxu0 0
      %669 = vmatpush1.bf16.msra.mxu0 0
      %670 = vmatprep.subr.bf16.mxu0 0
      %671 = vmatpush1.bf16.msra.mxu0 0
      %672 = vmatprep.subr.bf16.mxu0 0
      %673 = vmatpush1.bf16.msra.mxu0 0
      %674 = vmatprep.subr.bf16.mxu0 0
      %675 = vmatpush1.bf16.msra.mxu0 0
      %676 = vmatprep.subr.bf16.mxu0 0
      %677 = vmatpush1.bf16.msra.mxu0 0
      %678 = vmatprep.subr.bf16.mxu0 0
      %679 = vmatpush1.bf16.msra.mxu0 0
      %680 = vmatprep.subr.bf16.mxu0 0
      %681 = vmatpush1.bf16.msra.mxu0 0
      %682 = vmatprep.mubr.bf16.mxu0 0
      %683 = vmatmul.mubr.bf16.gmra.mrb[0].mxu0 %v635
      %v684 = vpop.f32.mrb[0].mxu0
      %v685 = vadd.f32 0.0, %v684
      %v686 = vpop.f32.mrb[0].mxu0
      %v687 = vpop.f32.mrb[0].mxu0
      %v688 = vadd.f32 0.0, %v687
      %v689 = vpop.f32.mrb[0].mxu0
      %690 = vmatprep.mubr.bf16.mxu0 0
      %691 = vmatmul.mubr.bf16.gmra.mrb[0].mxu0 %v638
      %v692 = vpop.f32.mrb[0].mxu0
      %v693 = vadd.f32 0.0, %v692
      %v694 = vpop.f32.mrb[0].mxu0
      %v695 = vpop.f32.mrb[0].mxu0
      %v696 = vadd.f32 0.0, %v695
      %v697 = vpop.f32.mrb[0].mxu0
      %698 = vmatprep.mubr.bf16.mxu0 0
      %699 = vmatmul.mubr.bf16.gmra.mrb[0].mxu0 %v641
      %v700 = vpop.f32.mrb[0].mxu0
      %v701 = vadd.f32 0.0, %v700
      %v702 = vpop.f32.mrb[0].mxu0
      %v703 = vpop.f32.mrb[0].mxu0
      %v704 = vadd.f32 0.0, %v703
      %v705 = vpop.f32.mrb[0].mxu0
      %706 = vmatprep.mubr.bf16.mxu0 0
      %707 = vmatmul.mubr.bf16.gmra.mrb[0].mxu0 %v644
      %v708 = vpop.f32.mrb[0].mxu0
      %v709 = vadd.f32 0.0, %v708
      %v710 = vpop.f32.mrb[0].mxu0
      %v711 = vpop.f32.mrb[0].mxu0
      %v712 = vadd.f32 0.0, %v711
      %v713 = vpop.f32.mrb[0].mxu0
      %714 = vdwg.mxu0
      %v723 = vunpack.c.l.b16 %v484
      %v724 = vunpack.c.l.b16 %v485
      %v725 = vunpack.c.l.b16 %v486
      %v726 = vunpack.c.l.b16 %v487
      %v727 = vunpack.c.l.b16 %v488
      %v728 = vunpack.c.l.b16 %v489
      %v729 = vunpack.c.l.b16 %v490
      %v730 = vunpack.c.l.b16 %v491
      %v731 = vpack.c.b16 %v724, %v723
      %v732 = vpack.c.b16 %v726, %v725
      %v733 = vpack.c.b16 %v728, %v727
      %v734 = vpack.c.b16 %v730, %v729
      %v736 = vsel %vm633, %v731, 0
      %v739 = vsel %vm633, %v732, 0
      %v742 = vsel %vm633, %v733, 0
      %v745 = vsel %vm633, %v734, 0
      %v748 = vsel %vm646, %v492, 0
      %750 = vmatprep.subr.bf16.mxu0 0
      %751 = vmatpush1.bf16.msra.mxu0 %v748
      %752 = vmatprep.subr.bf16.mxu0 0
      %753 = vmatpush1.bf16.msra.mxu0 0
      %754 = vmatprep.subr.bf16.mxu0 0
      %755 = vmatpush1.bf16.msra.mxu0 0
      %756 = vmatprep.subr.bf16.mxu0 0
      %757 = vmatpush1.bf16.msra.mxu0 0
      %758 = vmatprep.subr.bf16.mxu0 0
      %759 = vmatpush1.bf16.msra.mxu0 0
      %760 = vmatprep.subr.bf16.mxu0 0
      %761 = vmatpush1.bf16.msra.mxu0 0
      %762 = vmatprep.subr.bf16.mxu0 0
      %763 = vmatpush1.bf16.msra.mxu0 0
      %764 = vmatprep.subr.bf16.mxu0 0
      %765 = vmatpush1.bf16.msra.mxu0 0
      %766 = vmatprep.subr.bf16.mxu0 0
      %767 = vmatpush1.bf16.msra.mxu0 0
      %768 = vmatprep.subr.bf16.mxu0 0
      %769 = vmatpush1.bf16.msra.mxu0 0
      %770 = vmatprep.subr.bf16.mxu0 0
      %771 = vmatpush1.bf16.msra.mxu0 0
      %772 = vmatprep.subr.bf16.mxu0 0
      %773 = vmatpush1.bf16.msra.mxu0 0
      %774 = vmatprep.subr.bf16.mxu0 0
      %775 = vmatpush1.bf16.msra.mxu0 0
      %776 = vmatprep.subr.bf16.mxu0 0
      %777 = vmatpush1.bf16.msra.mxu0 0
      %778 = vmatprep.subr.bf16.mxu0 0
      %779 = vmatpush1.bf16.msra.mxu0 0
      %780 = vmatprep.subr.bf16.mxu0 0
      %781 = vmatpush1.bf16.msra.mxu0 0
      %782 = vmatprep.mubr.bf16.mxu0 0
      %783 = vmatmul.mubr.bf16.gmra.mrb[0].mxu0 %v736
      %v784 = vpop.f32.mrb[0].mxu0
      %v785 = vadd.f32 %v685, %v784
      %v786 = vpop.f32.mrb[0].mxu0
      %v787 = vpop.f32.mrb[0].mxu0
      %v788 = vadd.f32 %v688, %v787
      %v789 = vpop.f32.mrb[0].mxu0
      %790 = vmatprep.mubr.bf16.mxu0 0
      %791 = vmatmul.mubr.bf16.gmra.mrb[0].mxu0 %v739
      %v792 = vpop.f32.mrb[0].mxu0
      %v793 = vadd.f32 %v693, %v792
      %v794 = vpop.f32.mrb[0].mxu0
      %v795 = vpop.f32.mrb[0].mxu0
      %v796 = vadd.f32 %v696, %v795
      %v797 = vpop.f32.mrb[0].mxu0
      %798 = vmatprep.mubr.bf16.mxu0 0
      %799 = vmatmul.mubr.bf16.gmra.mrb[0].mxu0 %v742
      %v800 = vpop.f32.mrb[0].mxu0
      %v801 = vadd.f32 %v701, %v800
      %v802 = vpop.f32.mrb[0].mxu0
      %v803 = vpop.f32.mrb[0].mxu0
      %v804 = vadd.f32 %v704, %v803
      %v805 = vpop.f32.mrb[0].mxu0
      %806 = vmatprep.mubr.bf16.mxu0 0
      %807 = vmatmul.mubr.bf16.gmra.mrb[0].mxu0 %v745
      %v808 = vpop.f32.mrb[0].mxu0
      %v809 = vadd.f32 %v709, %v808
      %v810 = vpop.f32.mrb[0].mxu0
      %v811 = vpop.f32.mrb[0].mxu0
      %v812 = vadd.f32 %v712, %v811
      %v813 = vpop.f32.mrb[0].mxu0
      %814 = vdwg.mxu0
      %v815 = vld [vmem:[#allocation2] sm:$0xe]
      %v816 = vld [vmem:[#allocation2 + $0x8] sm:$0xe]
      %v817 = vld [vmem:[#allocation2 + $0x10] sm:$0xe]
      %v818 = vld [vmem:[#allocation2 + $0x18] sm:$0xe]
      %v819 = vld [vmem:[#allocation2 + $0x20] sm:$0xe]
      %v820 = vld [vmem:[#allocation2 + $0x28] sm:$0xe]
      %v821 = vld [vmem:[#allocation2 + $0x30] sm:$0xe]
      %v822 = vld [vmem:[#allocation2 + $0x38] sm:$0xe]
      %vm839 = vcmask 1042432
      %vm840 = vcmask 1046532
      %vm841 = vmor %vm839, %vm840
      %v842 = vrot.slane %v815, 5
      %v843 = vrot.slane %v842, 4
      %v844 = vrot.slane %v493, 5
      %v845 = vsel %vm841, %v843, %v844
      %v846 = vrot.slane %v816, 5
      %v847 = vrot.slane %v846, 4
      %v848 = vrot.slane %v494, 5
      %v849 = vsel %vm841, %v847, %v848
      %v850 = vrot.slane %v817, 5
      %v851 = vrot.slane %v850, 4
      %v852 = vrot.slane %v495, 5
      %v853 = vsel %vm841, %v851, %v852
      %v854 = vrot.slane %v818, 5
      %v855 = vrot.slane %v854, 4
      %v856 = vrot.slane %v496, 5
      %v857 = vsel %vm841, %v855, %v856
      %v858 = vrot.slane %v819, 5
      %v859 = vrot.slane %v858, 4
      %v860 = vrot.slane %v497, 5
      %v861 = vsel %vm841, %v859, %v860
      %v862 = vrot.slane %v820, 5
      %v863 = vrot.slane %v862, 4
      %v864 = vrot.slane %v498, 5
      %v865 = vsel %vm841, %v863, %v864
      %v866 = vrot.slane %v821, 5
      %v867 = vrot.slane %v866, 4
      %v868 = vrot.slane %v499, 5
      %v869 = vsel %vm841, %v867, %v868
      %v870 = vrot.slane %v822, 5
      %v871 = vrot.slane %v870, 4
      %v872 = vrot.slane %v500, 5
      %v873 = vsel %vm841, %v871, %v872
      %v874 = vld [vmem:[%s1 + $0x4] sm:$0x3]
      %v875 = vunpack.c.l.b16 %v845
      %v876 = vunpack.c.l.b16 %v849
      %v877 = vunpack.c.l.b16 %v853
      %v878 = vunpack.c.l.b16 %v857
      %v879 = vunpack.c.l.b16 %v861
      %v880 = vunpack.c.l.b16 %v865
      %v881 = vunpack.c.l.b16 %v869
      %v882 = vunpack.c.l.b16 %v873
      %v883 = vpack.c.b16 %v876, %v875
      %v884 = vpack.c.b16 %v878, %v877
      %v885 = vpack.c.b16 %v880, %v879
      %v886 = vpack.c.b16 %v882, %v881
      %v888 = vsel %vm633, %v883, 0
      %v891 = vsel %vm633, %v884, 0
      %v894 = vsel %vm633, %v885, 0
      %v897 = vsel %vm633, %v886, 0
      %v900 = vsel %vm646, %v874, 0
      %902 = vmatprep.subr.bf16.mxu0 0
      %903 = vmatpush1.bf16.msra.mxu0 %v900
      %904 = vmatprep.subr.bf16.mxu0 0
      %905 = vmatpush1.bf16.msra.mxu0 0
      %906 = vmatprep.subr.bf16.mxu0 0
      %907 = vmatpush1.bf16.msra.mxu0 0
      %908 = vmatprep.subr.bf16.mxu0 0
      %909 = vmatpush1.bf16.msra.mxu0 0
      %910 = vmatprep.subr.bf16.mxu0 0
      %911 = vmatpush1.bf16.msra.mxu0 0
      %912 = vmatprep.subr.bf16.mxu0 0
      %913 = vmatpush1.bf16.msra.mxu0 0
      %914 = vmatprep.subr.bf16.mxu0 0
      %915 = vmatpush1.bf16.msra.mxu0 0
      %916 = vmatprep.subr.bf16.mxu0 0
      %917 = vmatpush1.bf16.msra.mxu0 0
      %918 = vmatprep.subr.bf16.mxu0 0
      %919 = vmatpush1.bf16.msra.mxu0 0
      %920 = vmatprep.subr.bf16.mxu0 0
      %921 = vmatpush1.bf16.msra.mxu0 0
      %922 = vmatprep.subr.bf16.mxu0 0
      %923 = vmatpush1.bf16.msra.mxu0 0
      %924 = vmatprep.subr.bf16.mxu0 0
      %925 = vmatpush1.bf16.msra.mxu0 0
      %926 = vmatprep.subr.bf16.mxu0 0
      %927 = vmatpush1.bf16.msra.mxu0 0
      %928 = vmatprep.subr.bf16.mxu0 0
      %929 = vmatpush1.bf16.msra.mxu0 0
      %930 = vmatprep.subr.bf16.mxu0 0
      %931 = vmatpush1.bf16.msra.mxu0 0
      %932 = vmatprep.subr.bf16.mxu0 0
      %933 = vmatpush1.bf16.msra.mxu0 0
      %934 = vmatprep.mubr.bf16.mxu0 0
      %935 = vmatmul.mubr.bf16.gmra.mrb[0].mxu0 %v888
      %v936 = vpop.f32.mrb[0].mxu0
      %v937 = vadd.f32 0.0, %v936
      %v938 = vpop.f32.mrb[0].mxu0
      %v939 = vpop.f32.mrb[0].mxu0
      %v940 = vadd.f32 0.0, %v939
      %v941 = vpop.f32.mrb[0].mxu0
      %942 = vmatprep.mubr.bf16.mxu0 0
      %943 = vmatmul.mubr.bf16.gmra.mrb[0].mxu0 %v891
      %v944 = vpop.f32.mrb[0].mxu0
      %v945 = vadd.f32 0.0, %v944
      %v946 = vpop.f32.mrb[0].mxu0
      %v947 = vpop.f32.mrb[0].mxu0
      %v948 = vadd.f32 0.0, %v947
      %v949 = vpop.f32.mrb[0].mxu0
      %950 = vmatprep.mubr.bf16.mxu0 0
      %951 = vmatmul.mubr.bf16.gmra.mrb[0].mxu0 %v894
      %v952 = vpop.f32.mrb[0].mxu0
      %v953 = vadd.f32 0.0, %v952
      %v954 = vpop.f32.mrb[0].mxu0
      %v955 = vpop.f32.mrb[0].mxu0
      %v956 = vadd.f32 0.0, %v955
      %v957 = vpop.f32.mrb[0].mxu0
      %958 = vmatprep.mubr.bf16.mxu0 0
      %959 = vmatmul.mubr.bf16.gmra.mrb[0].mxu0 %v897
      %v960 = vpop.f32.mrb[0].mxu0
      %v961 = vadd.f32 0.0, %v960
      %v962 = vpop.f32.mrb[0].mxu0
      %v963 = vpop.f32.mrb[0].mxu0
      %v964 = vadd.f32 0.0, %v963
      %v965 = vpop.f32.mrb[0].mxu0
      %966 = vdwg.mxu0
      %v967 = vadd.f32 %v785, %v937
      %v968 = vadd.f32 %v788, %v940
      %v969 = vadd.f32 %v793, %v945
      %v970 = vadd.f32 %v796, %v948
      %v971 = vadd.f32 %v801, %v953
      %v972 = vadd.f32 %v804, %v956
      %v973 = vadd.f32 %v809, %v961
      %v974 = vadd.f32 %v812, %v964
      %v975 = vld [vmem:[%s233] sm:$0xf]
      %v976 = vld [vmem:[%s233 + $0x8] sm:$0xf]
      %v977 = vld [vmem:[%s233 + $0x10] sm:$0xf]
      %v978 = vld [vmem:[%s233 + $0x18] sm:$0xf]
      %v979 = vld [vmem:[%s233 + $0x20] sm:$0xf]
      %v980 = vld [vmem:[%s233 + $0x28] sm:$0xf]
      %v981 = vld [vmem:[%s233 + $0x30] sm:$0xf]
      %v982 = vld [vmem:[%s233 + $0x38] sm:$0xf]
      %v983 = vld [vmem:[%s1 + $0x4] sm:$0xc]
      %v992 = vunpack.c.l.b16 %v975
      %v993 = vunpack.c.l.b16 %v976
      %v994 = vunpack.c.l.b16 %v977
      %v995 = vunpack.c.l.b16 %v978
      %v996 = vunpack.c.l.b16 %v979
      %v997 = vunpack.c.l.b16 %v980
      %v998 = vunpack.c.l.b16 %v981
      %v999 = vunpack.c.l.b16 %v982
      %v1000 = vpack.c.b16 %v993, %v992
      %v1001 = vpack.c.b16 %v995, %v994
      %v1002 = vpack.c.b16 %v997, %v996
      %v1003 = vpack.c.b16 %v999, %v998
      %v1005 = vunpack.c.l.b16 %v983
      %v1006 = vpack.c.b16 %v1005, %v1005
      %v1007 = vrot.slane %v1006, 2
      %v1009 = vsel %vm633, %v1000, 0
      %v1012 = vsel %vm633, %v1001, 0
      %v1015 = vsel %vm633, %v1002, 0
      %v1018 = vsel %vm633, %v1003, 0
      %v1021 = vsel %vm646, %v1007, 0
      %1023 = vmatprep.subr.bf16.mxu0 0
      %1024 = vmatpush1.bf16.msra.mxu0 %v1021
      %1025 = vmatprep.subr.bf16.mxu0 0
      %1026 = vmatpush1.bf16.msra.mxu0 0
      %1027 = vmatprep.subr.bf16.mxu0 0
      %1028 = vmatpush1.bf16.msra.mxu0 0
      %1029 = vmatprep.subr.bf16.mxu0 0
      %1030 = vmatpush1.bf16.msra.mxu0 0
      %1031 = vmatprep.subr.bf16.mxu0 0
      %1032 = vmatpush1.bf16.msra.mxu0 0
      %1033 = vmatprep.subr.bf16.mxu0 0
      %1034 = vmatpush1.bf16.msra.mxu0 0
      %1035 = vmatprep.subr.bf16.mxu0 0
      %1036 = vmatpush1.bf16.msra.mxu0 0
      %1037 = vmatprep.subr.bf16.mxu0 0
      %1038 = vmatpush1.bf16.msra.mxu0 0
      %1039 = vmatprep.subr.bf16.mxu0 0
      %1040 = vmatpush1.bf16.msra.mxu0 0
      %1041 = vmatprep.subr.bf16.mxu0 0
      %1042 = vmatpush1.bf16.msra.mxu0 0
      %1043 = vmatprep.subr.bf16.mxu0 0
      %1044 = vmatpush1.bf16.msra.mxu0 0
      %1045 = vmatprep.subr.bf16.mxu0 0
      %1046 = vmatpush1.bf16.msra.mxu0 0
      %1047 = vmatprep.subr.bf16.mxu0 0
      %1048 = vmatpush1.bf16.msra.mxu0 0
      %1049 = vmatprep.subr.bf16.mxu0 0
      %1050 = vmatpush1.bf16.msra.mxu0 0
      %1051 = vmatprep.subr.bf16.mxu0 0
      %1052 = vmatpush1.bf16.msra.mxu0 0
      %1053 = vmatprep.subr.bf16.mxu0 0
      %1054 = vmatpush1.bf16.msra.mxu0 0
      %1055 = vmatprep.mubr.bf16.mxu0 0
      %1056 = vmatmul.mubr.bf16.gmra.mrb[0].mxu0 %v1009
      %v1057 = vpop.f32.mrb[0].mxu0
      %v1058 = vadd.f32 0.0, %v1057
      %v1059 = vpop.f32.mrb[0].mxu0
      %v1060 = vpop.f32.mrb[0].mxu0
      %v1061 = vadd.f32 0.0, %v1060
      %v1062 = vpop.f32.mrb[0].mxu0
      %1063 = vmatprep.mubr.bf16.mxu0 0
      %1064 = vmatmul.mubr.bf16.gmra.mrb[0].mxu0 %v1012
      %v1065 = vpop.f32.mrb[0].mxu0
      %v1066 = vadd.f32 0.0, %v1065
      %v1067 = vpop.f32.mrb[0].mxu0
      %v1068 = vpop.f32.mrb[0].mxu0
      %v1069 = vadd.f32 0.0, %v1068
      %v1070 = vpop.f32.mrb[0].mxu0
      %1071 = vmatprep.mubr.bf16.mxu0 0
      %1072 = vmatmul.mubr.bf16.gmra.mrb[0].mxu0 %v1015
      %v1073 = vpop.f32.mrb[0].mxu0
      %v1074 = vadd.f32 0.0, %v1073
      %v1075 = vpop.f32.mrb[0].mxu0
      %v1076 = vpop.f32.mrb[0].mxu0
      %v1077 = vadd.f32 0.0, %v1076
      %v1078 = vpop.f32.mrb[0].mxu0
      %1079 = vmatprep.mubr.bf16.mxu0 0
      %1080 = vmatmul.mubr.bf16.gmra.mrb[0].mxu0 %v1018
      %v1081 = vpop.f32.mrb[0].mxu0
      %v1082 = vadd.f32 0.0, %v1081
      %v1083 = vpop.f32.mrb[0].mxu0
      %v1084 = vpop.f32.mrb[0].mxu0
      %v1085 = vadd.f32 0.0, %v1084
      %v1086 = vpop.f32.mrb[0].mxu0
      %1087 = vdwg.mxu0
      %v1088 = vadd.f32 %v967, %v1058
      %v1089 = vadd.f32 %v968, %v1061
      %v1090 = vadd.f32 %v969, %v1066
      %v1091 = vadd.f32 %v970, %v1069
      %v1092 = vadd.f32 %v971, %v1074
      %v1093 = vadd.f32 %v972, %v1077
      %v1094 = vadd.f32 %v973, %v1082
      %v1095 = vadd.f32 %v974, %v1085
      %v1096 = vld [vmem:[%s233] sm:$0xf]
      %v1097 = vld [vmem:[%s233 + $0x4] sm:$0x1]
      %v1098 = vld [vmem:[%s233 + $0x8] sm:$0xf]
      %v1099 = vld [vmem:[%s233 + $0xc] sm:$0x1]
      %v1100 = vld [vmem:[%s233 + $0x10] sm:$0xf]
      %v1101 = vld [vmem:[%s233 + $0x14] sm:$0x1]
      %v1102 = vld [vmem:[%s233 + $0x18] sm:$0xf]
      %v1103 = vld [vmem:[%s233 + $0x1c] sm:$0x1]
      %v1104 = vld [vmem:[%s233 + $0x20] sm:$0xf]
      %v1105 = vld [vmem:[%s233 + $0x24] sm:$0x1]
      %v1106 = vld [vmem:[%s233 + $0x28] sm:$0xf]
      %v1107 = vld [vmem:[%s233 + $0x2c] sm:$0x1]
      %v1108 = vld [vmem:[%s233 + $0x30] sm:$0xf]
      %v1109 = vld [vmem:[%s233 + $0x34] sm:$0x1]
      %v1110 = vld [vmem:[%s233 + $0x38] sm:$0xf]
      %v1111 = vld [vmem:[%s233 + $0x3c] sm:$0x1]
      %v1113 = vshrl.u32 %v1096, 16
      %v1115 = vrot.slane %v1113, 4
      %v1116 = vshll.u32 %v1096, 16
      %v1118 = vrot.slane %v1116, 5
      %v1119 = vor.u32 %v1115, %v1118
      %v1120 = vrot.slane %v1119, 4
      %v1122 = vshll.u32 %v1097, 16
      %v1124 = vrot.slane %v1122, 5
      %v1125 = vsel %vm503, %v1120, %v1124
      %v1127 = vshrl.u32 %v1098, 16
      %v1129 = vrot.slane %v1127, 4
      %v1130 = vshll.u32 %v1098, 16
      %v1132 = vrot.slane %v1130, 5
      %v1133 = vor.u32 %v1129, %v1132
      %v1134 = vrot.slane %v1133, 4
      %v1136 = vshll.u32 %v1099, 16
      %v1138 = vrot.slane %v1136, 5
      %v1139 = vsel %vm503, %v1134, %v1138
      %v1141 = vshrl.u32 %v1100, 16
      %v1143 = vrot.slane %v1141, 4
      %v1144 = vshll.u32 %v1100, 16
      %v1146 = vrot.slane %v1144, 5
      %v1147 = vor.u32 %v1143, %v1146
      %v1148 = vrot.slane %v1147, 4
      %v1150 = vshll.u32 %v1101, 16
      %v1152 = vrot.slane %v1150, 5
      %v1153 = vsel %vm503, %v1148, %v1152
      %v1155 = vshrl.u32 %v1102, 16
      %v1157 = vrot.slane %v1155, 4
      %v1158 = vshll.u32 %v1102, 16
      %v1160 = vrot.slane %v1158, 5
      %v1161 = vor.u32 %v1157, %v1160
      %v1162 = vrot.slane %v1161, 4
      %v1164 = vshll.u32 %v1103, 16
      %v1166 = vrot.slane %v1164, 5
      %v1167 = vsel %vm503, %v1162, %v1166
      %v1169 = vshrl.u32 %v1104, 16
      %v1171 = vrot.slane %v1169, 4
      %v1172 = vshll.u32 %v1104, 16
      %v1174 = vrot.slane %v1172, 5
      %v1175 = vor.u32 %v1171, %v1174
      %v1176 = vrot.slane %v1175, 4
      %v1178 = vshll.u32 %v1105, 16
      %v1180 = vrot.slane %v1178, 5
      %v1181 = vsel %vm503, %v1176, %v1180
      %v1183 = vshrl.u32 %v1106, 16
      %v1185 = vrot.slane %v1183, 4
      %v1186 = vshll.u32 %v1106, 16
      %v1188 = vrot.slane %v1186, 5
      %v1189 = vor.u32 %v1185, %v1188
      %v1190 = vrot.slane %v1189, 4
      %v1192 = vshll.u32 %v1107, 16
      %v1194 = vrot.slane %v1192, 5
      %v1195 = vsel %vm503, %v1190, %v1194
      %v1197 = vshrl.u32 %v1108, 16
      %v1199 = vrot.slane %v1197, 4
      %v1200 = vshll.u32 %v1108, 16
      %v1202 = vrot.slane %v1200, 5
      %v1203 = vor.u32 %v1199, %v1202
      %v1204 = vrot.slane %v1203, 4
      %v1206 = vshll.u32 %v1109, 16
      %v1208 = vrot.slane %v1206, 5
      %v1209 = vsel %vm503, %v1204, %v1208
      %v1211 = vshrl.u32 %v1110, 16
      %v1213 = vrot.slane %v1211, 4
      %v1214 = vshll.u32 %v1110, 16
      %v1216 = vrot.slane %v1214, 5
      %v1217 = vor.u32 %v1213, %v1216
      %v1218 = vrot.slane %v1217, 4
      %v1220 = vshll.u32 %v1111, 16
      %v1222 = vrot.slane %v1220, 5
      %v1223 = vsel %vm503, %v1218, %v1222
      %v1224 = vld [vmem:[%s1 + $0x8] sm:$0x3]
      %v1225 = vunpack.c.l.b16 %v1125
      %v1226 = vunpack.c.l.b16 %v1139
      %v1227 = vunpack.c.l.b16 %v1153
      %v1228 = vunpack.c.l.b16 %v1167
      %v1229 = vunpack.c.l.b16 %v1181
      %v1230 = vunpack.c.l.b16 %v1195
      %v1231 = vunpack.c.l.b16 %v1209
      %v1232 = vunpack.c.l.b16 %v1223
      %v1233 = vpack.c.b16 %v1226, %v1225
      %v1234 = vpack.c.b16 %v1228, %v1227
      %v1235 = vpack.c.b16 %v1230, %v1229
      %v1236 = vpack.c.b16 %v1232, %v1231
      %v1238 = vsel %vm633, %v1233, 0
      %v1241 = vsel %vm633, %v1234, 0
      %v1244 = vsel %vm633, %v1235, 0
      %v1247 = vsel %vm633, %v1236, 0
      %v1250 = vsel %vm646, %v1224, 0
      %1252 = vmatprep.subr.bf16.mxu0 0
      %1253 = vmatpush1.bf16.msra.mxu0 %v1250
      %1254 = vmatprep.subr.bf16.mxu0 0
      %1255 = vmatpush1.bf16.msra.mxu0 0
      %1256 = vmatprep.subr.bf16.mxu0 0
      %1257 = vmatpush1.bf16.msra.mxu0 0
      %1258 = vmatprep.subr.bf16.mxu0 0
      %1259 = vmatpush1.bf16.msra.mxu0 0
      %1260 = vmatprep.subr.bf16.mxu0 0
      %1261 = vmatpush1.bf16.msra.mxu0 0
      %1262 = vmatprep.subr.bf16.mxu0 0
      %1263 = vmatpush1.bf16.msra.mxu0 0
      %1264 = vmatprep.subr.bf16.mxu0 0
      %1265 = vmatpush1.bf16.msra.mxu0 0
      %1266 = vmatprep.subr.bf16.mxu0 0
      %1267 = vmatpush1.bf16.msra.mxu0 0
      %1268 = vmatprep.subr.bf16.mxu0 0
      %1269 = vmatpush1.bf16.msra.mxu0 0
      %1270 = vmatprep.subr.bf16.mxu0 0
      %1271 = vmatpush1.bf16.msra.mxu0 0
      %1272 = vmatprep.subr.bf16.mxu0 0
      %1273 = vmatpush1.bf16.msra.mxu0 0
      %1274 = vmatprep.subr.bf16.mxu0 0
      %1275 = vmatpush1.bf16.msra.mxu0 0
      %1276 = vmatprep.subr.bf16.mxu0 0
      %1277 = vmatpush1.bf16.msra.mxu0 0
      %1278 = vmatprep.subr.bf16.mxu0 0
      %1279 = vmatpush1.bf16.msra.mxu0 0
      %1280 = vmatprep.subr.bf16.mxu0 0
      %1281 = vmatpush1.bf16.msra.mxu0 0
      %1282 = vmatprep.subr.bf16.mxu0 0
      %1283 = vmatpush1.bf16.msra.mxu0 0
      %1284 = vmatprep.mubr.bf16.mxu0 0
      %1285 = vmatmul.mubr.bf16.gmra.mrb[0].mxu0 %v1238
      %v1286 = vpop.f32.mrb[0].mxu0
      %v1287 = vadd.f32 0.0, %v1286
      %v1288 = vpop.f32.mrb[0].mxu0
      %v1289 = vpop.f32.mrb[0].mxu0
      %v1290 = vadd.f32 0.0, %v1289
      %v1291 = vpop.f32.mrb[0].mxu0
      %1292 = vmatprep.mubr.bf16.mxu0 0
      %1293 = vmatmul.mubr.bf16.gmra.mrb[0].mxu0 %v1241
      %v1294 = vpop.f32.mrb[0].mxu0
      %v1295 = vadd.f32 0.0, %v1294
      %v1296 = vpop.f32.mrb[0].mxu0
      %v1297 = vpop.f32.mrb[0].mxu0
      %v1298 = vadd.f32 0.0, %v1297
      %v1299 = vpop.f32.mrb[0].mxu0
      %1300 = vmatprep.mubr.bf16.mxu0 0
      %1301 = vmatmul.mubr.bf16.gmra.mrb[0].mxu0 %v1244
      %v1302 = vpop.f32.mrb[0].mxu0
      %v1303 = vadd.f32 0.0, %v1302
      %v1304 = vpop.f32.mrb[0].mxu0
      %v1305 = vpop.f32.mrb[0].mxu0
      %v1306 = vadd.f32 0.0, %v1305
      %v1307 = vpop.f32.mrb[0].mxu0
      %1308 = vmatprep.mubr.bf16.mxu0 0
      %1309 = vmatmul.mubr.bf16.gmra.mrb[0].mxu0 %v1247
      %v1310 = vpop.f32.mrb[0].mxu0
      %v1311 = vadd.f32 0.0, %v1310
      %v1312 = vpop.f32.mrb[0].mxu0
      %v1313 = vpop.f32.mrb[0].mxu0
      %v1314 = vadd.f32 0.0, %v1313
      %v1315 = vpop.f32.mrb[0].mxu0
      %1316 = vdwg.mxu0
      %v1317 = vadd.f32 %v1088, %v1287
      %v1318 = vadd.f32 %v1089, %v1290
      %v1319 = vadd.f32 %v1090, %v1295
      %v1320 = vadd.f32 %v1091, %v1298
      %v1321 = vadd.f32 %v1092, %v1303
      %v1322 = vadd.f32 %v1093, %v1306
      %v1323 = vadd.f32 %v1094, %v1311
      %v1324 = vadd.f32 %v1095, %v1314
      %v1325 = vld [vmem:[%s233] sm:$0xe]
      %v1326 = vld [vmem:[%s233 + $0x8] sm:$0xe]
      %v1327 = vld [vmem:[%s233 + $0x10] sm:$0xe]
      %v1328 = vld [vmem:[%s233 + $0x18] sm:$0xe]
      %v1329 = vld [vmem:[%s233 + $0x20] sm:$0xe]
      %v1330 = vld [vmem:[%s233 + $0x28] sm:$0xe]
      %v1331 = vld [vmem:[%s233 + $0x30] sm:$0xe]
      %v1332 = vld [vmem:[%s233 + $0x38] sm:$0xe]
      %v1349 = vrot.slane %v1325, 5
      %v1350 = vrot.slane %v1349, 4
      %v1351 = vrot.slane %v1097, 5
      %v1352 = vsel %vm841, %v1350, %v1351
      %v1353 = vrot.slane %v1326, 5
      %v1354 = vrot.slane %v1353, 4
      %v1355 = vrot.slane %v1099, 5
      %v1356 = vsel %vm841, %v1354, %v1355
      %v1357 = vrot.slane %v1327, 5
      %v1358 = vrot.slane %v1357, 4
      %v1359 = vrot.slane %v1101, 5
      %v1360 = vsel %vm841, %v1358, %v1359
      %v1361 = vrot.slane %v1328, 5
      %v1362 = vrot.slane %v1361, 4
      %v1363 = vrot.slane %v1103, 5
      %v1364 = vsel %vm841, %v1362, %v1363
      %v1365 = vrot.slane %v1329, 5
      %v1366 = vrot.slane %v1365, 4
      %v1367 = vrot.slane %v1105, 5
      %v1368 = vsel %vm841, %v1366, %v1367
      %v1369 = vrot.slane %v1330, 5
      %v1370 = vrot.slane %v1369, 4
      %v1371 = vrot.slane %v1107, 5
      %v1372 = vsel %vm841, %v1370, %v1371
      %v1373 = vrot.slane %v1331, 5
      %v1374 = vrot.slane %v1373, 4
      %v1375 = vrot.slane %v1109, 5
      %v1376 = vsel %vm841, %v1374, %v1375
      %v1377 = vrot.slane %v1332, 5
      %v1378 = vrot.slane %v1377, 4
      %v1379 = vrot.slane %v1111, 5
      %v1380 = vsel %vm841, %v1378, %v1379
      %v1381 = vld [vmem:[%s1 + $0x8] sm:$0xc]
      %v1382 = vunpack.c.l.b16 %v1352
      %v1383 = vunpack.c.l.b16 %v1356
      %v1384 = vunpack.c.l.b16 %v1360
      %v1385 = vunpack.c.l.b16 %v1364
      %v1386 = vunpack.c.l.b16 %v1368
      %v1387 = vunpack.c.l.b16 %v1372
      %v1388 = vunpack.c.l.b16 %v1376
      %v1389 = vunpack.c.l.b16 %v1380
      %v1390 = vpack.c.b16 %v1383, %v1382
      %v1391 = vpack.c.b16 %v1385, %v1384
      %v1392 = vpack.c.b16 %v1387, %v1386
      %v1393 = vpack.c.b16 %v1389, %v1388
      %v1395 = vunpack.c.l.b16 %v1381
      %v1396 = vpack.c.b16 %v1395, %v1395
      %v1397 = vrot.slane %v1396, 2
      %v1399 = vsel %vm633, %v1390, 0
      %v1402 = vsel %vm633, %v1391, 0
      %v1405 = vsel %vm633, %v1392, 0
      %v1408 = vsel %vm633, %v1393, 0
      %v1411 = vsel %vm646, %v1397, 0
      %1413 = vmatprep.subr.bf16.mxu0 0
      %1414 = vmatpush1.bf16.msra.mxu0 %v1411
      %1415 = vmatprep.subr.bf16.mxu0 0
      %1416 = vmatpush1.bf16.msra.mxu0 0
      %1417 = vmatprep.subr.bf16.mxu0 0
      %1418 = vmatpush1.bf16.msra.mxu0 0
      %1419 = vmatprep.subr.bf16.mxu0 0
      %1420 = vmatpush1.bf16.msra.mxu0 0
      %1421 = vmatprep.subr.bf16.mxu0 0
      %1422 = vmatpush1.bf16.msra.mxu0 0
      %1423 = vmatprep.subr.bf16.mxu0 0
      %1424 = vmatpush1.bf16.msra.mxu0 0
      %1425 = vmatprep.subr.bf16.mxu0 0
      %1426 = vmatpush1.bf16.msra.mxu0 0
      %1427 = vmatprep.subr.bf16.mxu0 0
      %1428 = vmatpush1.bf16.msra.mxu0 0
      %1429 = vmatprep.subr.bf16.mxu0 0
      %1430 = vmatpush1.bf16.msra.mxu0 0
      %1431 = vmatprep.subr.bf16.mxu0 0
      %1432 = vmatpush1.bf16.msra.mxu0 0
      %1433 = vmatprep.subr.bf16.mxu0 0
      %1434 = vmatpush1.bf16.msra.mxu0 0
      %1435 = vmatprep.subr.bf16.mxu0 0
      %1436 = vmatpush1.bf16.msra.mxu0 0
      %1437 = vmatprep.subr.bf16.mxu0 0
      %1438 = vmatpush1.bf16.msra.mxu0 0
      %1439 = vmatprep.subr.bf16.mxu0 0
      %1440 = vmatpush1.bf16.msra.mxu0 0
      %1441 = vmatprep.subr.bf16.mxu0 0
      %1442 = vmatpush1.bf16.msra.mxu0 0
      %1443 = vmatprep.subr.bf16.mxu0 0
      %1444 = vmatpush1.bf16.msra.mxu0 0
      %1445 = vmatprep.mubr.bf16.mxu0 0
      %1446 = vmatmul.mubr.bf16.gmra.mrb[0].mxu0 %v1399
      %v1447 = vpop.f32.mrb[0].mxu0
      %v1448 = vadd.f32 0.0, %v1447
      %v1449 = vpop.f32.mrb[0].mxu0
      %v1450 = vpop.f32.mrb[0].mxu0
      %v1451 = vadd.f32 0.0, %v1450
      %v1452 = vpop.f32.mrb[0].mxu0
      %1453 = vmatprep.mubr.bf16.mxu0 0
      %1454 = vmatmul.mubr.bf16.gmra.mrb[0].mxu0 %v1402
      %v1455 = vpop.f32.mrb[0].mxu0
      %v1456 = vadd.f32 0.0, %v1455
      %v1457 = vpop.f32.mrb[0].mxu0
      %v1458 = vpop.f32.mrb[0].mxu0
      %v1459 = vadd.f32 0.0, %v1458
      %v1460 = vpop.f32.mrb[0].mxu0
      %1461 = vmatprep.mubr.bf16.mxu0 0
      %1462 = vmatmul.mubr.bf16.gmra.mrb[0].mxu0 %v1405
      %v1463 = vpop.f32.mrb[0].mxu0
      %v1464 = vadd.f32 0.0, %v1463
      %v1465 = vpop.f32.mrb[0].mxu0
      %v1466 = vpop.f32.mrb[0].mxu0
      %v1467 = vadd.f32 0.0, %v1466
      %v1468 = vpop.f32.mrb[0].mxu0
      %1469 = vmatprep.mubr.bf16.mxu0 0
      %1470 = vmatmul.mubr.bf16.gmra.mrb[0].mxu0 %v1408
      %v1471 = vpop.f32.mrb[0].mxu0
      %v1472 = vadd.f32 0.0, %v1471
      %v1473 = vpop.f32.mrb[0].mxu0
      %v1474 = vpop.f32.mrb[0].mxu0
      %v1475 = vadd.f32 0.0, %v1474
      %v1476 = vpop.f32.mrb[0].mxu0
      %1477 = vdwg.mxu0
      %v1478 = vadd.f32 %v1317, %v1448
      %v1479 = vadd.f32 %v1318, %v1451
      %v1480 = vadd.f32 %v1319, %v1456
      %v1481 = vadd.f32 %v1320, %v1459
      %v1482 = vadd.f32 %v1321, %v1464
      %v1483 = vadd.f32 %v1322, %v1467
      %v1484 = vadd.f32 %v1323, %v1472
      %v1485 = vadd.f32 %v1324, %v1475
      %s1486 = scalar_lea.vmem [#allocation2], 16
      %v1487 = vld [vmem:[%s1486] sm:$0xf]
      %v1488 = vld [vmem:[%s1486 + $0x8] sm:$0xf]
      %v1489 = vld [vmem:[%s1486 + $0x10] sm:$0xf]
      %v1490 = vld [vmem:[%s1486 + $0x18] sm:$0xf]
      %v1491 = vld [vmem:[%s1486 + $0x20] sm:$0xf]
      %v1492 = vld [vmem:[%s1486 + $0x28] sm:$0xf]
      %v1493 = vld [vmem:[%s1486 + $0x30] sm:$0xf]
      %v1494 = vld [vmem:[%s1486 + $0x38] sm:$0xf]
      %v1495 = vld [vmem:[%s1 + $0xc] sm:$0x3]
      %v1504 = vunpack.c.l.b16 %v1487
      %v1505 = vunpack.c.l.b16 %v1488
      %v1506 = vunpack.c.l.b16 %v1489
      %v1507 = vunpack.c.l.b16 %v1490
      %v1508 = vunpack.c.l.b16 %v1491
      %v1509 = vunpack.c.l.b16 %v1492
      %v1510 = vunpack.c.l.b16 %v1493
      %v1511 = vunpack.c.l.b16 %v1494
      %v1512 = vpack.c.b16 %v1505, %v1504
      %v1513 = vpack.c.b16 %v1507, %v1506
      %v1514 = vpack.c.b16 %v1509, %v1508
      %v1515 = vpack.c.b16 %v1511, %v1510
      %v1517 = vsel %vm633, %v1512, 0
      %v1520 = vsel %vm633, %v1513, 0
      %v1523 = vsel %vm633, %v1514, 0
      %v1526 = vsel %vm633, %v1515, 0
      %v1529 = vsel %vm646, %v1495, 0
      %1531 = vmatprep.subr.bf16.mxu0 0
      %1532 = vmatpush1.bf16.msra.mxu0 %v1529
      %1533 = vmatprep.subr.bf16.mxu0 0
      %1534 = vmatpush1.bf16.msra.mxu0 0
      %1535 = vmatprep.subr.bf16.mxu0 0
      %1536 = vmatpush1.bf16.msra.mxu0 0
      %1537 = vmatprep.subr.bf16.mxu0 0
      %1538 = vmatpush1.bf16.msra.mxu0 0
      %1539 = vmatprep.subr.bf16.mxu0 0
      %1540 = vmatpush1.bf16.msra.mxu0 0
      %1541 = vmatprep.subr.bf16.mxu0 0
      %1542 = vmatpush1.bf16.msra.mxu0 0
      %1543 = vmatprep.subr.bf16.mxu0 0
      %1544 = vmatpush1.bf16.msra.mxu0 0
      %1545 = vmatprep.subr.bf16.mxu0 0
      %1546 = vmatpush1.bf16.msra.mxu0 0
      %1547 = vmatprep.subr.bf16.mxu0 0
      %1548 = vmatpush1.bf16.msra.mxu0 0
      %1549 = vmatprep.subr.bf16.mxu0 0
      %1550 = vmatpush1.bf16.msra.mxu0 0
      %1551 = vmatprep.subr.bf16.mxu0 0
      %1552 = vmatpush1.bf16.msra.mxu0 0
      %1553 = vmatprep.subr.bf16.mxu0 0
      %1554 = vmatpush1.bf16.msra.mxu0 0
      %1555 = vmatprep.subr.bf16.mxu0 0
      %1556 = vmatpush1.bf16.msra.mxu0 0
      %1557 = vmatprep.subr.bf16.mxu0 0
      %1558 = vmatpush1.bf16.msra.mxu0 0
      %1559 = vmatprep.subr.bf16.mxu0 0
      %1560 = vmatpush1.bf16.msra.mxu0 0
      %1561 = vmatprep.subr.bf16.mxu0 0
      %1562 = vmatpush1.bf16.msra.mxu0 0
      %1563 = vmatprep.mubr.bf16.mxu0 0
      %1564 = vmatmul.mubr.bf16.gmra.mrb[0].mxu0 %v1517
      %v1565 = vpop.f32.mrb[0].mxu0
      %v1566 = vadd.f32 0.0, %v1565
      %v1567 = vpop.f32.mrb[0].mxu0
      %v1568 = vpop.f32.mrb[0].mxu0
      %v1569 = vadd.f32 0.0, %v1568
      %v1570 = vpop.f32.mrb[0].mxu0
      %1571 = vmatprep.mubr.bf16.mxu0 0
      %1572 = vmatmul.mubr.bf16.gmra.mrb[0].mxu0 %v1520
      %v1573 = vpop.f32.mrb[0].mxu0
      %v1574 = vadd.f32 0.0, %v1573
      %v1575 = vpop.f32.mrb[0].mxu0
      %v1576 = vpop.f32.mrb[0].mxu0
      %v1577 = vadd.f32 0.0, %v1576
      %v1578 = vpop.f32.mrb[0].mxu0
      %1579 = vmatprep.mubr.bf16.mxu0 0
      %1580 = vmatmul.mubr.bf16.gmra.mrb[0].mxu0 %v1523
      %v1581 = vpop.f32.mrb[0].mxu0
      %v1582 = vadd.f32 0.0, %v1581
      %v1583 = vpop.f32.mrb[0].mxu0
      %v1584 = vpop.f32.mrb[0].mxu0
      %v1585 = vadd.f32 0.0, %v1584
      %v1586 = vpop.f32.mrb[0].mxu0
      %1587 = vmatprep.mubr.bf16.mxu0 0
      %1588 = vmatmul.mubr.bf16.gmra.mrb[0].mxu0 %v1526
      %v1589 = vpop.f32.mrb[0].mxu0
      %v1590 = vadd.f32 0.0, %v1589
      %v1591 = vpop.f32.mrb[0].mxu0
      %v1592 = vpop.f32.mrb[0].mxu0
      %v1593 = vadd.f32 0.0, %v1592
      %v1594 = vpop.f32.mrb[0].mxu0
      %1595 = vdwg.mxu0
      %v1596 = vadd.f32 %v1478, %v1566
      %v1597 = vadd.f32 %v1479, %v1569
      %v1598 = vadd.f32 %v1480, %v1574
      %v1599 = vadd.f32 %v1481, %v1577
      %v1600 = vadd.f32 %v1482, %v1582
      %v1601 = vadd.f32 %v1483, %v1585
      %v1602 = vadd.f32 %v1484, %v1590
      %v1603 = vadd.f32 %v1485, %v1593
      %v1604 = vld [vmem:[%s1486] sm:$0xf]
      %v1605 = vld [vmem:[%s1486 + $0x4] sm:$0x1]
      %v1606 = vld [vmem:[%s1486 + $0x8] sm:$0xf]
      %v1607 = vld [vmem:[%s1486 + $0xc] sm:$0x1]
      %v1608 = vld [vmem:[%s1486 + $0x10] sm:$0xf]
      %v1609 = vld [vmem:[%s1486 + $0x14] sm:$0x1]
      %v1610 = vld [vmem:[%s1486 + $0x18] sm:$0xf]
      %v1611 = vld [vmem:[%s1486 + $0x1c] sm:$0x1]
      %v1612 = vld [vmem:[%s1486 + $0x20] sm:$0xf]
      %v1613 = vld [vmem:[%s1486 + $0x24] sm:$0x1]
      %v1614 = vld [vmem:[%s1486 + $0x28] sm:$0xf]
      %v1615 = vld [vmem:[%s1486 + $0x2c] sm:$0x1]
      %v1616 = vld [vmem:[%s1486 + $0x30] sm:$0xf]
      %v1617 = vld [vmem:[%s1486 + $0x34] sm:$0x1]
      %v1618 = vld [vmem:[%s1486 + $0x38] sm:$0xf]
      %v1619 = vld [vmem:[%s1486 + $0x3c] sm:$0x1]
      %v1621 = vshrl.u32 %v1604, 16
      %v1623 = vrot.slane %v1621, 4
      %v1624 = vshll.u32 %v1604, 16
      %v1626 = vrot.slane %v1624, 5
      %v1627 = vor.u32 %v1623, %v1626
      %v1628 = vrot.slane %v1627, 4
      %v1630 = vshll.u32 %v1605, 16
      %v1632 = vrot.slane %v1630, 5
      %v1633 = vsel %vm503, %v1628, %v1632
      %v1635 = vshrl.u32 %v1606, 16
      %v1637 = vrot.slane %v1635, 4
      %v1638 = vshll.u32 %v1606, 16
      %v1640 = vrot.slane %v1638, 5
      %v1641 = vor.u32 %v1637, %v1640
      %v1642 = vrot.slane %v1641, 4
      %v1644 = vshll.u32 %v1607, 16
      %v1646 = vrot.slane %v1644, 5
      %v1647 = vsel %vm503, %v1642, %v1646
      %v1649 = vshrl.u32 %v1608, 16
      %v1651 = vrot.slane %v1649, 4
      %v1652 = vshll.u32 %v1608, 16
      %v1654 = vrot.slane %v1652, 5
      %v1655 = vor.u32 %v1651, %v1654
      %v1656 = vrot.slane %v1655, 4
      %v1658 = vshll.u32 %v1609, 16
      %v1660 = vrot.slane %v1658, 5
      %v1661 = vsel %vm503, %v1656, %v1660
      %v1663 = vshrl.u32 %v1610, 16
      %v1665 = vrot.slane %v1663, 4
      %v1666 = vshll.u32 %v1610, 16
      %v1668 = vrot.slane %v1666, 5
      %v1669 = vor.u32 %v1665, %v1668
      %v1670 = vrot.slane %v1669, 4
      %v1672 = vshll.u32 %v1611, 16
      %v1674 = vrot.slane %v1672, 5
      %v1675 = vsel %vm503, %v1670, %v1674
      %v1677 = vshrl.u32 %v1612, 16
      %v1679 = vrot.slane %v1677, 4
      %v1680 = vshll.u32 %v1612, 16
      %v1682 = vrot.slane %v1680, 5
      %v1683 = vor.u32 %v1679, %v1682
      %v1684 = vrot.slane %v1683, 4
      %v1686 = vshll.u32 %v1613, 16
      %v1688 = vrot.slane %v1686, 5
      %v1689 = vsel %vm503, %v1684, %v1688
      %v1691 = vshrl.u32 %v1614, 16
      %v1693 = vrot.slane %v1691, 4
      %v1694 = vshll.u32 %v1614, 16
      %v1696 = vrot.slane %v1694, 5
      %v1697 = vor.u32 %v1693, %v1696
      %v1698 = vrot.slane %v1697, 4
      %v1700 = vshll.u32 %v1615, 16
      %v1702 = vrot.slane %v1700, 5
      %v1703 = vsel %vm503, %v1698, %v1702
      %v1705 = vshrl.u32 %v1616, 16
      %v1707 = vrot.slane %v1705, 4
      %v1708 = vshll.u32 %v1616, 16
      %v1710 = vrot.slane %v1708, 5
      %v1711 = vor.u32 %v1707, %v1710
      %v1712 = vrot.slane %v1711, 4
      %v1714 = vshll.u32 %v1617, 16
      %v1716 = vrot.slane %v1714, 5
      %v1717 = vsel %vm503, %v1712, %v1716
      %v1719 = vshrl.u32 %v1618, 16
      %v1721 = vrot.slane %v1719, 4
      %v1722 = vshll.u32 %v1618, 16
      %v1724 = vrot.slane %v1722, 5
      %v1725 = vor.u32 %v1721, %v1724
      %v1726 = vrot.slane %v1725, 4
      %v1728 = vshll.u32 %v1619, 16
      %v1730 = vrot.slane %v1728, 5
      %v1731 = vsel %vm503, %v1726, %v1730
      %v1732 = vld [vmem:[%s1 + $0xc] sm:$0xc]
      %v1733 = vunpack.c.l.b16 %v1633
      %v1734 = vunpack.c.l.b16 %v1647
      %v1735 = vunpack.c.l.b16 %v1661
      %v1736 = vunpack.c.l.b16 %v1675
      %v1737 = vunpack.c.l.b16 %v1689
      %v1738 = vunpack.c.l.b16 %v1703
      %v1739 = vunpack.c.l.b16 %v1717
      %v1740 = vunpack.c.l.b16 %v1731
      %v1741 = vpack.c.b16 %v1734, %v1733
      %v1742 = vpack.c.b16 %v1736, %v1735
      %v1743 = vpack.c.b16 %v1738, %v1737
      %v1744 = vpack.c.b16 %v1740, %v1739
      %v1746 = vunpack.c.l.b16 %v1732
      %v1747 = vpack.c.b16 %v1746, %v1746
      %v1748 = vrot.slane %v1747, 2
      %v1750 = vsel %vm633, %v1741, 0
      %v1753 = vsel %vm633, %v1742, 0
      %v1756 = vsel %vm633, %v1743, 0
      %v1759 = vsel %vm633, %v1744, 0
      %v1762 = vsel %vm646, %v1748, 0
      %1764 = vmatprep.subr.bf16.mxu0 0
      %1765 = vmatpush1.bf16.msra.mxu0 %v1762
      %1766 = vmatprep.subr.bf16.mxu0 0
      %1767 = vmatpush1.bf16.msra.mxu0 0
      %1768 = vmatprep.subr.bf16.mxu0 0
      %1769 = vmatpush1.bf16.msra.mxu0 0
      %1770 = vmatprep.subr.bf16.mxu0 0
      %1771 = vmatpush1.bf16.msra.mxu0 0
      %1772 = vmatprep.subr.bf16.mxu0 0
      %1773 = vmatpush1.bf16.msra.mxu0 0
      %1774 = vmatprep.subr.bf16.mxu0 0
      %1775 = vmatpush1.bf16.msra.mxu0 0
      %1776 = vmatprep.subr.bf16.mxu0 0
      %1777 = vmatpush1.bf16.msra.mxu0 0
      %1778 = vmatprep.subr.bf16.mxu0 0
      %1779 = vmatpush1.bf16.msra.mxu0 0
      %1780 = vmatprep.subr.bf16.mxu0 0
      %1781 = vmatpush1.bf16.msra.mxu0 0
      %1782 = vmatprep.subr.bf16.mxu0 0
      %1783 = vmatpush1.bf16.msra.mxu0 0
      %1784 = vmatprep.subr.bf16.mxu0 0
      %1785 = vmatpush1.bf16.msra.mxu0 0
      %1786 = vmatprep.subr.bf16.mxu0 0
      %1787 = vmatpush1.bf16.msra.mxu0 0
      %1788 = vmatprep.subr.bf16.mxu0 0
      %1789 = vmatpush1.bf16.msra.mxu0 0
      %1790 = vmatprep.subr.bf16.mxu0 0
      %1791 = vmatpush1.bf16.msra.mxu0 0
      %1792 = vmatprep.subr.bf16.mxu0 0
      %1793 = vmatpush1.bf16.msra.mxu0 0
      %1794 = vmatprep.subr.bf16.mxu0 0
      %1795 = vmatpush1.bf16.msra.mxu0 0
      %1796 = vmatprep.mubr.bf16.mxu0 0
      %1797 = vmatmul.mubr.bf16.gmra.mrb[0].mxu0 %v1750
      %v1798 = vpop.f32.mrb[0].mxu0
      %v1799 = vadd.f32 0.0, %v1798
      %v1800 = vpop.f32.mrb[0].mxu0
      %v1801 = vpop.f32.mrb[0].mxu0
      %v1802 = vadd.f32 0.0, %v1801
      %v1803 = vpop.f32.mrb[0].mxu0
      %1804 = vmatprep.mubr.bf16.mxu0 0
      %1805 = vmatmul.mubr.bf16.gmra.mrb[0].mxu0 %v1753
      %v1806 = vpop.f32.mrb[0].mxu0
      %v1807 = vadd.f32 0.0, %v1806
      %v1808 = vpop.f32.mrb[0].mxu0
      %v1809 = vpop.f32.mrb[0].mxu0
      %v1810 = vadd.f32 0.0, %v1809
      %v1811 = vpop.f32.mrb[0].mxu0
      %1812 = vmatprep.mubr.bf16.mxu0 0
      %1813 = vmatmul.mubr.bf16.gmra.mrb[0].mxu0 %v1756
      %v1814 = vpop.f32.mrb[0].mxu0
      %v1815 = vadd.f32 0.0, %v1814
      %v1816 = vpop.f32.mrb[0].mxu0
      %v1817 = vpop.f32.mrb[0].mxu0
      %v1818 = vadd.f32 0.0, %v1817
      %v1819 = vpop.f32.mrb[0].mxu0
      %1820 = vmatprep.mubr.bf16.mxu0 0
      %1821 = vmatmul.mubr.bf16.gmra.mrb[0].mxu0 %v1759
      %v1822 = vpop.f32.mrb[0].mxu0
      %v1823 = vadd.f32 0.0, %v1822
      %v1824 = vpop.f32.mrb[0].mxu0
      %v1825 = vpop.f32.mrb[0].mxu0
      %v1826 = vadd.f32 0.0, %v1825
      %v1827 = vpop.f32.mrb[0].mxu0
      %1828 = vdwg.mxu0
      %v1829 = vadd.f32 %v1596, %v1799
      %v1830 = vadd.f32 %v1597, %v1802
      %v1831 = vadd.f32 %v1598, %v1807
      %v1832 = vadd.f32 %v1599, %v1810
      %v1833 = vadd.f32 %v1600, %v1815
      %v1834 = vadd.f32 %v1601, %v1818
      %v1835 = vadd.f32 %v1602, %v1823
      %v1836 = vadd.f32 %v1603, %v1826
      %v1837 = vld [vmem:[%s1486] sm:$0xe]
      %v1838 = vld [vmem:[%s1486 + $0x8] sm:$0xe]
      %v1839 = vld [vmem:[%s1486 + $0x10] sm:$0xe]
      %v1840 = vld [vmem:[%s1486 + $0x18] sm:$0xe]
      %v1841 = vld [vmem:[%s1486 + $0x20] sm:$0xe]
      %v1842 = vld [vmem:[%s1486 + $0x28] sm:$0xe]
      %v1843 = vld [vmem:[%s1486 + $0x30] sm:$0xe]
      %v1844 = vld [vmem:[%s1486 + $0x38] sm:$0xe]
      %v1861 = vrot.slane %v1837, 5
      %v1862 = vrot.slane %v1861, 4
      %v1863 = vrot.slane %v1605, 5
      %v1864 = vsel %vm841, %v1862, %v1863
      %v1865 = vrot.slane %v1838, 5
      %v1866 = vrot.slane %v1865, 4
      %v1867 = vrot.slane %v1607, 5
      %v1868 = vsel %vm841, %v1866, %v1867
      %v1869 = vrot.slane %v1839, 5
      %v1870 = vrot.slane %v1869, 4
      %v1871 = vrot.slane %v1609, 5
      %v1872 = vsel %vm841, %v1870, %v1871
      %v1873 = vrot.slane %v1840, 5
      %v1874 = vrot.slane %v1873, 4
      %v1875 = vrot.slane %v1611, 5
      %v1876 = vsel %vm841, %v1874, %v1875
      %v1877 = vrot.slane %v1841, 5
      %v1878 = vrot.slane %v1877, 4
      %v1879 = vrot.slane %v1613, 5
      %v1880 = vsel %vm841, %v1878, %v1879
      %v1881 = vrot.slane %v1842, 5
      %v1882 = vrot.slane %v1881, 4
      %v1883 = vrot.slane %v1615, 5
      %v1884 = vsel %vm841, %v1882, %v1883
      %v1885 = vrot.slane %v1843, 5
      %v1886 = vrot.slane %v1885, 4
      %v1887 = vrot.slane %v1617, 5
      %v1888 = vsel %vm841, %v1886, %v1887
      %v1889 = vrot.slane %v1844, 5
      %v1890 = vrot.slane %v1889, 4
      %v1891 = vrot.slane %v1619, 5
      %v1892 = vsel %vm841, %v1890, %v1891
      %v1893 = vld [vmem:[%s1 + $0x10] sm:$0x3]
      %v1894 = vunpack.c.l.b16 %v1864
      %v1895 = vunpack.c.l.b16 %v1868
      %v1896 = vunpack.c.l.b16 %v1872
      %v1897 = vunpack.c.l.b16 %v1876
      %v1898 = vunpack.c.l.b16 %v1880
      %v1899 = vunpack.c.l.b16 %v1884
      %v1900 = vunpack.c.l.b16 %v1888
      %v1901 = vunpack.c.l.b16 %v1892
      %v1902 = vpack.c.b16 %v1895, %v1894
      %v1903 = vpack.c.b16 %v1897, %v1896
      %v1904 = vpack.c.b16 %v1899, %v1898
      %v1905 = vpack.c.b16 %v1901, %v1900
      %v1907 = vsel %vm633, %v1902, 0
      %v1910 = vsel %vm633, %v1903, 0
      %v1913 = vsel %vm633, %v1904, 0
      %v1916 = vsel %vm633, %v1905, 0
      %v1919 = vsel %vm646, %v1893, 0
      %1921 = vmatprep.subr.bf16.mxu0 0
      %1922 = vmatpush1.bf16.msra.mxu0 %v1919
      %1923 = vmatprep.subr.bf16.mxu0 0
      %1924 = vmatpush1.bf16.msra.mxu0 0
      %1925 = vmatprep.subr.bf16.mxu0 0
      %1926 = vmatpush1.bf16.msra.mxu0 0
      %1927 = vmatprep.subr.bf16.mxu0 0
      %1928 = vmatpush1.bf16.msra.mxu0 0
      %1929 = vmatprep.subr.bf16.mxu0 0
      %1930 = vmatpush1.bf16.msra.mxu0 0
      %1931 = vmatprep.subr.bf16.mxu0 0
      %1932 = vmatpush1.bf16.msra.mxu0 0
      %1933 = vmatprep.subr.bf16.mxu0 0
      %1934 = vmatpush1.bf16.msra.mxu0 0
      %1935 = vmatprep.subr.bf16.mxu0 0
      %1936 = vmatpush1.bf16.msra.mxu0 0
      %1937 = vmatprep.subr.bf16.mxu0 0
      %1938 = vmatpush1.bf16.msra.mxu0 0
      %1939 = vmatprep.subr.bf16.mxu0 0
      %1940 = vmatpush1.bf16.msra.mxu0 0
      %1941 = vmatprep.subr.bf16.mxu0 0
      %1942 = vmatpush1.bf16.msra.mxu0 0
      %1943 = vmatprep.subr.bf16.mxu0 0
      %1944 = vmatpush1.bf16.msra.mxu0 0
      %1945 = vmatprep.subr.bf16.mxu0 0
      %1946 = vmatpush1.bf16.msra.mxu0 0
      %1947 = vmatprep.subr.bf16.mxu0 0
      %1948 = vmatpush1.bf16.msra.mxu0 0
      %1949 = vmatprep.subr.bf16.mxu0 0
      %1950 = vmatpush1.bf16.msra.mxu0 0
      %1951 = vmatprep.subr.bf16.mxu0 0
      %1952 = vmatpush1.bf16.msra.mxu0 0
      %1953 = vmatprep.mubr.bf16.mxu0 0
      %1954 = vmatmul.mubr.bf16.gmra.mrb[0].mxu0 %v1907
      %v1955 = vpop.f32.mrb[0].mxu0
      %v1956 = vadd.f32 0.0, %v1955
      %v1957 = vpop.f32.mrb[0].mxu0
      %v1958 = vpop.f32.mrb[0].mxu0
      %v1959 = vadd.f32 0.0, %v1958
      %v1960 = vpop.f32.mrb[0].mxu0
      %1961 = vmatprep.mubr.bf16.mxu0 0
      %1962 = vmatmul.mubr.bf16.gmra.mrb[0].mxu0 %v1910
      %v1963 = vpop.f32.mrb[0].mxu0
      %v1964 = vadd.f32 0.0, %v1963
      %v1965 = vpop.f32.mrb[0].mxu0
      %v1966 = vpop.f32.mrb[0].mxu0
      %v1967 = vadd.f32 0.0, %v1966
      %v1968 = vpop.f32.mrb[0].mxu0
      %1969 = vmatprep.mubr.bf16.mxu0 0
      %1970 = vmatmul.mubr.bf16.gmra.mrb[0].mxu0 %v1913
      %v1971 = vpop.f32.mrb[0].mxu0
      %v1972 = vadd.f32 0.0, %v1971
      %v1973 = vpop.f32.mrb[0].mxu0
      %v1974 = vpop.f32.mrb[0].mxu0
      %v1975 = vadd.f32 0.0, %v1974
      %v1976 = vpop.f32.mrb[0].mxu0
      %1977 = vmatprep.mubr.bf16.mxu0 0
      %1978 = vmatmul.mubr.bf16.gmra.mrb[0].mxu0 %v1916
      %v1979 = vpop.f32.mrb[0].mxu0
      %v1980 = vadd.f32 0.0, %v1979
      %v1981 = vpop.f32.mrb[0].mxu0
      %v1982 = vpop.f32.mrb[0].mxu0
      %v1983 = vadd.f32 0.0, %v1982
      %v1984 = vpop.f32.mrb[0].mxu0
      %1985 = vdwg.mxu0
      %v1986 = vadd.f32 %v1829, %v1956
      %v1987 = vadd.f32 %v1830, %v1959
      %v1988 = vadd.f32 %v1831, %v1964
      %v1989 = vadd.f32 %v1832, %v1967
      %v1990 = vadd.f32 %v1833, %v1972
      %v1991 = vadd.f32 %v1834, %v1975
      %v1992 = vadd.f32 %v1835, %v1980
      %v1993 = vadd.f32 %v1836, %v1983
      %v1994 = vld [vmem:[%s2] sm:$0x1]
      %v1996 = vlaneseq
      %v1997 = vshrl.u32 %v1996, 7
      %v1998 = vsub.s32 0, %v1997
      %v1999 = vrot.slane %v1994, %v1998
      %v2001 = vadd.f32 %v1986, %v1999
      %v2002 = vadd.f32 %v1987, %v1999
      %v2003 = vadd.f32 %v1988, %v1999
      %v2004 = vadd.f32 %v1989, %v1999
      %v2005 = vadd.f32 %v1990, %v1999
      %v2006 = vadd.f32 %v1991, %v1999
      %v2007 = vadd.f32 %v1992, %v1999
      %v2008 = vadd.f32 %v1993, %v1999
      %v2009 = vmax.f32 %v2001, 0.0
      %v2010 = vmax.f32 %v2002, 0.0
      %v2011 = vmax.f32 %v2003, 0.0
      %v2012 = vmax.f32 %v2004, 0.0
      %v2013 = vmax.f32 %v2005, 0.0
      %v2014 = vmax.f32 %v2006, 0.0
      %v2015 = vmax.f32 %v2007, 0.0
      %v2016 = vmax.f32 %v2008, 0.0
      %v2017 = vpack.c.bf16 %v2009, %v2009
      %v2018 = vpack.c.bf16 %v2010, %v2010
      %v2019 = vpack.c.bf16 %v2011, %v2011
      %v2020 = vpack.c.bf16 %v2012, %v2012
      %v2021 = vpack.c.bf16 %v2013, %v2013
      %v2022 = vpack.c.bf16 %v2014, %v2014
      %v2023 = vpack.c.bf16 %v2015, %v2015
      %v2024 = vpack.c.bf16 %v2016, %v2016
      %v2033 = vunpack.c.l.b16 %v2017
      %v2034 = vunpack.c.l.b16 %v2018
      %v2035 = vunpack.c.l.b16 %v2019
      %v2036 = vunpack.c.l.b16 %v2020
      %v2037 = vunpack.c.l.b16 %v2021
      %v2038 = vunpack.c.l.b16 %v2022
      %v2039 = vunpack.c.l.b16 %v2023
      %v2040 = vunpack.c.l.b16 %v2024
      %v2041 = vpack.c.b16 %v2033, %v2033
      %v2042 = vpack.c.b16 %v2034, %v2034
      %v2043 = vpack.c.b16 %v2035, %v2035
      %v2044 = vpack.c.b16 %v2036, %v2036
      %v2045 = vpack.c.b16 %v2037, %v2037
      %v2046 = vpack.c.b16 %v2038, %v2038
      %v2047 = vpack.c.b16 %v2039, %v2039
      %v2048 = vpack.c.b16 %v2040, %v2040
      %v2050 = vshrl.u32 %v2041, 16
      %v2052 = vrot.slane %v2050, 7
      %v2053 = vshll.u32 %v2041, 16
      %v2055 = vor.u32 %v2052, %v2053
      %v2056 = vrot.slane %v2052, 4
      %v2058 = vshrl.u32 %v2042, 16
      %v2060 = vrot.slane %v2058, 7
      %v2061 = vshll.u32 %v2042, 16
      %v2063 = vor.u32 %v2060, %v2061
      %v2064 = vrot.slane %v2060, 4
      %v2066 = vshrl.u32 %v2043, 16
      %v2068 = vrot.slane %v2066, 7
      %v2069 = vshll.u32 %v2043, 16
      %v2071 = vor.u32 %v2068, %v2069
      %v2072 = vrot.slane %v2068, 4
      %v2074 = vshrl.u32 %v2044, 16
      %v2076 = vrot.slane %v2074, 7
      %v2077 = vshll.u32 %v2044, 16
      %v2079 = vor.u32 %v2076, %v2077
      %v2080 = vrot.slane %v2076, 4
      %v2082 = vshrl.u32 %v2045, 16
      %v2084 = vrot.slane %v2082, 7
      %v2085 = vshll.u32 %v2045, 16
      %v2087 = vor.u32 %v2084, %v2085
      %v2088 = vrot.slane %v2084, 4
      %v2090 = vshrl.u32 %v2046, 16
      %v2092 = vrot.slane %v2090, 7
      %v2093 = vshll.u32 %v2046, 16
      %v2095 = vor.u32 %v2092, %v2093
      %v2096 = vrot.slane %v2092, 4
      %v2098 = vshrl.u32 %v2047, 16
      %v2100 = vrot.slane %v2098, 7
      %v2101 = vshll.u32 %v2047, 16
      %v2103 = vor.u32 %v2100, %v2101
      %v2104 = vrot.slane %v2100, 4
      %v2106 = vshrl.u32 %v2048, 16
      %v2108 = vrot.slane %v2106, 7
      %v2109 = vshll.u32 %v2048, 16
      %v2111 = vor.u32 %v2108, %v2109
      %v2112 = vrot.slane %v2108, 4
      %vm2129 = vcmask 257024
      %vm2130 = vmand %vm2129, %vm261
      %v2131 = vld [vmem:[%s294] sm:$0xf]
      %v2132 = vsel %vm2130, %v2055, %v2131
      %2133 = vst [vmem:[%s294] sm:$0xf] %v2132
      %v2134 = vld [vmem:[%s294 + $0x4] sm:$0x1]
      %v2135 = vsel %vm296, %v2056, %v2134
      %2136 = vst [vmem:[%s294 + $0x4] sm:$0x1] %v2135
      %v2137 = vld [vmem:[%s294 + $0x8] sm:$0xf]
      %v2138 = vsel %vm2130, %v2063, %v2137
      %2139 = vst [vmem:[%s294 + $0x8] sm:$0xf] %v2138
      %v2140 = vld [vmem:[%s294 + $0xc] sm:$0x1]
      %v2141 = vsel %vm296, %v2064, %v2140
      %2142 = vst [vmem:[%s294 + $0xc] sm:$0x1] %v2141
      %v2143 = vld [vmem:[%s294 + $0x10] sm:$0xf]
      %v2144 = vsel %vm2130, %v2071, %v2143
      %2145 = vst [vmem:[%s294 + $0x10] sm:$0xf] %v2144
      %v2146 = vld [vmem:[%s294 + $0x14] sm:$0x1]
      %v2147 = vsel %vm296, %v2072, %v2146
      %2148 = vst [vmem:[%s294 + $0x14] sm:$0x1] %v2147
      %v2149 = vld [vmem:[%s294 + $0x18] sm:$0xf]
      %v2150 = vsel %vm2130, %v2079, %v2149
      %2151 = vst [vmem:[%s294 + $0x18] sm:$0xf] %v2150
      %v2152 = vld [vmem:[%s294 + $0x1c] sm:$0x1]
      %v2153 = vsel %vm296, %v2080, %v2152
      %2154 = vst [vmem:[%s294 + $0x1c] sm:$0x1] %v2153
      %v2155 = vld [vmem:[%s294 + $0x20] sm:$0xf]
      %v2156 = vsel %vm2130, %v2087, %v2155
      %2157 = vst [vmem:[%s294 + $0x20] sm:$0xf] %v2156
      %v2158 = vld [vmem:[%s294 + $0x24] sm:$0x1]
      %v2159 = vsel %vm296, %v2088, %v2158
      %2160 = vst [vmem:[%s294 + $0x24] sm:$0x1] %v2159
      %v2161 = vld [vmem:[%s294 + $0x28] sm:$0xf]
      %v2162 = vsel %vm2130, %v2095, %v2161
      %2163 = vst [vmem:[%s294 + $0x28] sm:$0xf] %v2162
      %v2164 = vld [vmem:[%s294 + $0x2c] sm:$0x1]
      %v2165 = vsel %vm296, %v2096, %v2164
      %2166 = vst [vmem:[%s294 + $0x2c] sm:$0x1] %v2165
      %v2167 = vld [vmem:[%s294 + $0x30] sm:$0xf]
      %v2168 = vsel %vm2130, %v2103, %v2167
      %2169 = vst [vmem:[%s294 + $0x30] sm:$0xf] %v2168
      %v2170 = vld [vmem:[%s294 + $0x34] sm:$0x1]
      %v2171 = vsel %vm296, %v2104, %v2170
      %2172 = vst [vmem:[%s294 + $0x34] sm:$0x1] %v2171
      %v2173 = vld [vmem:[%s294 + $0x38] sm:$0xf]
      %v2174 = vsel %vm2130, %v2111, %v2173
      %2175 = vst [vmem:[%s294 + $0x38] sm:$0xf] %v2174
      %v2176 = vld [vmem:[%s294 + $0x3c] sm:$0x1]
      %v2177 = vsel %vm296, %v2112, %v2176
      %2178 = vst [vmem:[%s294 + $0x3c] sm:$0x1] %v2177
      %v2179 = vld [vmem:[#allocation3] sm:$0xf]
      %v2180 = vld [vmem:[#allocation3 + $0x8] sm:$0xf]
      %v2181 = vld [vmem:[#allocation3 + $0x10] sm:$0xf]
      %v2182 = vld [vmem:[#allocation3 + $0x18] sm:$0xf]
      %v2183 = vld [vmem:[#allocation3 + $0x20] sm:$0xf]
      %v2184 = vld [vmem:[#allocation3 + $0x28] sm:$0xf]
      %v2185 = vld [vmem:[#allocation3 + $0x30] sm:$0xf]
      %v2186 = vld [vmem:[#allocation3 + $0x38] sm:$0xf]
      %v2187 = vld [vmem:[%s3] sm:$0xf]
      %v2188 = vld [vmem:[%s3 + $0x4] sm:$0xf]
      %v2189 = vld [vmem:[%s3 + $0x8] sm:$0xf]
      %v2190 = vld [vmem:[%s3 + $0xc] sm:$0xf]
      %v2191 = vld [vmem:[#allocation3 + $0x4] sm:$0x1]
      %v2192 = vld [vmem:[#allocation3 + $0xc] sm:$0x1]
      %v2193 = vld [vmem:[#allocation3 + $0x14] sm:$0x1]
      %v2194 = vld [vmem:[#allocation3 + $0x1c] sm:$0x1]
      %v2195 = vld [vmem:[#allocation3 + $0x24] sm:$0x1]
      %v2196 = vld [vmem:[#allocation3 + $0x2c] sm:$0x1]
      %v2197 = vld [vmem:[#allocation3 + $0x34] sm:$0x1]
      %v2198 = vld [vmem:[#allocation3 + $0x3c] sm:$0x1]
      %v2200 = vshrl.u32 %v2179, 16
      %v2202 = vrot.slane %v2200, 4
      %v2203 = vshll.u32 %v2179, 16
      %v2205 = vrot.slane %v2203, 5
      %v2206 = vor.u32 %v2202, %v2205
      %v2207 = vrot.slane %v2206, 4
      %v2209 = vshll.u32 %v2191, 16
      %v2211 = vrot.slane %v2209, 5
      %v2212 = vsel %vm503, %v2207, %v2211
      %v2214 = vshrl.u32 %v2180, 16
      %v2216 = vrot.slane %v2214, 4
      %v2217 = vshll.u32 %v2180, 16
      %v2219 = vrot.slane %v2217, 5
      %v2220 = vor.u32 %v2216, %v2219
      %v2221 = vrot.slane %v2220, 4
      %v2223 = vshll.u32 %v2192, 16
      %v2225 = vrot.slane %v2223, 5
      %v2226 = vsel %vm503, %v2221, %v2225
      %v2228 = vshrl.u32 %v2181, 16
      %v2230 = vrot.slane %v2228, 4
      %v2231 = vshll.u32 %v2181, 16
      %v2233 = vrot.slane %v2231, 5
      %v2234 = vor.u32 %v2230, %v2233
      %v2235 = vrot.slane %v2234, 4
      %v2237 = vshll.u32 %v2193, 16
      %v2239 = vrot.slane %v2237, 5
      %v2240 = vsel %vm503, %v2235, %v2239
      %v2242 = vshrl.u32 %v2182, 16
      %v2244 = vrot.slane %v2242, 4
      %v2245 = vshll.u32 %v2182, 16
      %v2247 = vrot.slane %v2245, 5
      %v2248 = vor.u32 %v2244, %v2247
      %v2249 = vrot.slane %v2248, 4
      %v2251 = vshll.u32 %v2194, 16
      %v2253 = vrot.slane %v2251, 5
      %v2254 = vsel %vm503, %v2249, %v2253
      %v2256 = vshrl.u32 %v2183, 16
      %v2258 = vrot.slane %v2256, 4
      %v2259 = vshll.u32 %v2183, 16
      %v2261 = vrot.slane %v2259, 5
      %v2262 = vor.u32 %v2258, %v2261
      %v2263 = vrot.slane %v2262, 4
      %v2265 = vshll.u32 %v2195, 16
      %v2267 = vrot.slane %v2265, 5
      %v2268 = vsel %vm503, %v2263, %v2267
      %v2270 = vshrl.u32 %v2184, 16
      %v2272 = vrot.slane %v2270, 4
      %v2273 = vshll.u32 %v2184, 16
      %v2275 = vrot.slane %v2273, 5
      %v2276 = vor.u32 %v2272, %v2275
      %v2277 = vrot.slane %v2276, 4
      %v2279 = vshll.u32 %v2196, 16
      %v2281 = vrot.slane %v2279, 5
      %v2282 = vsel %vm503, %v2277, %v2281
      %v2284 = vshrl.u32 %v2185, 16
      %v2286 = vrot.slane %v2284, 4
      %v2287 = vshll.u32 %v2185, 16
      %v2289 = vrot.slane %v2287, 5
      %v2290 = vor.u32 %v2286, %v2289
      %v2291 = vrot.slane %v2290, 4
      %v2293 = vshll.u32 %v2197, 16
      %v2295 = vrot.slane %v2293, 5
      %v2296 = vsel %vm503, %v2291, %v2295
      %v2298 = vshrl.u32 %v2186, 16
      %v2300 = vrot.slane %v2298, 4
      %v2301 = vshll.u32 %v2186, 16
      %v2303 = vrot.slane %v2301, 5
      %v2304 = vor.u32 %v2300, %v2303
      %v2305 = vrot.slane %v2304, 4
      %v2307 = vshll.u32 %v2198, 16
      %v2309 = vrot.slane %v2307, 5
      %v2310 = vsel %vm503, %v2305, %v2309
      %v2311 = vld [vmem:[%s3 + $0x10] sm:$0xf]
      %v2312 = vld [vmem:[%s3 + $0x14] sm:$0xf]
      %v2313 = vld [vmem:[%s3 + $0x18] sm:$0xf]
      %v2314 = vld [vmem:[%s3 + $0x1c] sm:$0xf]
      %v2315 = vunpack.c.l.b16 %v2212
      %v2316 = vunpack.c.l.b16 %v2226
      %v2317 = vunpack.c.l.b16 %v2240
      %v2318 = vunpack.c.l.b16 %v2254
      %v2319 = vunpack.c.l.b16 %v2268
      %v2320 = vunpack.c.l.b16 %v2282
      %v2321 = vunpack.c.l.b16 %v2296
      %v2322 = vunpack.c.l.b16 %v2310
      %v2323 = vpack.c.b16 %v2316, %v2315
      %v2324 = vpack.c.b16 %v2318, %v2317
      %v2325 = vpack.c.b16 %v2320, %v2319
      %v2326 = vpack.c.b16 %v2322, %v2321
      %v2331 = vunpack.c.l.b16 %v2311
      %v2332 = vunpack.c.l.b16 %v2312
      %v2333 = vunpack.c.l.b16 %v2313
      %v2334 = vunpack.c.l.b16 %v2314
      %v2335 = vpack.c.b16 %v2332, %v2331
      %v2336 = vpack.c.b16 %v2334, %v2333
      %vm2339 = vcmask 261120
      %v2341 = vsel %vm2339, %v2323, 0
      %v2344 = vsel %vm2339, %v2324, 0
      %v2347 = vsel %vm2339, %v2325, 0
      %v2350 = vsel %vm2339, %v2326, 0
      %2352 = vmatprep.subr.bf16.mxu0 0
      %2353 = vmatpush1.bf16.msra.mxu0 %v2335
      %2354 = vmatprep.subr.bf16.mxu0 0
      %2355 = vmatpush1.bf16.msra.mxu0 %v2336
      %2356 = vmatprep.subr.bf16.mxu0 0
      %2357 = vmatpush1.bf16.msra.mxu0 0
      %2358 = vmatprep.subr.bf16.mxu0 0
      %2359 = vmatpush1.bf16.msra.mxu0 0
      %2360 = vmatprep.subr.bf16.mxu0 0
      %2361 = vmatpush1.bf16.msra.mxu0 0
      %2362 = vmatprep.subr.bf16.mxu0 0
      %2363 = vmatpush1.bf16.msra.mxu0 0
      %2364 = vmatprep.subr.bf16.mxu0 0
      %2365 = vmatpush1.bf16.msra.mxu0 0
      %2366 = vmatprep.subr.bf16.mxu0 0
      %2367 = vmatpush1.bf16.msra.mxu0 0
      %2368 = vmatprep.subr.bf16.mxu0 0
      %2369 = vmatpush1.bf16.msra.mxu0 0
      %2370 = vmatprep.subr.bf16.mxu0 0
      %2371 = vmatpush1.bf16.msra.mxu0 0
      %2372 = vmatprep.subr.bf16.mxu0 0
      %2373 = vmatpush1.bf16.msra.mxu0 0
      %2374 = vmatprep.subr.bf16.mxu0 0
      %2375 = vmatpush1.bf16.msra.mxu0 0
      %2376 = vmatprep.subr.bf16.mxu0 0
      %2377 = vmatpush1.bf16.msra.mxu0 0
      %2378 = vmatprep.subr.bf16.mxu0 0
      %2379 = vmatpush1.bf16.msra.mxu0 0
      %2380 = vmatprep.subr.bf16.mxu0 0
      %2381 = vmatpush1.bf16.msra.mxu0 0
      %2382 = vmatprep.subr.bf16.mxu0 0
      %2383 = vmatpush1.bf16.msra.mxu0 0
      %2384 = vmatprep.mubr.bf16.mxu0 0
      %2385 = vmatmul.mubr.bf16.gmra.mrb[0].mxu0 %v2341
      %v2386 = vpop.f32.mrb[0].mxu0
      %v2387 = vadd.f32 0.0, %v2386
      %v2388 = vpop.f32.mrb[0].mxu0
      %v2389 = vpop.f32.mrb[0].mxu0
      %v2390 = vadd.f32 0.0, %v2389
      %v2391 = vpop.f32.mrb[0].mxu0
      %2392 = vmatprep.mubr.bf16.mxu0 0
      %2393 = vmatmul.mubr.bf16.gmra.mrb[0].mxu0 %v2344
      %v2394 = vpop.f32.mrb[0].mxu0
      %v2395 = vadd.f32 0.0, %v2394
      %v2396 = vpop.f32.mrb[0].mxu0
      %v2397 = vpop.f32.mrb[0].mxu0
      %v2398 = vadd.f32 0.0, %v2397
      %v2399 = vpop.f32.mrb[0].mxu0
      %2400 = vmatprep.mubr.bf16.mxu0 0
      %2401 = vmatmul.mubr.bf16.gmra.mrb[0].mxu0 %v2347
      %v2402 = vpop.f32.mrb[0].mxu0
      %v2403 = vadd.f32 0.0, %v2402
      %v2404 = vpop.f32.mrb[0].mxu0
      %v2405 = vpop.f32.mrb[0].mxu0
      %v2406 = vadd.f32 0.0, %v2405
      %v2407 = vpop.f32.mrb[0].mxu0
      %2408 = vmatprep.mubr.bf16.mxu0 0
      %2409 = vmatmul.mubr.bf16.gmra.mrb[0].mxu0 %v2350
      %v2410 = vpop.f32.mrb[0].mxu0
      %v2411 = vadd.f32 0.0, %v2410
      %v2412 = vpop.f32.mrb[0].mxu0
      %v2413 = vpop.f32.mrb[0].mxu0
      %v2414 = vadd.f32 0.0, %v2413
      %v2415 = vpop.f32.mrb[0].mxu0
      %2416 = vdwg.mxu0
      %v2425 = vunpack.c.l.b16 %v2179
      %v2426 = vunpack.c.l.b16 %v2180
      %v2427 = vunpack.c.l.b16 %v2181
      %v2428 = vunpack.c.l.b16 %v2182
      %v2429 = vunpack.c.l.b16 %v2183
      %v2430 = vunpack.c.l.b16 %v2184
      %v2431 = vunpack.c.l.b16 %v2185
      %v2432 = vunpack.c.l.b16 %v2186
      %v2433 = vpack.c.b16 %v2426, %v2425
      %v2434 = vpack.c.b16 %v2428, %v2427
      %v2435 = vpack.c.b16 %v2430, %v2429
      %v2436 = vpack.c.b16 %v2432, %v2431
      %v2441 = vunpack.c.l.b16 %v2187
      %v2442 = vunpack.c.l.b16 %v2188
      %v2443 = vunpack.c.l.b16 %v2189
      %v2444 = vunpack.c.l.b16 %v2190
      %v2445 = vpack.c.b16 %v2442, %v2441
      %v2446 = vpack.c.b16 %v2444, %v2443
      %v2450 = vsel %vm2339, %v2433, 0
      %v2453 = vsel %vm2339, %v2434, 0
      %v2456 = vsel %vm2339, %v2435, 0
      %v2459 = vsel %vm2339, %v2436, 0
      %2461 = vmatprep.subr.bf16.mxu0 0
      %2462 = vmatpush1.bf16.msra.mxu0 %v2445
      %2463 = vmatprep.subr.bf16.mxu0 0
      %2464 = vmatpush1.bf16.msra.mxu0 %v2446
      %2465 = vmatprep.subr.bf16.mxu0 0
      %2466 = vmatpush1.bf16.msra.mxu0 0
      %2467 = vmatprep.subr.bf16.mxu0 0
      %2468 = vmatpush1.bf16.msra.mxu0 0
      %2469 = vmatprep.subr.bf16.mxu0 0
      %2470 = vmatpush1.bf16.msra.mxu0 0
      %2471 = vmatprep.subr.bf16.mxu0 0
      %2472 = vmatpush1.bf16.msra.mxu0 0
      %2473 = vmatprep.subr.bf16.mxu0 0
      %2474 = vmatpush1.bf16.msra.mxu0 0
      %2475 = vmatprep.subr.bf16.mxu0 0
      %2476 = vmatpush1.bf16.msra.mxu0 0
      %2477 = vmatprep.subr.bf16.mxu0 0
      %2478 = vmatpush1.bf16.msra.mxu0 0
      %2479 = vmatprep.subr.bf16.mxu0 0
      %2480 = vmatpush1.bf16.msra.mxu0 0
      %2481 = vmatprep.subr.bf16.mxu0 0
      %2482 = vmatpush1.bf16.msra.mxu0 0
      %2483 = vmatprep.subr.bf16.mxu0 0
      %2484 = vmatpush1.bf16.msra.mxu0 0
      %2485 = vmatprep.subr.bf16.mxu0 0
      %2486 = vmatpush1.bf16.msra.mxu0 0
      %2487 = vmatprep.subr.bf16.mxu0 0
      %2488 = vmatpush1.bf16.msra.mxu0 0
      %2489 = vmatprep.subr.bf16.mxu0 0
      %2490 = vmatpush1.bf16.msra.mxu0 0
      %2491 = vmatprep.subr.bf16.mxu0 0
      %2492 = vmatpush1.bf16.msra.mxu0 0
      %2493 = vmatprep.mubr.bf16.mxu0 0
      %2494 = vmatmul.mubr.bf16.gmra.mrb[0].mxu0 %v2450
      %v2495 = vpop.f32.mrb[0].mxu0
      %v2496 = vadd.f32 %v2387, %v2495
      %v2497 = vpop.f32.mrb[0].mxu0
      %v2498 = vpop.f32.mrb[0].mxu0
      %v2499 = vadd.f32 %v2390, %v2498
      %v2500 = vpop.f32.mrb[0].mxu0
      %2501 = vmatprep.mubr.bf16.mxu0 0
      %2502 = vmatmul.mubr.bf16.gmra.mrb[0].mxu0 %v2453
      %v2503 = vpop.f32.mrb[0].mxu0
      %v2504 = vadd.f32 %v2395, %v2503
      %v2505 = vpop.f32.mrb[0].mxu0
      %v2506 = vpop.f32.mrb[0].mxu0
      %v2507 = vadd.f32 %v2398, %v2506
      %v2508 = vpop.f32.mrb[0].mxu0
      %2509 = vmatprep.mubr.bf16.mxu0 0
      %2510 = vmatmul.mubr.bf16.gmra.mrb[0].mxu0 %v2456
      %v2511 = vpop.f32.mrb[0].mxu0
      %v2512 = vadd.f32 %v2403, %v2511
      %v2513 = vpop.f32.mrb[0].mxu0
      %v2514 = vpop.f32.mrb[0].mxu0
      %v2515 = vadd.f32 %v2406, %v2514
      %v2516 = vpop.f32.mrb[0].mxu0
      %2517 = vmatprep.mubr.bf16.mxu0 0
      %2518 = vmatmul.mubr.bf16.gmra.mrb[0].mxu0 %v2459
      %v2519 = vpop.f32.mrb[0].mxu0
      %v2520 = vadd.f32 %v2411, %v2519
      %v2521 = vpop.f32.mrb[0].mxu0
      %v2522 = vpop.f32.mrb[0].mxu0
      %v2523 = vadd.f32 %v2414, %v2522
      %v2524 = vpop.f32.mrb[0].mxu0
      %2525 = vdwg.mxu0
      %v2526 = vld [vmem:[#allocation3] sm:$0xe]
      %v2527 = vld [vmem:[#allocation3 + $0x8] sm:$0xe]
      %v2528 = vld [vmem:[#allocation3 + $0x10] sm:$0xe]
      %v2529 = vld [vmem:[#allocation3 + $0x18] sm:$0xe]
      %v2530 = vld [vmem:[#allocation3 + $0x20] sm:$0xe]
      %v2531 = vld [vmem:[#allocation3 + $0x28] sm:$0xe]
      %v2532 = vld [vmem:[#allocation3 + $0x30] sm:$0xe]
      %v2533 = vld [vmem:[#allocation3 + $0x38] sm:$0xe]
      %v2550 = vrot.slane %v2526, 5
      %v2551 = vrot.slane %v2550, 4
      %v2552 = vrot.slane %v2191, 5
      %v2553 = vsel %vm841, %v2551, %v2552
      %v2554 = vrot.slane %v2527, 5
      %v2555 = vrot.slane %v2554, 4
      %v2556 = vrot.slane %v2192, 5
      %v2557 = vsel %vm841, %v2555, %v2556
      %v2558 = vrot.slane %v2528, 5
      %v2559 = vrot.slane %v2558, 4
      %v2560 = vrot.slane %v2193, 5
      %v2561 = vsel %vm841, %v2559, %v2560
      %v2562 = vrot.slane %v2529, 5
      %v2563 = vrot.slane %v2562, 4
      %v2564 = vrot.slane %v2194, 5
      %v2565 = vsel %vm841, %v2563, %v2564
      %v2566 = vrot.slane %v2530, 5
      %v2567 = vrot.slane %v2566, 4
      %v2568 = vrot.slane %v2195, 5
      %v2569 = vsel %vm841, %v2567, %v2568
      %v2570 = vrot.slane %v2531, 5
      %v2571 = vrot.slane %v2570, 4
      %v2572 = vrot.slane %v2196, 5
      %v2573 = vsel %vm841, %v2571, %v2572
      %v2574 = vrot.slane %v2532, 5
      %v2575 = vrot.slane %v2574, 4
      %v2576 = vrot.slane %v2197, 5
      %v2577 = vsel %vm841, %v2575, %v2576
      %v2578 = vrot.slane %v2533, 5
      %v2579 = vrot.slane %v2578, 4
      %v2580 = vrot.slane %v2198, 5
      %v2581 = vsel %vm841, %v2579, %v2580
      %v2582 = vld [vmem:[%s3 + $0x20] sm:$0xf]
      %v2583 = vld [vmem:[%s3 + $0x24] sm:$0xf]
      %v2584 = vld [vmem:[%s3 + $0x28] sm:$0xf]
      %v2585 = vld [vmem:[%s3 + $0x2c] sm:$0xf]
      %v2586 = vunpack.c.l.b16 %v2553
      %v2587 = vunpack.c.l.b16 %v2557
      %v2588 = vunpack.c.l.b16 %v2561
      %v2589 = vunpack.c.l.b16 %v2565
      %v2590 = vunpack.c.l.b16 %v2569
      %v2591 = vunpack.c.l.b16 %v2573
      %v2592 = vunpack.c.l.b16 %v2577
      %v2593 = vunpack.c.l.b16 %v2581
      %v2594 = vpack.c.b16 %v2587, %v2586
      %v2595 = vpack.c.b16 %v2589, %v2588
      %v2596 = vpack.c.b16 %v2591, %v2590
      %v2597 = vpack.c.b16 %v2593, %v2592
      %v2602 = vunpack.c.l.b16 %v2582
      %v2603 = vunpack.c.l.b16 %v2583
      %v2604 = vunpack.c.l.b16 %v2584
      %v2605 = vunpack.c.l.b16 %v2585
      %v2606 = vpack.c.b16 %v2603, %v2602
      %v2607 = vpack.c.b16 %v2605, %v2604
      %v2611 = vsel %vm2339, %v2594, 0
      %v2614 = vsel %vm2339, %v2595, 0
      %v2617 = vsel %vm2339, %v2596, 0
      %v2620 = vsel %vm2339, %v2597, 0
      %2622 = vmatprep.subr.bf16.mxu0 0
      %2623 = vmatpush1.bf16.msra.mxu0 %v2606
      %2624 = vmatprep.subr.bf16.mxu0 0
      %2625 = vmatpush1.bf16.msra.mxu0 %v2607
      %2626 = vmatprep.subr.bf16.mxu0 0
      %2627 = vmatpush1.bf16.msra.mxu0 0
      %2628 = vmatprep.subr.bf16.mxu0 0
      %2629 = vmatpush1.bf16.msra.mxu0 0
      %2630 = vmatprep.subr.bf16.mxu0 0
      %2631 = vmatpush1.bf16.msra.mxu0 0
      %2632 = vmatprep.subr.bf16.mxu0 0
      %2633 = vmatpush1.bf16.msra.mxu0 0
      %2634 = vmatprep.subr.bf16.mxu0 0
      %2635 = vmatpush1.bf16.msra.mxu0 0
      %2636 = vmatprep.subr.bf16.mxu0 0
      %2637 = vmatpush1.bf16.msra.mxu0 0
      %2638 = vmatprep.subr.bf16.mxu0 0
      %2639 = vmatpush1.bf16.msra.mxu0 0
      %2640 = vmatprep.subr.bf16.mxu0 0
      %2641 = vmatpush1.bf16.msra.mxu0 0
      %2642 = vmatprep.subr.bf16.mxu0 0
      %2643 = vmatpush1.bf16.msra.mxu0 0
      %2644 = vmatprep.subr.bf16.mxu0 0
      %2645 = vmatpush1.bf16.msra.mxu0 0
      %2646 = vmatprep.subr.bf16.mxu0 0
      %2647 = vmatpush1.bf16.msra.mxu0 0
      %2648 = vmatprep.subr.bf16.mxu0 0
      %2649 = vmatpush1.bf16.msra.mxu0 0
      %2650 = vmatprep.subr.bf16.mxu0 0
      %2651 = vmatpush1.bf16.msra.mxu0 0
      %2652 = vmatprep.subr.bf16.mxu0 0
      %2653 = vmatpush1.bf16.msra.mxu0 0
      %2654 = vmatprep.mubr.bf16.mxu0 0
      %2655 = vmatmul.mubr.bf16.gmra.mrb[0].mxu0 %v2611
      %v2656 = vpop.f32.mrb[0].mxu0
      %v2657 = vadd.f32 0.0, %v2656
      %v2658 = vpop.f32.mrb[0].mxu0
      %v2659 = vpop.f32.mrb[0].mxu0
      %v2660 = vadd.f32 0.0, %v2659
      %v2661 = vpop.f32.mrb[0].mxu0
      %2662 = vmatprep.mubr.bf16.mxu0 0
      %2663 = vmatmul.mubr.bf16.gmra.mrb[0].mxu0 %v2614
      %v2664 = vpop.f32.mrb[0].mxu0
      %v2665 = vadd.f32 0.0, %v2664
      %v2666 = vpop.f32.mrb[0].mxu0
      %v2667 = vpop.f32.mrb[0].mxu0
      %v2668 = vadd.f32 0.0, %v2667
      %v2669 = vpop.f32.mrb[0].mxu0
      %2670 = vmatprep.mubr.bf16.mxu0 0
      %2671 = vmatmul.mubr.bf16.gmra.mrb[0].mxu0 %v2617
      %v2672 = vpop.f32.mrb[0].mxu0
      %v2673 = vadd.f32 0.0, %v2672
      %v2674 = vpop.f32.mrb[0].mxu0
      %v2675 = vpop.f32.mrb[0].mxu0
      %v2676 = vadd.f32 0.0, %v2675
      %v2677 = vpop.f32.mrb[0].mxu0
      %2678 = vmatprep.mubr.bf16.mxu0 0
      %2679 = vmatmul.mubr.bf16.gmra.mrb[0].mxu0 %v2620
      %v2680 = vpop.f32.mrb[0].mxu0
      %v2681 = vadd.f32 0.0, %v2680
      %v2682 = vpop.f32.mrb[0].mxu0
      %v2683 = vpop.f32.mrb[0].mxu0
      %v2684 = vadd.f32 0.0, %v2683
      %v2685 = vpop.f32.mrb[0].mxu0
      %2686 = vdwg.mxu0
      %v2687 = vadd.f32 %v2496, %v2657
      %v2688 = vadd.f32 %v2499, %v2660
      %v2689 = vadd.f32 %v2504, %v2665
      %v2690 = vadd.f32 %v2507, %v2668
      %v2691 = vadd.f32 %v2512, %v2673
      %v2692 = vadd.f32 %v2515, %v2676
      %v2693 = vadd.f32 %v2520, %v2681
      %v2694 = vadd.f32 %v2523, %v2684
      %v2695 = vld [vmem:[%s294] sm:$0xf]
      %v2696 = vld [vmem:[%s294 + $0x8] sm:$0xf]
      %v2697 = vld [vmem:[%s294 + $0x10] sm:$0xf]
      %v2698 = vld [vmem:[%s294 + $0x18] sm:$0xf]
      %v2699 = vld [vmem:[%s294 + $0x20] sm:$0xf]
      %v2700 = vld [vmem:[%s294 + $0x28] sm:$0xf]
      %v2701 = vld [vmem:[%s294 + $0x30] sm:$0xf]
      %v2702 = vld [vmem:[%s294 + $0x38] sm:$0xf]
      %v2703 = vld [vmem:[%s3 + $0x30] sm:$0xf]
      %v2704 = vld [vmem:[%s3 + $0x34] sm:$0xf]
      %v2705 = vld [vmem:[%s3 + $0x38] sm:$0xf]
      %v2706 = vld [vmem:[%s3 + $0x3c] sm:$0xf]
      %v2715 = vunpack.c.l.b16 %v2695
      %v2716 = vunpack.c.l.b16 %v2696
      %v2717 = vunpack.c.l.b16 %v2697
      %v2718 = vunpack.c.l.b16 %v2698
      %v2719 = vunpack.c.l.b16 %v2699
      %v2720 = vunpack.c.l.b16 %v2700
      %v2721 = vunpack.c.l.b16 %v2701
      %v2722 = vunpack.c.l.b16 %v2702
      %v2723 = vpack.c.b16 %v2716, %v2715
      %v2724 = vpack.c.b16 %v2718, %v2717
      %v2725 = vpack.c.b16 %v2720, %v2719
      %v2726 = vpack.c.b16 %v2722, %v2721
      %v2731 = vunpack.c.l.b16 %v2703
      %v2732 = vunpack.c.l.b16 %v2704
      %v2733 = vunpack.c.l.b16 %v2705
      %v2734 = vunpack.c.l.b16 %v2706
      %v2735 = vpack.c.b16 %v2732, %v2731
      %v2736 = vpack.c.b16 %v2734, %v2733
      %v2740 = vsel %vm2339, %v2723, 0
      %v2743 = vsel %vm2339, %v2724, 0
      %v2746 = vsel %vm2339, %v2725, 0
      %v2749 = vsel %vm2339, %v2726, 0
      %2751 = vmatprep.subr.bf16.mxu0 0
      %2752 = vmatpush1.bf16.msra.mxu0 %v2735
      %2753 = vmatprep.subr.bf16.mxu0 0
      %2754 = vmatpush1.bf16.msra.mxu0 %v2736
      %2755 = vmatprep.subr.bf16.mxu0 0
      %2756 = vmatpush1.bf16.msra.mxu0 0
      %2757 = vmatprep.subr.bf16.mxu0 0
      %2758 = vmatpush1.bf16.msra.mxu0 0
      %2759 = vmatprep.subr.bf16.mxu0 0
      %2760 = vmatpush1.bf16.msra.mxu0 0
      %2761 = vmatprep.subr.bf16.mxu0 0
      %2762 = vmatpush1.bf16.msra.mxu0 0
      %2763 = vmatprep.subr.bf16.mxu0 0
      %2764 = vmatpush1.bf16.msra.mxu0 0
      %2765 = vmatprep.subr.bf16.mxu0 0
      %2766 = vmatpush1.bf16.msra.mxu0 0
      %2767 = vmatprep.subr.bf16.mxu0 0
      %2768 = vmatpush1.bf16.msra.mxu0 0
      %2769 = vmatprep.subr.bf16.mxu0 0
      %2770 = vmatpush1.bf16.msra.mxu0 0
      %2771 = vmatprep.subr.bf16.mxu0 0
      %2772 = vmatpush1.bf16.msra.mxu0 0
      %2773 = vmatprep.subr.bf16.mxu0 0
      %2774 = vmatpush1.bf16.msra.mxu0 0
      %2775 = vmatprep.subr.bf16.mxu0 0
      %2776 = vmatpush1.bf16.msra.mxu0 0
      %2777 = vmatprep.subr.bf16.mxu0 0
      %2778 = vmatpush1.bf16.msra.mxu0 0
      %2779 = vmatprep.subr.bf16.mxu0 0
      %2780 = vmatpush1.bf16.msra.mxu0 0
      %2781 = vmatprep.subr.bf16.mxu0 0
      %2782 = vmatpush1.bf16.msra.mxu0 0
      %2783 = vmatprep.mubr.bf16.mxu0 0
      %2784 = vmatmul.mubr.bf16.gmra.mrb[0].mxu0 %v2740
      %v2785 = vpop.f32.mrb[0].mxu0
      %v2786 = vadd.f32 0.0, %v2785
      %v2787 = vpop.f32.mrb[0].mxu0
      %v2788 = vpop.f32.mrb[0].mxu0
      %v2789 = vadd.f32 0.0, %v2788
      %v2790 = vpop.f32.mrb[0].mxu0
      %2791 = vmatprep.mubr.bf16.mxu0 0
      %2792 = vmatmul.mubr.bf16.gmra.mrb[0].mxu0 %v2743
      %v2793 = vpop.f32.mrb[0].mxu0
      %v2794 = vadd.f32 0.0, %v2793
      %v2795 = vpop.f32.mrb[0].mxu0
      %v2796 = vpop.f32.mrb[0].mxu0
      %v2797 = vadd.f32 0.0, %v2796
      %v2798 = vpop.f32.mrb[0].mxu0
      %2799 = vmatprep.mubr.bf16.mxu0 0
      %2800 = vmatmul.mubr.bf16.gmra.mrb[0].mxu0 %v2746
      %v2801 = vpop.f32.mrb[0].mxu0
      %v2802 = vadd.f32 0.0, %v2801
      %v2803 = vpop.f32.mrb[0].mxu0
      %v2804 = vpop.f32.mrb[0].mxu0
      %v2805 = vadd.f32 0.0, %v2804
      %v2806 = vpop.f32.mrb[0].mxu0
      %2807 = vmatprep.mubr.bf16.mxu0 0
      %2808 = vmatmul.mubr.bf16.gmra.mrb[0].mxu0 %v2749
      %v2809 = vpop.f32.mrb[0].mxu0
      %v2810 = vadd.f32 0.0, %v2809
      %v2811 = vpop.f32.mrb[0].mxu0
      %v2812 = vpop.f32.mrb[0].mxu0
      %v2813 = vadd.f32 0.0, %v2812
      %v2814 = vpop.f32.mrb[0].mxu0
      %2815 = vdwg.mxu0
      %v2816 = vadd.f32 %v2687, %v2786
      %v2817 = vadd.f32 %v2688, %v2789
      %v2818 = vadd.f32 %v2689, %v2794
      %v2819 = vadd.f32 %v2690, %v2797
      %v2820 = vadd.f32 %v2691, %v2802
      %v2821 = vadd.f32 %v2692, %v2805
      %v2822 = vadd.f32 %v2693, %v2810
      %v2823 = vadd.f32 %v2694, %v2813
      %v2824 = vld [vmem:[%s294] sm:$0xf]
      %v2825 = vld [vmem:[%s294 + $0x4] sm:$0x1]
      %v2826 = vld [vmem:[%s294 + $0x8] sm:$0xf]
      %v2827 = vld [vmem:[%s294 + $0xc] sm:$0x1]
      %v2828 = vld [vmem:[%s294 + $0x10] sm:$0xf]
      %v2829 = vld [vmem:[%s294 + $0x14] sm:$0x1]
      %v2830 = vld [vmem:[%s294 + $0x18] sm:$0xf]
      %v2831 = vld [vmem:[%s294 + $0x1c] sm:$0x1]
      %v2832 = vld [vmem:[%s294 + $0x20] sm:$0xf]
      %v2833 = vld [vmem:[%s294 + $0x24] sm:$0x1]
      %v2834 = vld [vmem:[%s294 + $0x28] sm:$0xf]
      %v2835 = vld [vmem:[%s294 + $0x2c] sm:$0x1]
      %v2836 = vld [vmem:[%s294 + $0x30] sm:$0xf]
      %v2837 = vld [vmem:[%s294 + $0x34] sm:$0x1]
      %v2838 = vld [vmem:[%s294 + $0x38] sm:$0xf]
      %v2839 = vld [vmem:[%s294 + $0x3c] sm:$0x1]
      %v2841 = vshrl.u32 %v2824, 16
      %v2843 = vrot.slane %v2841, 4
      %v2844 = vshll.u32 %v2824, 16
      %v2846 = vrot.slane %v2844, 5
      %v2847 = vor.u32 %v2843, %v2846
      %v2848 = vrot.slane %v2847, 4
      %v2850 = vshll.u32 %v2825, 16
      %v2852 = vrot.slane %v2850, 5
      %v2853 = vsel %vm503, %v2848, %v2852
      %v2855 = vshrl.u32 %v2826, 16
      %v2857 = vrot.slane %v2855, 4
      %v2858 = vshll.u32 %v2826, 16
      %v2860 = vrot.slane %v2858, 5
      %v2861 = vor.u32 %v2857, %v2860
      %v2862 = vrot.slane %v2861, 4
      %v2864 = vshll.u32 %v2827, 16
      %v2866 = vrot.slane %v2864, 5
      %v2867 = vsel %vm503, %v2862, %v2866
      %v2869 = vshrl.u32 %v2828, 16
      %v2871 = vrot.slane %v2869, 4
      %v2872 = vshll.u32 %v2828, 16
      %v2874 = vrot.slane %v2872, 5
      %v2875 = vor.u32 %v2871, %v2874
      %v2876 = vrot.slane %v2875, 4
      %v2878 = vshll.u32 %v2829, 16
      %v2880 = vrot.slane %v2878, 5
      %v2881 = vsel %vm503, %v2876, %v2880
      %v2883 = vshrl.u32 %v2830, 16
      %v2885 = vrot.slane %v2883, 4
      %v2886 = vshll.u32 %v2830, 16
      %v2888 = vrot.slane %v2886, 5
      %v2889 = vor.u32 %v2885, %v2888
      %v2890 = vrot.slane %v2889, 4
      %v2892 = vshll.u32 %v2831, 16
      %v2894 = vrot.slane %v2892, 5
      %v2895 = vsel %vm503, %v2890, %v2894
      %v2897 = vshrl.u32 %v2832, 16
      %v2899 = vrot.slane %v2897, 4
      %v2900 = vshll.u32 %v2832, 16
      %v2902 = vrot.slane %v2900, 5
      %v2903 = vor.u32 %v2899, %v2902
      %v2904 = vrot.slane %v2903, 4
      %v2906 = vshll.u32 %v2833, 16
      %v2908 = vrot.slane %v2906, 5
      %v2909 = vsel %vm503, %v2904, %v2908
      %v2911 = vshrl.u32 %v2834, 16
      %v2913 = vrot.slane %v2911, 4
      %v2914 = vshll.u32 %v2834, 16
      %v2916 = vrot.slane %v2914, 5
      %v2917 = vor.u32 %v2913, %v2916
      %v2918 = vrot.slane %v2917, 4
      %v2920 = vshll.u32 %v2835, 16
      %v2922 = vrot.slane %v2920, 5
      %v2923 = vsel %vm503, %v2918, %v2922
      %v2925 = vshrl.u32 %v2836, 16
      %v2927 = vrot.slane %v2925, 4
      %v2928 = vshll.u32 %v2836, 16
      %v2930 = vrot.slane %v2928, 5
      %v2931 = vor.u32 %v2927, %v2930
      %v2932 = vrot.slane %v2931, 4
      %v2934 = vshll.u32 %v2837, 16
      %v2936 = vrot.slane %v2934, 5
      %v2937 = vsel %vm503, %v2932, %v2936
      %v2939 = vshrl.u32 %v2838, 16
      %v2941 = vrot.slane %v2939, 4
      %v2942 = vshll.u32 %v2838, 16
      %v2944 = vrot.slane %v2942, 5
      %v2945 = vor.u32 %v2941, %v2944
      %v2946 = vrot.slane %v2945, 4
      %v2948 = vshll.u32 %v2839, 16
      %v2950 = vrot.slane %v2948, 5
      %v2951 = vsel %vm503, %v2946, %v2950
      %v2952 = vld [vmem:[%s3 + $0x40] sm:$0xf]
      %v2953 = vld [vmem:[%s3 + $0x44] sm:$0xf]
      %v2954 = vld [vmem:[%s3 + $0x48] sm:$0xf]
      %v2955 = vld [vmem:[%s3 + $0x4c] sm:$0xf]
      %v2956 = vunpack.c.l.b16 %v2853
      %v2957 = vunpack.c.l.b16 %v2867
      %v2958 = vunpack.c.l.b16 %v2881
      %v2959 = vunpack.c.l.b16 %v2895
      %v2960 = vunpack.c.l.b16 %v2909
      %v2961 = vunpack.c.l.b16 %v2923
      %v2962 = vunpack.c.l.b16 %v2937
      %v2963 = vunpack.c.l.b16 %v2951
      %v2964 = vpack.c.b16 %v2957, %v2956
      %v2965 = vpack.c.b16 %v2959, %v2958
      %v2966 = vpack.c.b16 %v2961, %v2960
      %v2967 = vpack.c.b16 %v2963, %v2962
      %v2972 = vunpack.c.l.b16 %v2952
      %v2973 = vunpack.c.l.b16 %v2953
      %v2974 = vunpack.c.l.b16 %v2954
      %v2975 = vunpack.c.l.b16 %v2955
      %v2976 = vpack.c.b16 %v2973, %v2972
      %v2977 = vpack.c.b16 %v2975, %v2974
      %v2981 = vsel %vm2339, %v2964, 0
      %v2984 = vsel %vm2339, %v2965, 0
      %v2987 = vsel %vm2339, %v2966, 0
      %v2990 = vsel %vm2339, %v2967, 0
      %2992 = vmatprep.subr.bf16.mxu0 0
      %2993 = vmatpush1.bf16.msra.mxu0 %v2976
      %2994 = vmatprep.subr.bf16.mxu0 0
      %2995 = vmatpush1.bf16.msra.mxu0 %v2977
      %2996 = vmatprep.subr.bf16.mxu0 0
      %2997 = vmatpush1.bf16.msra.mxu0 0
      %2998 = vmatprep.subr.bf16.mxu0 0
      %2999 = vmatpush1.bf16.msra.mxu0 0
      %3000 = vmatprep.subr.bf16.mxu0 0
      %3001 = vmatpush1.bf16.msra.mxu0 0
      %3002 = vmatprep.subr.bf16.mxu0 0
      %3003 = vmatpush1.bf16.msra.mxu0 0
      %3004 = vmatprep.subr.bf16.mxu0 0
      %3005 = vmatpush1.bf16.msra.mxu0 0
      %3006 = vmatprep.subr.bf16.mxu0 0
      %3007 = vmatpush1.bf16.msra.mxu0 0
      %3008 = vmatprep.subr.bf16.mxu0 0
      %3009 = vmatpush1.bf16.msra.mxu0 0
      %3010 = vmatprep.subr.bf16.mxu0 0
      %3011 = vmatpush1.bf16.msra.mxu0 0
      %3012 = vmatprep.subr.bf16.mxu0 0
      %3013 = vmatpush1.bf16.msra.mxu0 0
      %3014 = vmatprep.subr.bf16.mxu0 0
      %3015 = vmatpush1.bf16.msra.mxu0 0
      %3016 = vmatprep.subr.bf16.mxu0 0
      %3017 = vmatpush1.bf16.msra.mxu0 0
      %3018 = vmatprep.subr.bf16.mxu0 0
      %3019 = vmatpush1.bf16.msra.mxu0 0
      %3020 = vmatprep.subr.bf16.mxu0 0
      %3021 = vmatpush1.bf16.msra.mxu0 0
      %3022 = vmatprep.subr.bf16.mxu0 0
      %3023 = vmatpush1.bf16.msra.mxu0 0
      %3024 = vmatprep.mubr.bf16.mxu0 0
      %3025 = vmatmul.mubr.bf16.gmra.mrb[0].mxu0 %v2981
      %v3026 = vpop.f32.mrb[0].mxu0
      %v3027 = vadd.f32 0.0, %v3026
      %v3028 = vpop.f32.mrb[0].mxu0
      %v3029 = vpop.f32.mrb[0].mxu0
      %v3030 = vadd.f32 0.0, %v3029
      %v3031 = vpop.f32.mrb[0].mxu0
      %3032 = vmatprep.mubr.bf16.mxu0 0
      %3033 = vmatmul.mubr.bf16.gmra.mrb[0].mxu0 %v2984
      %v3034 = vpop.f32.mrb[0].mxu0
      %v3035 = vadd.f32 0.0, %v3034
      %v3036 = vpop.f32.mrb[0].mxu0
      %v3037 = vpop.f32.mrb[0].mxu0
      %v3038 = vadd.f32 0.0, %v3037
      %v3039 = vpop.f32.mrb[0].mxu0
      %3040 = vmatprep.mubr.bf16.mxu0 0
      %3041 = vmatmul.mubr.bf16.gmra.mrb[0].mxu0 %v2987
      %v3042 = vpop.f32.mrb[0].mxu0
      %v3043 = vadd.f32 0.0, %v3042
      %v3044 = vpop.f32.mrb[0].mxu0
      %v3045 = vpop.f32.mrb[0].mxu0
      %v3046 = vadd.f32 0.0, %v3045
      %v3047 = vpop.f32.mrb[0].mxu0
      %3048 = vmatprep.mubr.bf16.mxu0 0
      %3049 = vmatmul.mubr.bf16.gmra.mrb[0].mxu0 %v2990
      %v3050 = vpop.f32.mrb[0].mxu0
      %v3051 = vadd.f32 0.0, %v3050
      %v3052 = vpop.f32.mrb[0].mxu0
      %v3053 = vpop.f32.mrb[0].mxu0
      %v3054 = vadd.f32 0.0, %v3053
      %v3055 = vpop.f32.mrb[0].mxu0
      %3056 = vdwg.mxu0
      %v3057 = vadd.f32 %v2816, %v3027
      %v3058 = vadd.f32 %v2817, %v3030
      %v3059 = vadd.f32 %v2818, %v3035
      %v3060 = vadd.f32 %v2819, %v3038
      %v3061 = vadd.f32 %v2820, %v3043
      %v3062 = vadd.f32 %v2821, %v3046
      %v3063 = vadd.f32 %v2822, %v3051
      %v3064 = vadd.f32 %v2823, %v3054
      %v3065 = vld [vmem:[%s294] sm:$0xe]
      %v3066 = vld [vmem:[%s294 + $0x8] sm:$0xe]
      %v3067 = vld [vmem:[%s294 + $0x10] sm:$0xe]
      %v3068 = vld [vmem:[%s294 + $0x18] sm:$0xe]
      %v3069 = vld [vmem:[%s294 + $0x20] sm:$0xe]
      %v3070 = vld [vmem:[%s294 + $0x28] sm:$0xe]
      %v3071 = vld [vmem:[%s294 + $0x30] sm:$0xe]
      %v3072 = vld [vmem:[%s294 + $0x38] sm:$0xe]
      %v3089 = vrot.slane %v3065, 5
      %v3090 = vrot.slane %v3089, 4
      %v3091 = vrot.slane %v2825, 5
      %v3092 = vsel %vm841, %v3090, %v3091
      %v3093 = vrot.slane %v3066, 5
      %v3094 = vrot.slane %v3093, 4
      %v3095 = vrot.slane %v2827, 5
      %v3096 = vsel %vm841, %v3094, %v3095
      %v3097 = vrot.slane %v3067, 5
      %v3098 = vrot.slane %v3097, 4
      %v3099 = vrot.slane %v2829, 5
      %v3100 = vsel %vm841, %v3098, %v3099
      %v3101 = vrot.slane %v3068, 5
      %v3102 = vrot.slane %v3101, 4
      %v3103 = vrot.slane %v2831, 5
      %v3104 = vsel %vm841, %v3102, %v3103
      %v3105 = vrot.slane %v3069, 5
      %v3106 = vrot.slane %v3105, 4
      %v3107 = vrot.slane %v2833, 5
      %v3108 = vsel %vm841, %v3106, %v3107
      %v3109 = vrot.slane %v3070, 5
      %v3110 = vrot.slane %v3109, 4
      %v3111 = vrot.slane %v2835, 5
      %v3112 = vsel %vm841, %v3110, %v3111
      %v3113 = vrot.slane %v3071, 5
      %v3114 = vrot.slane %v3113, 4
      %v3115 = vrot.slane %v2837, 5
      %v3116 = vsel %vm841, %v3114, %v3115
      %v3117 = vrot.slane %v3072, 5
      %v3118 = vrot.slane %v3117, 4
      %v3119 = vrot.slane %v2839, 5
      %v3120 = vsel %vm841, %v3118, %v3119
      %v3121 = vld [vmem:[%s3 + $0x50] sm:$0xf]
      %v3122 = vld [vmem:[%s3 + $0x54] sm:$0xf]
      %v3123 = vld [vmem:[%s3 + $0x58] sm:$0xf]
      %v3124 = vld [vmem:[%s3 + $0x5c] sm:$0xf]
      %v3125 = vunpack.c.l.b16 %v3092
      %v3126 = vunpack.c.l.b16 %v3096
      %v3127 = vunpack.c.l.b16 %v3100
      %v3128 = vunpack.c.l.b16 %v3104
      %v3129 = vunpack.c.l.b16 %v3108
      %v3130 = vunpack.c.l.b16 %v3112
      %v3131 = vunpack.c.l.b16 %v3116
      %v3132 = vunpack.c.l.b16 %v3120
      %v3133 = vpack.c.b16 %v3126, %v3125
      %v3134 = vpack.c.b16 %v3128, %v3127
      %v3135 = vpack.c.b16 %v3130, %v3129
      %v3136 = vpack.c.b16 %v3132, %v3131
      %v3141 = vunpack.c.l.b16 %v3121
      %v3142 = vunpack.c.l.b16 %v3122
      %v3143 = vunpack.c.l.b16 %v3123
      %v3144 = vunpack.c.l.b16 %v3124
      %v3145 = vpack.c.b16 %v3142, %v3141
      %v3146 = vpack.c.b16 %v3144, %v3143
      %v3150 = vsel %vm2339, %v3133, 0
      %v3153 = vsel %vm2339, %v3134, 0
      %v3156 = vsel %vm2339, %v3135, 0
      %v3159 = vsel %vm2339, %v3136, 0
      %3161 = vmatprep.subr.bf16.mxu0 0
      %3162 = vmatpush1.bf16.msra.mxu0 %v3145
      %3163 = vmatprep.subr.bf16.mxu0 0
      %3164 = vmatpush1.bf16.msra.mxu0 %v3146
      %3165 = vmatprep.subr.bf16.mxu0 0
      %3166 = vmatpush1.bf16.msra.mxu0 0
      %3167 = vmatprep.subr.bf16.mxu0 0
      %3168 = vmatpush1.bf16.msra.mxu0 0
      %3169 = vmatprep.subr.bf16.mxu0 0
      %3170 = vmatpush1.bf16.msra.mxu0 0
      %3171 = vmatprep.subr.bf16.mxu0 0
      %3172 = vmatpush1.bf16.msra.mxu0 0
      %3173 = vmatprep.subr.bf16.mxu0 0
      %3174 = vmatpush1.bf16.msra.mxu0 0
      %3175 = vmatprep.subr.bf16.mxu0 0
      %3176 = vmatpush1.bf16.msra.mxu0 0
      %3177 = vmatprep.subr.bf16.mxu0 0
      %3178 = vmatpush1.bf16.msra.mxu0 0
      %3179 = vmatprep.subr.bf16.mxu0 0
      %3180 = vmatpush1.bf16.msra.mxu0 0
      %3181 = vmatprep.subr.bf16.mxu0 0
      %3182 = vmatpush1.bf16.msra.mxu0 0
      %3183 = vmatprep.subr.bf16.mxu0 0
      %3184 = vmatpush1.bf16.msra.mxu0 0
      %3185 = vmatprep.subr.bf16.mxu0 0
      %3186 = vmatpush1.bf16.msra.mxu0 0
      %3187 = vmatprep.subr.bf16.mxu0 0
      %3188 = vmatpush1.bf16.msra.mxu0 0
      %3189 = vmatprep.subr.bf16.mxu0 0
      %3190 = vmatpush1.bf16.msra.mxu0 0
      %3191 = vmatprep.subr.bf16.mxu0 0
      %3192 = vmatpush1.bf16.msra.mxu0 0
      %3193 = vmatprep.mubr.bf16.mxu0 0
      %3194 = vmatmul.mubr.bf16.gmra.mrb[0].mxu0 %v3150
      %v3195 = vpop.f32.mrb[0].mxu0
      %v3196 = vadd.f32 0.0, %v3195
      %v3197 = vpop.f32.mrb[0].mxu0
      %v3198 = vpop.f32.mrb[0].mxu0
      %v3199 = vadd.f32 0.0, %v3198
      %v3200 = vpop.f32.mrb[0].mxu0
      %3201 = vmatprep.mubr.bf16.mxu0 0
      %3202 = vmatmul.mubr.bf16.gmra.mrb[0].mxu0 %v3153
      %v3203 = vpop.f32.mrb[0].mxu0
      %v3204 = vadd.f32 0.0, %v3203
      %v3205 = vpop.f32.mrb[0].mxu0
      %v3206 = vpop.f32.mrb[0].mxu0
      %v3207 = vadd.f32 0.0, %v3206
      %v3208 = vpop.f32.mrb[0].mxu0
      %3209 = vmatprep.mubr.bf16.mxu0 0
      %3210 = vmatmul.mubr.bf16.gmra.mrb[0].mxu0 %v3156
      %v3211 = vpop.f32.mrb[0].mxu0
      %v3212 = vadd.f32 0.0, %v3211
      %v3213 = vpop.f32.mrb[0].mxu0
      %v3214 = vpop.f32.mrb[0].mxu0
      %v3215 = vadd.f32 0.0, %v3214
      %v3216 = vpop.f32.mrb[0].mxu0
      %3217 = vmatprep.mubr.bf16.mxu0 0
      %3218 = vmatmul.mubr.bf16.gmra.mrb[0].mxu0 %v3159
      %v3219 = vpop.f32.mrb[0].mxu0
      %v3220 = vadd.f32 0.0, %v3219
      %v3221 = vpop.f32.mrb[0].mxu0
      %v3222 = vpop.f32.mrb[0].mxu0
      %v3223 = vadd.f32 0.0, %v3222
      %v3224 = vpop.f32.mrb[0].mxu0
      %3225 = vdwg.mxu0
      %v3226 = vadd.f32 %v3057, %v3196
      %v3227 = vadd.f32 %v3058, %v3199
      %v3228 = vadd.f32 %v3059, %v3204
      %v3229 = vadd.f32 %v3060, %v3207
      %v3230 = vadd.f32 %v3061, %v3212
      %v3231 = vadd.f32 %v3062, %v3215
      %v3232 = vadd.f32 %v3063, %v3220
      %v3233 = vadd.f32 %v3064, %v3223
      %s3234 = scalar_lea.vmem [#allocation3], 16
      %v3235 = vld [vmem:[%s3234] sm:$0xf]
      %v3236 = vld [vmem:[%s3234 + $0x8] sm:$0xf]
      %v3237 = vld [vmem:[%s3234 + $0x10] sm:$0xf]
      %v3238 = vld [vmem:[%s3234 + $0x18] sm:$0xf]
      %v3239 = vld [vmem:[%s3234 + $0x20] sm:$0xf]
      %v3240 = vld [vmem:[%s3234 + $0x28] sm:$0xf]
      %v3241 = vld [vmem:[%s3234 + $0x30] sm:$0xf]
      %v3242 = vld [vmem:[%s3234 + $0x38] sm:$0xf]
      %v3243 = vld [vmem:[%s3 + $0x60] sm:$0xf]
      %v3244 = vld [vmem:[%s3 + $0x64] sm:$0xf]
      %v3245 = vld [vmem:[%s3 + $0x68] sm:$0xf]
      %v3246 = vld [vmem:[%s3 + $0x6c] sm:$0xf]
      %v3255 = vunpack.c.l.b16 %v3235
      %v3256 = vunpack.c.l.b16 %v3236
      %v3257 = vunpack.c.l.b16 %v3237
      %v3258 = vunpack.c.l.b16 %v3238
      %v3259 = vunpack.c.l.b16 %v3239
      %v3260 = vunpack.c.l.b16 %v3240
      %v3261 = vunpack.c.l.b16 %v3241
      %v3262 = vunpack.c.l.b16 %v3242
      %v3263 = vpack.c.b16 %v3256, %v3255
      %v3264 = vpack.c.b16 %v3258, %v3257
      %v3265 = vpack.c.b16 %v3260, %v3259
      %v3266 = vpack.c.b16 %v3262, %v3261
      %v3271 = vunpack.c.l.b16 %v3243
      %v3272 = vunpack.c.l.b16 %v3244
      %v3273 = vunpack.c.l.b16 %v3245
      %v3274 = vunpack.c.l.b16 %v3246
      %v3275 = vpack.c.b16 %v3272, %v3271
      %v3276 = vpack.c.b16 %v3274, %v3273
      %v3280 = vsel %vm2339, %v3263, 0
      %v3283 = vsel %vm2339, %v3264, 0
      %v3286 = vsel %vm2339, %v3265, 0
      %v3289 = vsel %vm2339, %v3266, 0
      %3291 = vmatprep.subr.bf16.mxu0 0
      %3292 = vmatpush1.bf16.msra.mxu0 %v3275
      %3293 = vmatprep.subr.bf16.mxu0 0
      %3294 = vmatpush1.bf16.msra.mxu0 %v3276
      %3295 = vmatprep.subr.bf16.mxu0 0
      %3296 = vmatpush1.bf16.msra.mxu0 0
      %3297 = vmatprep.subr.bf16.mxu0 0
      %3298 = vmatpush1.bf16.msra.mxu0 0
      %3299 = vmatprep.subr.bf16.mxu0 0
      %3300 = vmatpush1.bf16.msra.mxu0 0
      %3301 = vmatprep.subr.bf16.mxu0 0
      %3302 = vmatpush1.bf16.msra.mxu0 0
      %3303 = vmatprep.subr.bf16.mxu0 0
      %3304 = vmatpush1.bf16.msra.mxu0 0
      %3305 = vmatprep.subr.bf16.mxu0 0
      %3306 = vmatpush1.bf16.msra.mxu0 0
      %3307 = vmatprep.subr.bf16.mxu0 0
      %3308 = vmatpush1.bf16.msra.mxu0 0
      %3309 = vmatprep.subr.bf16.mxu0 0
      %3310 = vmatpush1.bf16.msra.mxu0 0
      %3311 = vmatprep.subr.bf16.mxu0 0
      %3312 = vmatpush1.bf16.msra.mxu0 0
      %3313 = vmatprep.subr.bf16.mxu0 0
      %3314 = vmatpush1.bf16.msra.mxu0 0
      %3315 = vmatprep.subr.bf16.mxu0 0
      %3316 = vmatpush1.bf16.msra.mxu0 0
      %3317 = vmatprep.subr.bf16.mxu0 0
      %3318 = vmatpush1.bf16.msra.mxu0 0
      %3319 = vmatprep.subr.bf16.mxu0 0
      %3320 = vmatpush1.bf16.msra.mxu0 0
      %3321 = vmatprep.subr.bf16.mxu0 0
      %3322 = vmatpush1.bf16.msra.mxu0 0
      %3323 = vmatprep.mubr.bf16.mxu0 0
      %3324 = vmatmul.mubr.bf16.gmra.mrb[0].mxu0 %v3280
      %v3325 = vpop.f32.mrb[0].mxu0
      %v3326 = vadd.f32 0.0, %v3325
      %v3327 = vpop.f32.mrb[0].mxu0
      %v3328 = vpop.f32.mrb[0].mxu0
      %v3329 = vadd.f32 0.0, %v3328
      %v3330 = vpop.f32.mrb[0].mxu0
      %3331 = vmatprep.mubr.bf16.mxu0 0
      %3332 = vmatmul.mubr.bf16.gmra.mrb[0].mxu0 %v3283
      %v3333 = vpop.f32.mrb[0].mxu0
      %v3334 = vadd.f32 0.0, %v3333
      %v3335 = vpop.f32.mrb[0].mxu0
      %v3336 = vpop.f32.mrb[0].mxu0
      %v3337 = vadd.f32 0.0, %v3336
      %v3338 = vpop.f32.mrb[0].mxu0
      %3339 = vmatprep.mubr.bf16.mxu0 0
      %3340 = vmatmul.mubr.bf16.gmra.mrb[0].mxu0 %v3286
      %v3341 = vpop.f32.mrb[0].mxu0
      %v3342 = vadd.f32 0.0, %v3341
      %v3343 = vpop.f32.mrb[0].mxu0
      %v3344 = vpop.f32.mrb[0].mxu0
      %v3345 = vadd.f32 0.0, %v3344
      %v3346 = vpop.f32.mrb[0].mxu0
      %3347 = vmatprep.mubr.bf16.mxu0 0
      %3348 = vmatmul.mubr.bf16.gmra.mrb[0].mxu0 %v3289
      %v3349 = vpop.f32.mrb[0].mxu0
      %v3350 = vadd.f32 0.0, %v3349
      %v3351 = vpop.f32.mrb[0].mxu0
      %v3352 = vpop.f32.mrb[0].mxu0
      %v3353 = vadd.f32 0.0, %v3352
      %v3354 = vpop.f32.mrb[0].mxu0
      %3355 = vdwg.mxu0
      %v3356 = vadd.f32 %v3226, %v3326
      %v3357 = vadd.f32 %v3227, %v3329
      %v3358 = vadd.f32 %v3228, %v3334
      %v3359 = vadd.f32 %v3229, %v3337
      %v3360 = vadd.f32 %v3230, %v3342
      %v3361 = vadd.f32 %v3231, %v3345
      %v3362 = vadd.f32 %v3232, %v3350
      %v3363 = vadd.f32 %v3233, %v3353
      %v3364 = vld [vmem:[%s3234] sm:$0xf]
      %v3365 = vld [vmem:[%s3234 + $0x4] sm:$0x1]
      %v3366 = vld [vmem:[%s3234 + $0x8] sm:$0xf]
      %v3367 = vld [vmem:[%s3234 + $0xc] sm:$0x1]
      %v3368 = vld [vmem:[%s3234 + $0x10] sm:$0xf]
      %v3369 = vld [vmem:[%s3234 + $0x14] sm:$0x1]
      %v3370 = vld [vmem:[%s3234 + $0x18] sm:$0xf]
      %v3371 = vld [vmem:[%s3234 + $0x1c] sm:$0x1]
      %v3372 = vld [vmem:[%s3234 + $0x20] sm:$0xf]
      %v3373 = vld [vmem:[%s3234 + $0x24] sm:$0x1]
      %v3374 = vld [vmem:[%s3234 + $0x28] sm:$0xf]
      %v3375 = vld [vmem:[%s3234 + $0x2c] sm:$0x1]
      %v3376 = vld [vmem:[%s3234 + $0x30] sm:$0xf]
      %v3377 = vld [vmem:[%s3234 + $0x34] sm:$0x1]
      %v3378 = vld [vmem:[%s3234 + $0x38] sm:$0xf]
      %v3379 = vld [vmem:[%s3234 + $0x3c] sm:$0x1]
      %v3381 = vshrl.u32 %v3364, 16
      %v3383 = vrot.slane %v3381, 4
      %v3384 = vshll.u32 %v3364, 16
      %v3386 = vrot.slane %v3384, 5
      %v3387 = vor.u32 %v3383, %v3386
      %v3388 = vrot.slane %v3387, 4
      %v3390 = vshll.u32 %v3365, 16
      %v3392 = vrot.slane %v3390, 5
      %v3393 = vsel %vm503, %v3388, %v3392
      %v3395 = vshrl.u32 %v3366, 16
      %v3397 = vrot.slane %v3395, 4
      %v3398 = vshll.u32 %v3366, 16
      %v3400 = vrot.slane %v3398, 5
      %v3401 = vor.u32 %v3397, %v3400
      %v3402 = vrot.slane %v3401, 4
      %v3404 = vshll.u32 %v3367, 16
      %v3406 = vrot.slane %v3404, 5
      %v3407 = vsel %vm503, %v3402, %v3406
      %v3409 = vshrl.u32 %v3368, 16
      %v3411 = vrot.slane %v3409, 4
      %v3412 = vshll.u32 %v3368, 16
      %v3414 = vrot.slane %v3412, 5
      %v3415 = vor.u32 %v3411, %v3414
      %v3416 = vrot.slane %v3415, 4
      %v3418 = vshll.u32 %v3369, 16
      %v3420 = vrot.slane %v3418, 5
      %v3421 = vsel %vm503, %v3416, %v3420
      %v3423 = vshrl.u32 %v3370, 16
      %v3425 = vrot.slane %v3423, 4
      %v3426 = vshll.u32 %v3370, 16
      %v3428 = vrot.slane %v3426, 5
      %v3429 = vor.u32 %v3425, %v3428
      %v3430 = vrot.slane %v3429, 4
      %v3432 = vshll.u32 %v3371, 16
      %v3434 = vrot.slane %v3432, 5
      %v3435 = vsel %vm503, %v3430, %v3434
      %v3437 = vshrl.u32 %v3372, 16
      %v3439 = vrot.slane %v3437, 4
      %v3440 = vshll.u32 %v3372, 16
      %v3442 = vrot.slane %v3440, 5
      %v3443 = vor.u32 %v3439, %v3442
      %v3444 = vrot.slane %v3443, 4
      %v3446 = vshll.u32 %v3373, 16
      %v3448 = vrot.slane %v3446, 5
      %v3449 = vsel %vm503, %v3444, %v3448
      %v3451 = vshrl.u32 %v3374, 16
      %v3453 = vrot.slane %v3451, 4
      %v3454 = vshll.u32 %v3374, 16
      %v3456 = vrot.slane %v3454, 5
      %v3457 = vor.u32 %v3453, %v3456
      %v3458 = vrot.slane %v3457, 4
      %v3460 = vshll.u32 %v3375, 16
      %v3462 = vrot.slane %v3460, 5
      %v3463 = vsel %vm503, %v3458, %v3462
      %v3465 = vshrl.u32 %v3376, 16
      %v3467 = vrot.slane %v3465, 4
      %v3468 = vshll.u32 %v3376, 16
      %v3470 = vrot.slane %v3468, 5
      %v3471 = vor.u32 %v3467, %v3470
      %v3472 = vrot.slane %v3471, 4
      %v3474 = vshll.u32 %v3377, 16
      %v3476 = vrot.slane %v3474, 5
      %v3477 = vsel %vm503, %v3472, %v3476
      %v3479 = vshrl.u32 %v3378, 16
      %v3481 = vrot.slane %v3479, 4
      %v3482 = vshll.u32 %v3378, 16
      %v3484 = vrot.slane %v3482, 5
      %v3485 = vor.u32 %v3481, %v3484
      %v3486 = vrot.slane %v3485, 4
      %v3488 = vshll.u32 %v3379, 16
      %v3490 = vrot.slane %v3488, 5
      %v3491 = vsel %vm503, %v3486, %v3490
      %v3492 = vld [vmem:[%s3 + $0x70] sm:$0xf]
      %v3493 = vld [vmem:[%s3 + $0x74] sm:$0xf]
      %v3494 = vld [vmem:[%s3 + $0x78] sm:$0xf]
      %v3495 = vld [vmem:[%s3 + $0x7c] sm:$0xf]
      %v3496 = vunpack.c.l.b16 %v3393
      %v3497 = vunpack.c.l.b16 %v3407
      %v3498 = vunpack.c.l.b16 %v3421
      %v3499 = vunpack.c.l.b16 %v3435
      %v3500 = vunpack.c.l.b16 %v3449
      %v3501 = vunpack.c.l.b16 %v3463
      %v3502 = vunpack.c.l.b16 %v3477
      %v3503 = vunpack.c.l.b16 %v3491
      %v3504 = vpack.c.b16 %v3497, %v3496
      %v3505 = vpack.c.b16 %v3499, %v3498
      %v3506 = vpack.c.b16 %v3501, %v3500
      %v3507 = vpack.c.b16 %v3503, %v3502
      %v3512 = vunpack.c.l.b16 %v3492
      %v3513 = vunpack.c.l.b16 %v3493
      %v3514 = vunpack.c.l.b16 %v3494
      %v3515 = vunpack.c.l.b16 %v3495
      %v3516 = vpack.c.b16 %v3513, %v3512
      %v3517 = vpack.c.b16 %v3515, %v3514
      %v3521 = vsel %vm2339, %v3504, 0
      %v3524 = vsel %vm2339, %v3505, 0
      %v3527 = vsel %vm2339, %v3506, 0
      %v3530 = vsel %vm2339, %v3507, 0
      %3532 = vmatprep.subr.bf16.mxu0 0
      %3533 = vmatpush1.bf16.msra.mxu0 %v3516
      %3534 = vmatprep.subr.bf16.mxu0 0
      %3535 = vmatpush1.bf16.msra.mxu0 %v3517
      %3536 = vmatprep.subr.bf16.mxu0 0
      %3537 = vmatpush1.bf16.msra.mxu0 0
      %3538 = vmatprep.subr.bf16.mxu0 0
      %3539 = vmatpush1.bf16.msra.mxu0 0
      %3540 = vmatprep.subr.bf16.mxu0 0
      %3541 = vmatpush1.bf16.msra.mxu0 0
      %3542 = vmatprep.subr.bf16.mxu0 0
      %3543 = vmatpush1.bf16.msra.mxu0 0
      %3544 = vmatprep.subr.bf16.mxu0 0
      %3545 = vmatpush1.bf16.msra.mxu0 0
      %3546 = vmatprep.subr.bf16.mxu0 0
      %3547 = vmatpush1.bf16.msra.mxu0 0
      %3548 = vmatprep.subr.bf16.mxu0 0
      %3549 = vmatpush1.bf16.msra.mxu0 0
      %3550 = vmatprep.subr.bf16.mxu0 0
      %3551 = vmatpush1.bf16.msra.mxu0 0
      %3552 = vmatprep.subr.bf16.mxu0 0
      %3553 = vmatpush1.bf16.msra.mxu0 0
      %3554 = vmatprep.subr.bf16.mxu0 0
      %3555 = vmatpush1.bf16.msra.mxu0 0
      %3556 = vmatprep.subr.bf16.mxu0 0
      %3557 = vmatpush1.bf16.msra.mxu0 0
      %3558 = vmatprep.subr.bf16.mxu0 0
      %3559 = vmatpush1.bf16.msra.mxu0 0
      %3560 = vmatprep.subr.bf16.mxu0 0
      %3561 = vmatpush1.bf16.msra.mxu0 0
      %3562 = vmatprep.subr.bf16.mxu0 0
      %3563 = vmatpush1.bf16.msra.mxu0 0
      %3564 = vmatprep.mubr.bf16.mxu0 0
      %3565 = vmatmul.mubr.bf16.gmra.mrb[0].mxu0 %v3521
      %v3566 = vpop.f32.mrb[0].mxu0
      %v3567 = vadd.f32 0.0, %v3566
      %v3568 = vpop.f32.mrb[0].mxu0
      %v3569 = vpop.f32.mrb[0].mxu0
      %v3570 = vadd.f32 0.0, %v3569
      %v3571 = vpop.f32.mrb[0].mxu0
      %3572 = vmatprep.mubr.bf16.mxu0 0
      %3573 = vmatmul.mubr.bf16.gmra.mrb[0].mxu0 %v3524
      %v3574 = vpop.f32.mrb[0].mxu0
      %v3575 = vadd.f32 0.0, %v3574
      %v3576 = vpop.f32.mrb[0].mxu0
      %v3577 = vpop.f32.mrb[0].mxu0
      %v3578 = vadd.f32 0.0, %v3577
      %v3579 = vpop.f32.mrb[0].mxu0
      %3580 = vmatprep.mubr.bf16.mxu0 0
      %3581 = vmatmul.mubr.bf16.gmra.mrb[0].mxu0 %v3527
      %v3582 = vpop.f32.mrb[0].mxu0
      %v3583 = vadd.f32 0.0, %v3582
      %v3584 = vpop.f32.mrb[0].mxu0
      %v3585 = vpop.f32.mrb[0].mxu0
      %v3586 = vadd.f32 0.0, %v3585
      %v3587 = vpop.f32.mrb[0].mxu0
      %3588 = vmatprep.mubr.bf16.mxu0 0
      %3589 = vmatmul.mubr.bf16.gmra.mrb[0].mxu0 %v3530
      %v3590 = vpop.f32.mrb[0].mxu0
      %v3591 = vadd.f32 0.0, %v3590
      %v3592 = vpop.f32.mrb[0].mxu0
      %v3593 = vpop.f32.mrb[0].mxu0
      %v3594 = vadd.f32 0.0, %v3593
      %v3595 = vpop.f32.mrb[0].mxu0
      %3596 = vdwg.mxu0
      %v3597 = vadd.f32 %v3356, %v3567
      %v3598 = vadd.f32 %v3357, %v3570
      %v3599 = vadd.f32 %v3358, %v3575
      %v3600 = vadd.f32 %v3359, %v3578
      %v3601 = vadd.f32 %v3360, %v3583
      %v3602 = vadd.f32 %v3361, %v3586
      %v3603 = vadd.f32 %v3362, %v3591
      %v3604 = vadd.f32 %v3363, %v3594
      %v3605 = vld [vmem:[%s3234] sm:$0xe]
      %v3606 = vld [vmem:[%s3234 + $0x8] sm:$0xe]
      %v3607 = vld [vmem:[%s3234 + $0x10] sm:$0xe]
      %v3608 = vld [vmem:[%s3234 + $0x18] sm:$0xe]
      %v3609 = vld [vmem:[%s3234 + $0x20] sm:$0xe]
      %v3610 = vld [vmem:[%s3234 + $0x28] sm:$0xe]
      %v3611 = vld [vmem:[%s3234 + $0x30] sm:$0xe]
      %v3612 = vld [vmem:[%s3234 + $0x38] sm:$0xe]
      %v3629 = vrot.slane %v3605, 5
      %v3630 = vrot.slane %v3629, 4
      %v3631 = vrot.slane %v3365, 5
      %v3632 = vsel %vm841, %v3630, %v3631
      %v3633 = vrot.slane %v3606, 5
      %v3634 = vrot.slane %v3633, 4
      %v3635 = vrot.slane %v3367, 5
      %v3636 = vsel %vm841, %v3634, %v3635
      %v3637 = vrot.slane %v3607, 5
      %v3638 = vrot.slane %v3637, 4
      %v3639 = vrot.slane %v3369, 5
      %v3640 = vsel %vm841, %v3638, %v3639
      %v3641 = vrot.slane %v3608, 5
      %v3642 = vrot.slane %v3641, 4
      %v3643 = vrot.slane %v3371, 5
      %v3644 = vsel %vm841, %v3642, %v3643
      %v3645 = vrot.slane %v3609, 5
      %v3646 = vrot.slane %v3645, 4
      %v3647 = vrot.slane %v3373, 5
      %v3648 = vsel %vm841, %v3646, %v3647
      %v3649 = vrot.slane %v3610, 5
      %v3650 = vrot.slane %v3649, 4
      %v3651 = vrot.slane %v3375, 5
      %v3652 = vsel %vm841, %v3650, %v3651
      %v3653 = vrot.slane %v3611, 5
      %v3654 = vrot.slane %v3653, 4
      %v3655 = vrot.slane %v3377, 5
      %v3656 = vsel %vm841, %v3654, %v3655
      %v3657 = vrot.slane %v3612, 5
      %v3658 = vrot.slane %v3657, 4
      %v3659 = vrot.slane %v3379, 5
      %v3660 = vsel %vm841, %v3658, %v3659
      %v3661 = vld [vmem:[%s3 + $0x80] sm:$0xf]
      %v3662 = vld [vmem:[%s3 + $0x84] sm:$0xf]
      %v3663 = vld [vmem:[%s3 + $0x88] sm:$0xf]
      %v3664 = vld [vmem:[%s3 + $0x8c] sm:$0xf]
      %v3665 = vunpack.c.l.b16 %v3632
      %v3666 = vunpack.c.l.b16 %v3636
      %v3667 = vunpack.c.l.b16 %v3640
      %v3668 = vunpack.c.l.b16 %v3644
      %v3669 = vunpack.c.l.b16 %v3648
      %v3670 = vunpack.c.l.b16 %v3652
      %v3671 = vunpack.c.l.b16 %v3656
      %v3672 = vunpack.c.l.b16 %v3660
      %v3673 = vpack.c.b16 %v3666, %v3665
      %v3674 = vpack.c.b16 %v3668, %v3667
      %v3675 = vpack.c.b16 %v3670, %v3669
      %v3676 = vpack.c.b16 %v3672, %v3671
      %v3681 = vunpack.c.l.b16 %v3661
      %v3682 = vunpack.c.l.b16 %v3662
      %v3683 = vunpack.c.l.b16 %v3663
      %v3684 = vunpack.c.l.b16 %v3664
      %v3685 = vpack.c.b16 %v3682, %v3681
      %v3686 = vpack.c.b16 %v3684, %v3683
      %v3690 = vsel %vm2339, %v3673, 0
      %v3693 = vsel %vm2339, %v3674, 0
      %v3696 = vsel %vm2339, %v3675, 0
      %v3699 = vsel %vm2339, %v3676, 0
      %3701 = vmatprep.subr.bf16.mxu0 0
      %3702 = vmatpush1.bf16.msra.mxu0 %v3685
      %3703 = vmatprep.subr.bf16.mxu0 0
      %3704 = vmatpush1.bf16.msra.mxu0 %v3686
      %3705 = vmatprep.subr.bf16.mxu0 0
      %3706 = vmatpush1.bf16.msra.mxu0 0
      %3707 = vmatprep.subr.bf16.mxu0 0
      %3708 = vmatpush1.bf16.msra.mxu0 0
      %3709 = vmatprep.subr.bf16.mxu0 0
      %3710 = vmatpush1.bf16.msra.mxu0 0
      %3711 = vmatprep.subr.bf16.mxu0 0
      %3712 = vmatpush1.bf16.msra.mxu0 0
      %3713 = vmatprep.subr.bf16.mxu0 0
      %3714 = vmatpush1.bf16.msra.mxu0 0
      %3715 = vmatprep.subr.bf16.mxu0 0
      %3716 = vmatpush1.bf16.msra.mxu0 0
      %3717 = vmatprep.subr.bf16.mxu0 0
      %3718 = vmatpush1.bf16.msra.mxu0 0
      %3719 = vmatprep.subr.bf16.mxu0 0
      %3720 = vmatpush1.bf16.msra.mxu0 0
      %3721 = vmatprep.subr.bf16.mxu0 0
      %3722 = vmatpush1.bf16.msra.mxu0 0
      %3723 = vmatprep.subr.bf16.mxu0 0
      %3724 = vmatpush1.bf16.msra.mxu0 0
      %3725 = vmatprep.subr.bf16.mxu0 0
      %3726 = vmatpush1.bf16.msra.mxu0 0
      %3727 = vmatprep.subr.bf16.mxu0 0
      %3728 = vmatpush1.bf16.msra.mxu0 0
      %3729 = vmatprep.subr.bf16.mxu0 0
      %3730 = vmatpush1.bf16.msra.mxu0 0
      %3731 = vmatprep.subr.bf16.mxu0 0
      %3732 = vmatpush1.bf16.msra.mxu0 0
      %3733 = vmatprep.mubr.bf16.mxu0 0
      %3734 = vmatmul.mubr.bf16.gmra.mrb[0].mxu0 %v3690
      %v3735 = vpop.f32.mrb[0].mxu0
      %v3736 = vadd.f32 0.0, %v3735
      %v3737 = vpop.f32.mrb[0].mxu0
      %v3738 = vpop.f32.mrb[0].mxu0
      %v3739 = vadd.f32 0.0, %v3738
      %v3740 = vpop.f32.mrb[0].mxu0
      %3741 = vmatprep.mubr.bf16.mxu0 0
      %3742 = vmatmul.mubr.bf16.gmra.mrb[0].mxu0 %v3693
      %v3743 = vpop.f32.mrb[0].mxu0
      %v3744 = vadd.f32 0.0, %v3743
      %v3745 = vpop.f32.mrb[0].mxu0
      %v3746 = vpop.f32.mrb[0].mxu0
      %v3747 = vadd.f32 0.0, %v3746
      %v3748 = vpop.f32.mrb[0].mxu0
      %3749 = vmatprep.mubr.bf16.mxu0 0
      %3750 = vmatmul.mubr.bf16.gmra.mrb[0].mxu0 %v3696
      %v3751 = vpop.f32.mrb[0].mxu0
      %v3752 = vadd.f32 0.0, %v3751
      %v3753 = vpop.f32.mrb[0].mxu0
      %v3754 = vpop.f32.mrb[0].mxu0
      %v3755 = vadd.f32 0.0, %v3754
      %v3756 = vpop.f32.mrb[0].mxu0
      %3757 = vmatprep.mubr.bf16.mxu0 0
      %3758 = vmatmul.mubr.bf16.gmra.mrb[0].mxu0 %v3699
      %v3759 = vpop.f32.mrb[0].mxu0
      %v3760 = vadd.f32 0.0, %v3759
      %v3761 = vpop.f32.mrb[0].mxu0
      %v3762 = vpop.f32.mrb[0].mxu0
      %v3763 = vadd.f32 0.0, %v3762
      %v3764 = vpop.f32.mrb[0].mxu0
      %3765 = vdwg.mxu0
      %v3766 = vadd.f32 %v3597, %v3736
      %v3767 = vadd.f32 %v3598, %v3739
      %v3768 = vadd.f32 %v3599, %v3744
      %v3769 = vadd.f32 %v3600, %v3747
      %v3770 = vadd.f32 %v3601, %v3752
      %v3771 = vadd.f32 %v3602, %v3755
      %v3772 = vadd.f32 %v3603, %v3760
      %v3773 = vadd.f32 %v3604, %v3763
      %v3774 = vld [vmem:[%s4] sm:$0x1]
      %v3776 = vlaneseq
      %v3777 = vshrl.u32 %v3776, 7
      %v3778 = vsub.s32 0, %v3777
      %v3779 = vrot.slane %v3774, %v3778
      %v3781 = vadd.f32 %v3766, %v3779
      %v3782 = vadd.f32 %v3767, %v3779
      %v3783 = vadd.f32 %v3768, %v3779
      %v3784 = vadd.f32 %v3769, %v3779
      %v3785 = vadd.f32 %v3770, %v3779
      %v3786 = vadd.f32 %v3771, %v3779
      %v3787 = vadd.f32 %v3772, %v3779
      %v3788 = vadd.f32 %v3773, %v3779
      %v3789 = vmax.f32 %v3781, 0.0
      %v3790 = vmax.f32 %v3782, 0.0
      %v3791 = vmax.f32 %v3783, 0.0
      %v3792 = vmax.f32 %v3784, 0.0
      %v3793 = vmax.f32 %v3785, 0.0
      %v3794 = vmax.f32 %v3786, 0.0
      %v3795 = vmax.f32 %v3787, 0.0
      %v3796 = vmax.f32 %v3788, 0.0
      %v3797 = vpack.c.bf16 %v3790, %v3789
      %v3798 = vpack.c.bf16 %v3792, %v3791
      %v3799 = vpack.c.bf16 %v3794, %v3793
      %v3800 = vpack.c.bf16 %v3796, %v3795
      %v3805 = vunpack.c.l.b16 %v3797
      %v3806 = vunpack.c.h.b16 %v3797
      %v3807 = vunpack.c.l.b16 %v3798
      %v3808 = vunpack.c.h.b16 %v3798
      %v3809 = vunpack.c.l.b16 %v3799
      %v3810 = vunpack.c.h.b16 %v3799
      %v3811 = vunpack.c.l.b16 %v3800
      %v3812 = vunpack.c.h.b16 %v3800
      %v3813 = vpack.c.b16 %v3805, %v3805
      %v3814 = vpack.c.b16 %v3806, %v3806
      %v3815 = vpack.c.b16 %v3807, %v3807
      %v3816 = vpack.c.b16 %v3808, %v3808
      %v3817 = vpack.c.b16 %v3809, %v3809
      %v3818 = vpack.c.b16 %v3810, %v3810
      %v3819 = vpack.c.b16 %v3811, %v3811
      %v3820 = vpack.c.b16 %v3812, %v3812
      %3829 = vst.msk [vmem:[%s224] sm:$0xf] %vm287, %v3813
      %3830 = vst.msk [vmem:[%s224 + $0x4] sm:$0xf] %vm287, %v3814
      %3831 = vst.msk [vmem:[%s224 + $0x8] sm:$0xf] %vm287, %v3815
      %3832 = vst.msk [vmem:[%s224 + $0xc] sm:$0xf] %vm287, %v3816
      %3833 = vst.msk [vmem:[%s224 + $0x10] sm:$0xf] %vm287, %v3817
      %3834 = vst.msk [vmem:[%s224 + $0x14] sm:$0xf] %vm287, %v3818
      %3835 = vst.msk [vmem:[%s224 + $0x18] sm:$0xf] %vm287, %v3819
      %3836 = vst.msk [vmem:[%s224 + $0x1c] sm:$0xf] %vm287, %v3820
      %p3837 = scmp.lt.s32.totalorder %s16, 1
      %s3838 = scalar_select %p3837, %s16, 1
      %s3839 = smul.addr %s3838, 8
      %s3840 = smul.addr %s3839, 4
      %s3841 = scalar_lea.vmem %s5, %s3840
      // Predicated region
      $region41: #{roi_xconv1fc_head_forward.2} parent=39 // pred_check
        %p3842 = pneg %p144
      $region42: #{roi_xconv1fc_head_forward.2} parent=39 // pred_check_branch
        %3844 = sbr.rel (%p3842) target = $region44
      $region43: #{roi_xconv1fc_head_forward.2} parent=39 // pred_region
        _
      $region44: #{roi_xconv1fc_head_forward.2} parent=39 // pred_fallthru
        _
    $region40: #{roi_xconv1fc_head_forward.2} parent=5 // pred_fallthru
      _
    %p3845 = scmp.le.s32.totalorder 2, %s11
    // Predicated region
    $region45: #{roi_xconv1fc_head_forward.2} parent=5 // pred_check
      %p3846 = pneg %p3845
    $region46: #{roi_xconv1fc_head_forward.2} parent=5 // pred_check_branch
      %3848 = sbr.rel (%p3846) target = $region48
    $region47: #{roi_xconv1fc_head_forward.2} parent=5 // pred_region
      %s3849 = ssub.s32 %s11, 2
      // Predicated region
      $region49: #{roi_xconv1fc_head_forward.2} parent=47 // pred_check
        %p3850 = pneg %p150
      $region50: #{roi_xconv1fc_head_forward.2} parent=47 // pred_check_branch
        %3852 = sbr.rel (%p3850) target = $region52
      $region51: #{roi_xconv1fc_head_forward.2} parent=47 // pred_region
        %p3853 = scmp.lt.s32.totalorder %s17, 1
        %s3854 = scalar_select %p3853, %s17, 1
        %s3855 = smul.addr %s3854, 8
        %s3856 = smul.addr %s3855, 4
        %s3857 = scalar_lea.vmem %s5, %s3856
      $region52: #{roi_xconv1fc_head_forward.2} parent=47 // pred_fallthru
        _
    $region48: #{roi_xconv1fc_head_forward.2} parent=5 // pred_fallthru
      _
  $region6: #{roi_xconv1fc_head_forward.2} parent=0 // loop_footer
    %s15 = sadd.s32 1, %s11
  $region7: #{roi_xconv1fc_head_forward.2} parent=0 // loop_footer_branch
    %10 = sbr.rel target = $region3
  $region8: #{roi_xconv1fc_head_forward.2} parent=0 // loop_exit
    _

</llo_original>
